<compile_context>
chip_gen: v7x
topology: tpu7x:2x2x1
jax: 0.10.0
libtpu: 0.0.40
codegen_flags: <defaults>
</compile_context>

<pallas_src>
import functools
import math

import numpy as np
import jax
import jax.numpy as jnp
from jax.experimental import pallas as pl
from jax.experimental.pallas import tpu as pltpu

BN_EPS = 1e-5
LANE = 128


# ------------------------------ small helpers ------------------------------ #
def _rup(n, m):
    return ((n + m - 1) // m) * m


def _pad2(x, rows, cols):
    r, c = x.shape
    return jnp.pad(x, ((0, rows - r), (0, cols - c)))


def _row(v, cols):
    return jnp.pad(v.reshape(1, -1), ((0, 0), (0, cols - v.shape[0])))


@functools.lru_cache(maxsize=None)
def _vmem_limit():
    # v5e/v6e: 128 MiB physical -> 96 MiB scoped.  v7x: 64 MiB -> 44 MiB.
    try:
        kind = jax.devices()[0].device_kind.lower()
    except Exception:
        kind = ""
    return (44 if "v7" in kind else 96) * 1024 * 1024


def _cparams(sem):
    return pltpu.CompilerParams(dimension_semantics=sem,
                                vmem_limit_bytes=_vmem_limit())


# ------------------------------ Pallas kernels ------------------------------ #
def mm_bias_kernel(x_ref, w_ref, b_ref, o_ref):
    """o_tile = x_tile @ W + b   (rows tiled, 'parallel')."""
    o_ref[...] = (jnp.dot(x_ref[...], w_ref[...],
                          preferred_element_type=jnp.float32)
                  + b_ref[...]).astype(o_ref.dtype)


def agg_mm_stats_kernel(a_ref, x_ref, w_ref, b_ref,
                        u_ref, psum_ref, pssq_ref, acc_ref,
                        *, n_valid, row_tile):
    """K-tiled: acc += A_tile @ x_tile (bf16 MXU, f32 acc).  On the last K step
    apply W1 + b1, write u and the per-row-tile masked sum / sum-of-squares."""
    i = pl.program_id(0)
    k = pl.program_id(1)

    @pl.when(k == 0)
    def _():
        acc_ref[...] = jnp.zeros_like(acc_ref)

    acc_ref[...] += jnp.dot(a_ref[...], x_ref[...],
                            preferred_element_type=jnp.float32)

    @pl.when(k == pl.num_programs(1) - 1)
    def _():
        u = jnp.dot(acc_ref[...].astype(jnp.bfloat16), w_ref[...],
                    preferred_element_type=jnp.float32) + b_ref[...]
        u_ref[...] = u
        row = jax.lax.broadcasted_iota(jnp.int32, u.shape, 0) + i * row_tile
        um = jnp.where(row < n_valid, u, 0.0)            # mask padded rows
        psum_ref[...] = jnp.sum(um, axis=0, keepdims=True)[None]
        pssq_ref[...] = jnp.sum(um * um, axis=0, keepdims=True)[None]


def bn_relu_mm_stats_kernel(u_ref, sc_ref, sh_ref, w_ref, b_ref,
                            v_ref, psum_ref, pssq_ref, *, n_valid, row_tile):
    """v_tile = relu(u_tile*scale + shift) @ W2 + b2 ; per-tile masked stats."""
    i = pl.program_id(0)
    xn = jnp.maximum(u_ref[...] * sc_ref[...] + sh_ref[...], 0.0)
    v = jnp.dot(xn.astype(jnp.bfloat16), w_ref[...],
                preferred_element_type=jnp.float32) + b_ref[...]
    v_ref[...] = v
    row = jax.lax.broadcasted_iota(jnp.int32, v.shape, 0) + i * row_tile
    vm = jnp.where(row < n_valid, v, 0.0)
    psum_ref[...] = jnp.sum(vm, axis=0, keepdims=True)[None]
    pssq_ref[...] = jnp.sum(vm * vm, axis=0, keepdims=True)[None]


def bn_act_kernel(v_ref, sc_ref, sh_ref, o_ref, *, apply_relu):
    """o_tile = [relu](v_tile*scale + shift) — the per-layer outer BatchNorm."""
    y = v_ref[...] * sc_ref[...] + sh_ref[...]
    if apply_relu:
        y = jnp.maximum(y, 0.0)
    o_ref[...] = y.astype(o_ref.dtype)


# ------------------------------ call builders ------------------------------- #
def mm_bias(x, w, b, *, row_tile, out_dtype):
    n, k = x.shape
    cout = w.shape[1]
    rt = n // row_tile
    flops = 2 * n * k * cout
    bytes_acc = (x.dtype.itemsize * n * k + w.dtype.itemsize * k * cout
                 + 4 * cout + jnp.dtype(out_dtype).itemsize * n * cout)
    return pl.pallas_call(
        mm_bias_kernel,
        out_shape=jax.ShapeDtypeStruct((n, cout), out_dtype),
        grid=(rt,),
        in_specs=[pl.BlockSpec((row_tile, k), lambda i: (i, 0)),
                  pl.BlockSpec((k, cout), lambda i: (0, 0)),
                  pl.BlockSpec((1, cout), lambda i: (0, 0))],
        out_specs=pl.BlockSpec((row_tile, cout), lambda i: (i, 0)),
        compiler_params=_cparams(("parallel",)),
        cost_estimate=pl.CostEstimate(flops=flops, transcendentals=0,
                                      bytes_accessed=bytes_acc),
    )(x, w, b)


def agg_mm_stats(a, x, w, b, *, row_tile, k_tile, n_valid):
    n = a.shape[0]
    hp = x.shape[1]
    cout = w.shape[1]
    rt, kt = n // row_tile, n // k_tile
    kern = functools.partial(agg_mm_stats_kernel, n_valid=n_valid,
                             row_tile=row_tile)
    flops = 2 * n * n * hp + 2 * n * hp * cout
    bytes_acc = (2 * n * n + rt * 2 * n * hp + 2 * hp * cout + 4 * cout
                 + 4 * n * cout + 8 * rt * cout)
    return pl.pallas_call(
        kern,
        out_shape=(jax.ShapeDtypeStruct((n, cout), jnp.float32),
                   jax.ShapeDtypeStruct((rt, 1, cout), jnp.float32),
                   jax.ShapeDtypeStruct((rt, 1, cout), jnp.float32)),
        grid=(rt, kt),
        in_specs=[pl.BlockSpec((row_tile, k_tile), lambda i, k: (i, k)),
                  pl.BlockSpec((k_tile, hp), lambda i, k: (k, 0)),
                  pl.BlockSpec((hp, cout), lambda i, k: (0, 0)),
                  pl.BlockSpec((1, cout), lambda i, k: (0, 0))],
        out_specs=(pl.BlockSpec((row_tile, cout), lambda i, k: (i, 0)),
                   pl.BlockSpec((1, 1, cout), lambda i, k: (i, 0, 0)),
                   pl.BlockSpec((1, 1, cout), lambda i, k: (i, 0, 0))),
        scratch_shapes=[pltpu.VMEM((row_tile, hp), jnp.float32)],
        compiler_params=_cparams(("parallel", "arbitrary")),
        cost_estimate=pl.CostEstimate(flops=flops, transcendentals=0,
                                      bytes_accessed=bytes_acc),
    )(a, x, w, b)


def bn_relu_mm_stats(u, sc, sh, w, b, *, row_tile, n_valid):
    n, cin = u.shape
    cout = w.shape[1]
    rt = n // row_tile
    kern = functools.partial(bn_relu_mm_stats_kernel, n_valid=n_valid,
                             row_tile=row_tile)
    flops = 2 * n * cin * cout + 4 * n * cin + 4 * n * cout
    bytes_acc = (4 * n * cin + 2 * cin * cout + 4 * n * cout
                 + 8 * rt * cout + 12 * cin)
    return pl.pallas_call(
        kern,
        out_shape=(jax.ShapeDtypeStruct((n, cout), jnp.float32),
                   jax.ShapeDtypeStruct((rt, 1, cout), jnp.float32),
                   jax.ShapeDtypeStruct((rt, 1, cout), jnp.float32)),
        grid=(rt,),
        in_specs=[pl.BlockSpec((row_tile, cin), lambda i: (i, 0)),
                  pl.BlockSpec((1, cin), lambda i: (0, 0)),
                  pl.BlockSpec((1, cin), lambda i: (0, 0)),
                  pl.BlockSpec((cin, cout), lambda i: (0, 0)),
                  pl.BlockSpec((1, cout), lambda i: (0, 0))],
        out_specs=(pl.BlockSpec((row_tile, cout), lambda i: (i, 0)),
                   pl.BlockSpec((1, 1, cout), lambda i: (i, 0, 0)),
                   pl.BlockSpec((1, 1, cout), lambda i: (i, 0, 0))),
        compiler_params=_cparams(("parallel",)),
        cost_estimate=pl.CostEstimate(flops=flops, transcendentals=0,
                                      bytes_accessed=bytes_acc),
    )(u, sc, sh, w, b)


def bn_act(v, sc, sh, *, row_tile, apply_relu, out_dtype):
    n, c = v.shape
    rt = n // row_tile
    kern = functools.partial(bn_act_kernel, apply_relu=apply_relu)
    bytes_acc = 4 * n * c + 8 * c + jnp.dtype(out_dtype).itemsize * n * c
    return pl.pallas_call(
        kern,
        out_shape=jax.ShapeDtypeStruct((n, c), out_dtype),
        grid=(rt,),
        in_specs=[pl.BlockSpec((row_tile, c), lambda i: (i, 0)),
                  pl.BlockSpec((1, c), lambda i: (0, 0)),
                  pl.BlockSpec((1, c), lambda i: (0, 0))],
        out_specs=pl.BlockSpec((row_tile, c), lambda i: (i, 0)),
        compiler_params=_cparams(("parallel",)),
        cost_estimate=pl.CostEstimate(flops=2 * n * c, transcendentals=0,
                                      bytes_accessed=bytes_acc),
    )(v, sc, sh)


# --------------------- tiny plain-JAX stats finalization -------------------- #
def _bn_affine(psum, pssq, gamma, beta, n_valid):
    """Turn per-tile partial sums into per-column BN scale/shift (O(C) work)."""
    s = jnp.sum(psum, axis=0)                                # (1, C)
    q = jnp.sum(pssq, axis=0)                                # (1, C)
    mean = s / n_valid
    var = jnp.maximum(q / n_valid - mean * mean, 0.0)
    scale = gamma * jax.lax.rsqrt(var + BN_EPS)
    shift = beta - mean * scale
    return scale, shift


# ------------------------------ model forward ------------------------------- #
def eigen_mlp_bn_forward(a_bf16, pool_mat, x_bf16, padded_params, *,
                         n_valid, hidden, row_tile, k_tile, bn_tile):
    """a_bf16: [Np,Np] bf16 dense weighted adjacency (A[dst,src]+=w, zero-padded)
       pool_mat: [G,Np] f32 graph-membership (zero columns for padded nodes)
       x_bf16: [Np, in_pad] bf16 zero-padded node features."""
    w0, b0, layers = padded_params

    # initial Linear(2*period -> H); output stored bf16 (next consumer is A@x)
    x = mm_bias(x_bf16, w0, b0, row_tile=row_tile, out_dtype=jnp.bfloat16)

    nlayer = len(layers)
    for li, (w1, b1, g1, be1, w2, b2, g2, be2) in enumerate(layers):
        # EigenConv aggregation (A@x) + Linear(H->2H), with BN(2H) partial stats
        u, ps1, pq1 = agg_mm_stats(a_bf16, x, w1, b1, row_tile=row_tile,
                                   k_tile=k_tile, n_valid=n_valid)
        sc1, sh1 = _bn_affine(ps1, pq1, g1, be1, n_valid)
        # BN(2H) -> ReLU -> Linear(2H->H), with BN(H) partial stats
        v, ps2, pq2 = bn_relu_mm_stats(u, sc1, sh1, w2, b2,
                                       row_tile=row_tile, n_valid=n_valid)
        sc2, sh2 = _bn_affine(ps2, pq2, g2, be2, n_valid)
        # outer BatchNorm1d(H); ReLU on all but the last layer (dropout p=0 omitted)
        last = li == nlayer - 1
        x = bn_act(v, sc2, sh2, row_tile=bn_tile, apply_relu=not last,
                   out_dtype=jnp.float32 if last else jnp.bfloat16)

    # global_add_pool via one-hot matmul (f32, tiny)
    zero_b = jnp.zeros((1, x.shape[1]), jnp.float32)
    xpool = mm_bias(pool_mat, x, zero_b, row_tile=pool_mat.shape[0],
                    out_dtype=jnp.float32)
    return x[:n_valid, :hidden], xpool[:, :hidden]


# ------------------------------ plain-JAX glue ------------------------------ #
def dense_weighted_adjacency(edge_index, edge_weight, num_nodes):
    """EigenConv(sign=False): h_i = sum_{(src->dst)=i} w * x_src == A @ x."""
    src, dst = edge_index[0], edge_index[1]
    a = jnp.zeros((num_nodes, num_nodes), jnp.float32)
    return a.at[dst, src].add(edge_weight)


def pooling_matrix(batch, num_graphs):
    return (batch[None, :] == jnp.arange(num_graphs)[:, None]).astype(jnp.float32)


def xavier_uniform(key, fan_in, fan_out):
    limit = math.sqrt(6.0 / (fan_in + fan_out))
    return jax.random.uniform(key, (fan_in, fan_out), jnp.float32,
                              minval=-limit, maxval=limit)


def init_params(key, in_dim, hidden, nlayer):
    """Matches EigenMLP_BN.reset_parameter: xavier_uniform Linears, zero biases;
    BatchNorm1d defaults gamma=1, beta=0 (training mode)."""
    keys = jax.random.split(key, 1 + 2 * nlayer)
    w0 = xavier_uniform(keys[0], in_dim, hidden)
    b0 = jnp.zeros((hidden,), jnp.float32)
    layers = []
    for i in range(nlayer):
        w1 = xavier_uniform(keys[1 + 2 * i], hidden, 2 * hidden)
        b1 = jnp.zeros((2 * hidden,), jnp.float32)
        g1 = jnp.ones((2 * hidden,), jnp.float32)
        be1 = jnp.zeros((2 * hidden,), jnp.float32)
        w2 = xavier_uniform(keys[2 + 2 * i], 2 * hidden, hidden)
        b2 = jnp.zeros((hidden,), jnp.float32)
        g2 = jnp.ones((hidden,), jnp.float32)
        be2 = jnp.zeros((hidden,), jnp.float32)
        layers.append((w1, b1, g1, be1, w2, b2, g2, be2))
    return w0, b0, layers


def pad_params(params, in_dim, hidden):
    """Zero-pad every channel dim up to a multiple of 128 (lane-dense) and
    pre-cast the weight matrices to bf16 (MXU operands, f32 accumulation)."""
    w0, b0, layers = params
    ip, hp, c2p = _rup(in_dim, LANE), _rup(hidden, LANE), _rup(2 * hidden, LANE)
    bf = jnp.bfloat16
    layers_p = []
    for (w1, b1, g1, be1, w2, b2, g2, be2) in layers:
        layers_p.append((_pad2(w1, hp, c2p).astype(bf), _row(b1, c2p),
                         _row(g1, c2p), _row(be1, c2p),
                         _pad2(w2, c2p, hp).astype(bf), _row(b2, hp),
                         _row(g2, hp), _row(be2, hp)))
    return _pad2(w0, ip, hp).astype(bf), _row(b0, hp), layers_p


def reference_forward(a, pool_mat, x, params):
    """Pure-JAX reference mirroring the kernel's precision choices
    (bf16 matmul operands, f32 accumulation, one-pass BN variance)."""
    bf = jnp.bfloat16
    w0, b0, layers = params

    def bn(h, g, be):
        mu = jnp.mean(h, axis=0, keepdims=True)
        var = jnp.maximum(jnp.mean(h * h, axis=0, keepdims=True) - mu * mu, 0.0)
        scale = g * jax.lax.rsqrt(var + BN_EPS)
        return h * scale + (be - mu * scale)

    x = (jnp.dot(x.astype(bf), w0.astype(bf),
                 preferred_element_type=jnp.float32) + b0).astype(bf)
    a_bf = a.astype(bf)
    nlayer = len(layers)
    for li, (w1, b1, g1, be1, w2, b2, g2, be2) in enumerate(layers):
        h = jnp.dot(a_bf, x, preferred_element_type=jnp.float32)
        u = jnp.dot(h.astype(bf), w1.astype(bf),
                    preferred_element_type=jnp.float32) + b1
        xn = jnp.maximum(bn(u, g1, be1), 0.0)
        v = jnp.dot(xn.astype(bf), w2.astype(bf),
                    preferred_element_type=jnp.float32) + b2
        y = bn(v, g2, be2)
        x = jnp.maximum(y, 0.0).astype(bf) if li < nlayer - 1 else y
    return x, pool_mat @ x


# ---------------------------------- main ------------------------------------ #
if __name__ == "__main__":
    key = jax.random.PRNGKey(0)
    k_x, k_e, k_w, k_p = jax.random.split(key, 4)

    # Small deterministic example consistent with EigenMLP_BN's forward.
    PERIOD = 4               # module input dim is 2*period
    IN_DIM = 2 * PERIOD      # 8
    HIDDEN = 32
    NLAYER = 2
    N = 300                  # nodes (not a tile multiple -> exercises masking)
    G = 2                    # graphs in the batch
    E = 1500                 # directed edges

    ROW_TILE = 256           # MXU-sized row tiles for the matmul kernels
    K_TILE = 256             # A-column tiles (bounds VMEM independently of N)
    n_pad = _rup(N, max(ROW_TILE, K_TILE))          # 512 -> 2x2 grid on A
    BN_TILE = 512 if n_pad % 512 == 0 else ROW_TILE  # bigger tile for elementwise BN

    x_in = jax.random.normal(k_x, (N, IN_DIM), jnp.float32)
    edge_index = jax.random.randint(k_e, (2, E), 0, N, dtype=jnp.int32)
    edge_attr = jax.random.uniform(k_w, (E,), jnp.float32, minval=-1.0, maxval=1.0)
    batch = jnp.repeat(jnp.arange(G, dtype=jnp.int32), N // G)

    params = init_params(k_p, IN_DIM, HIDDEN, NLAYER)
    padded = pad_params(params, IN_DIM, HIDDEN)

    a_dense = dense_weighted_adjacency(edge_index, edge_attr, N)       # (N,N) f32
    a_pad = _pad2(a_dense, n_pad, n_pad).astype(jnp.bfloat16)          # bf16 stream
    pool_mat = pooling_matrix(batch, G)                                # (G,N)
    pool_pad = _pad2(pool_mat, G, n_pad)
    x_pad = _pad2(x_in, n_pad, _rup(IN_DIM, LANE)).astype(jnp.bfloat16)

    fwd = jax.jit(functools.partial(
        eigen_mlp_bn_forward, n_valid=N, hidden=HIDDEN,
        row_tile=ROW_TILE, k_tile=K_TILE, bn_tile=BN_TILE))
    x_out, xpool = fwd(a_pad, pool_pad, x_pad, padded)
    x_out, xpool = jax.block_until_ready((x_out, xpool))

    x_ref, xpool_ref = reference_forward(a_dense, pool_mat, x_in, params)
    np.testing.assert_allclose(np.asarray(x_out), np.asarray(x_ref),
                               rtol=2e-2, atol=2e-2)
    np.testing.assert_allclose(np.asarray(xpool), np.asarray(xpool_ref),
                               rtol=2e-2, atol=2e-2)

    print("KERNEL_OK")
</pallas_src>

<mosaic_0001>
module attributes {stable_mosaic.version = 11 : i64} {
  func.func @mm_bias_kernel(%arg0: i32, %arg1: memref<256x128xbf16, #tpu.memory_space<vmem>>, %arg2: memref<128x128xbf16, #tpu.memory_space<vmem>>, %arg3: memref<1x128xf32, #tpu.memory_space<vmem>>, %arg4: memref<256x128xbf16, #tpu.memory_space<vmem>>) attributes {dimension_semantics = [#tpu.dimension_semantics<parallel>], iteration_bounds = array<i64: 2>, scalar_prefetch = 0 : i64, scratch_operands = 0 : i64, tpu.core_type = #tpu.core_type<tc>, window_params = [{transform_indices = @transform_0, window_bounds = array<i64: 256, 128>}, {pipeline_mode = #tpu.pipeline_mode<synchronous>, transform_indices = @transform_1, window_bounds = array<i64: 128, 128>}, {pipeline_mode = #tpu.pipeline_mode<synchronous>, transform_indices = @transform_2, window_bounds = array<i64: 1, 128>}, {transform_indices = @transform_3, window_bounds = array<i64: 256, 128>}]} {
    %c0 = arith.constant 0 : index
    %c0_0 = arith.constant 0 : index
    %0 = vector.load %arg1[%c0, %c0_0] : memref<256x128xbf16, #tpu.memory_space<vmem>>, vector<256x128xbf16>
    %c0_1 = arith.constant 0 : index
    %c0_2 = arith.constant 0 : index
    %1 = vector.load %arg2[%c0_1, %c0_2] : memref<128x128xbf16, #tpu.memory_space<vmem>>, vector<128x128xbf16>
    %cst = arith.constant dense<0.000000e+00> : vector<256x128xf32>
    %2 = tpu.matmul %0, %1, %cst {dimension_numbers = #tpu.dot_dimension_numbers<[1], [0], [0], [1], [0, 0, 1, 1], [], []>} : vector<256x128xbf16>, vector<128x128xbf16>, vector<256x128xf32> -> vector<256x128xf32>
    %c0_3 = arith.constant 0 : index
    %c0_4 = arith.constant 0 : index
    %3 = vector.load %arg3[%c0_3, %c0_4] : memref<1x128xf32, #tpu.memory_space<vmem>>, vector<1x128xf32>
    %4 = vector.broadcast %3 : vector<1x128xf32> to vector<256x128xf32>
    %5 = arith.addf %2, %4 : vector<256x128xf32>
    %6 = arith.truncf %5 : vector<256x128xf32> to vector<256x128xbf16>
    %c0_5 = arith.constant 0 : index
    %c0_6 = arith.constant 0 : index
    %7 = vector.load %arg4[%c0_5, %c0_6] : memref<256x128xbf16, #tpu.memory_space<vmem>>, vector<256x128xbf16>
    tpu.vector_store %arg4[%c0_5, %c0_6], %6 {strides = array<i32>} : memref<256x128xbf16, #tpu.memory_space<vmem>>, vector<256x128xbf16>,
    return
  }
  func.func @transform_0(%arg0: i32) -> (i32, i32) {
    %c0_i32 = arith.constant 0 : i32
    %c0_i32_0 = arith.constant 0 : i32
    return %arg0, %c0_i32 : i32, i32
  }
  func.func @transform_1(%arg0: i32) -> (i32, i32) {
    %c0_i32 = arith.constant 0 : i32
    %c0_i32_0 = arith.constant 0 : i32
    %c0_i32_1 = arith.constant 0 : i32
    return %c0_i32, %c0_i32_0 : i32, i32
  }
  func.func @transform_2(%arg0: i32) -> (i32, i32) {
    %c0_i32 = arith.constant 0 : i32
    %c0_i32_0 = arith.constant 0 : i32
    %c0_i32_1 = arith.constant 0 : i32
    return %c0_i32, %c0_i32_0 : i32, i32
  }
  func.func @transform_3(%arg0: i32) -> (i32, i32) {
    %c0_i32 = arith.constant 0 : i32
    %c0_i32_0 = arith.constant 0 : i32
    return %arg0, %c0_i32 : i32, i32
  }
}

module attributes {stable_mosaic.version = 11 : i64} {
  func.func @agg_mm_stats_kernel(%arg0: i32, %arg1: i32, %arg2: memref<256x256xbf16, #tpu.memory_space<vmem>>, %arg3: memref<256x128xbf16, #tpu.memory_space<vmem>>, %arg4: memref<128x128xbf16, #tpu.memory_space<vmem>>, %arg5: memref<1x128xf32, #tpu.memory_space<vmem>>, %arg6: memref<256x128xf32, #tpu.memory_space<vmem>>, %arg7: memref<1x1x128xf32, #tpu.memory_space<vmem>>, %arg8: memref<1x1x128xf32, #tpu.memory_space<vmem>>, %arg9: memref<256x128xf32, #tpu.memory_space<vmem>>) attributes {dimension_semantics = [#tpu.dimension_semantics<parallel>, #tpu.dimension_semantics<arbitrary>], iteration_bounds = array<i64: 2, 2>, scalar_prefetch = 0 : i64, scratch_operands = 1 : i64, tpu.core_type = #tpu.core_type<tc>, window_params = [{transform_indices = @transform_0, window_bounds = array<i64: 256, 256>}, {transform_indices = @transform_1, window_bounds = array<i64: 256, 128>}, {pipeline_mode = #tpu.pipeline_mode<synchronous>, transform_indices = @transform_2, window_bounds = array<i64: 128, 128>}, {pipeline_mode = #tpu.pipeline_mode<synchronous>, transform_indices = @transform_3, window_bounds = array<i64: 1, 128>}, {transform_indices = @transform_4, window_bounds = array<i64: 256, 128>}, {transform_indices = @transform_5, window_bounds = array<i64: 1, 1, 128>}, {transform_indices = @transform_6, window_bounds = array<i64: 1, 1, 128>}]} {
    %c0_i32 = arith.constant 0 : i32
    %0 = arith.cmpi eq, %arg1, %c0_i32 : i32
    %1 = arith.extui %0 : i1 to i32
    %c0_i32_0 = arith.constant 0 : i32
    %2 = arith.cmpi ne, %1, %c0_i32_0 : i32
    scf.if %2 {
      %cst_9 = arith.constant 0.000000e+00 : f32
      %12 = vector.broadcast %cst_9 : f32 to vector<256x128xf32>
      %c0_10 = arith.constant 0 : index
      %c0_11 = arith.constant 0 : index
      %13 = vector.load %arg9[%c0_10, %c0_11] : memref<256x128xf32, #tpu.memory_space<vmem>>, vector<256x128xf32>
      tpu.vector_store %arg9[%c0_10, %c0_11], %12 {strides = array<i32>} : memref<256x128xf32, #tpu.memory_space<vmem>>, vector<256x128xf32>,
    } else {
    }
    %c0 = arith.constant 0 : index
    %c0_1 = arith.constant 0 : index
    %3 = vector.load %arg9[%c0, %c0_1] : memref<256x128xf32, #tpu.memory_space<vmem>>, vector<256x128xf32>
    %c0_2 = arith.constant 0 : index
    %c0_3 = arith.constant 0 : index
    %4 = vector.load %arg2[%c0_2, %c0_3] : memref<256x256xbf16, #tpu.memory_space<vmem>>, vector<256x256xbf16>
    %c0_4 = arith.constant 0 : index
    %c0_5 = arith.constant 0 : index
    %5 = vector.load %arg3[%c0_4, %c0_5] : memref<256x128xbf16, #tpu.memory_space<vmem>>, vector<256x128xbf16>
    %cst = arith.constant dense<0.000000e+00> : vector<256x128xf32>
    %6 = tpu.matmul %4, %5, %cst {dimension_numbers = #tpu.dot_dimension_numbers<[1], [0], [0], [1], [0, 0, 1, 1], [], []>} : vector<256x256xbf16>, vector<256x128xbf16>, vector<256x128xf32> -> vector<256x128xf32>
    %7 = arith.addf %3, %6 : vector<256x128xf32>
    %c0_6 = arith.constant 0 : index
    %c0_7 = arith.constant 0 : index
    %8 = vector.load %arg9[%c0_6, %c0_7] : memref<256x128xf32, #tpu.memory_space<vmem>>, vector<256x128xf32>
    tpu.vector_store %arg9[%c0_6, %c0_7], %7 {strides = array<i32>} : memref<256x128xf32, #tpu.memory_space<vmem>>, vector<256x128xf32>,
    %c1_i32 = arith.constant 1 : i32
    %9 = arith.cmpi eq, %arg1, %c1_i32 : i32
    %10 = arith.extui %9 : i1 to i32
    %c0_i32_8 = arith.constant 0 : i32
    %11 = arith.cmpi ne, %10, %c0_i32_8 : i32
    scf.if %11 {
      %c0_9 = arith.constant 0 : index
      %c0_10 = arith.constant 0 : index
      %12 = vector.load %arg9[%c0_9, %c0_10] : memref<256x128xf32, #tpu.memory_space<vmem>>, vector<256x128xf32>
      %13 = arith.truncf %12 : vector<256x128xf32> to vector<256x128xbf16>
      %c0_11 = arith.constant 0 : index
      %c0_12 = arith.constant 0 : index
      %14 = vector.load %arg4[%c0_11, %c0_12] : memref<128x128xbf16, #tpu.memory_space<vmem>>, vector<128x128xbf16>
      %cst_13 = arith.constant dense<0.000000e+00> : vector<256x128xf32>
      %15 = tpu.matmul %13, %14, %cst_13 {dimension_numbers = #tpu.dot_dimension_numbers<[1], [0], [0], [1], [0, 0, 1, 1], [], []>} : vector<256x128xbf16>, vector<128x128xbf16>, vector<256x128xf32> -> vector<256x128xf32>
      %c0_14 = arith.constant 0 : index
      %c0_15 = arith.constant 0 : index
      %16 = vector.load %arg5[%c0_14, %c0_15] : memref<1x128xf32, #tpu.memory_space<vmem>>, vector<1x128xf32>
      %17 = vector.broadcast %16 : vector<1x128xf32> to vector<256x128xf32>
      %18 = arith.addf %15, %17 : vector<256x128xf32>
      %c0_16 = arith.constant 0 : index
      %c0_17 = arith.constant 0 : index
      %19 = vector.load %arg6[%c0_16, %c0_17] : memref<256x128xf32, #tpu.memory_space<vmem>>, vector<256x128xf32>
      tpu.vector_store %arg6[%c0_16, %c0_17], %18 {strides = array<i32>} : memref<256x128xf32, #tpu.memory_space<vmem>>, vector<256x128xf32>,
      %20 = tpu.iota {dimensions = array<i32: 0>} : vector<256x128xi32>
      %c256_i32 = arith.constant 256 : i32
      %21 = arith.muli %arg0, %c256_i32 : i32
      %22 = vector.broadcast %21 : i32 to vector<256x128xi32>
      %23 = arith.addi %20, %22 : vector<256x128xi32>
      %c300_i32 = arith.constant 300 : i32
      %24 = vector.broadcast %c300_i32 : i32 to vector<256x128xi32>
      %25 = arith.cmpi slt, %23, %24 : vector<256x128xi32>
      %cst_18 = arith.constant 0.000000e+00 : f32
      %26 = vector.broadcast %cst_18 : f32 to vector<256x128xf32>
      %27 = arith.select %25, %18, %26 : vector<256x128xi1>, vector<256x128xf32>
      %cst_19 = arith.constant dense<0.000000e+00> : vector<128xf32>
      %28 = vector.multi_reduction <add>, %27, %cst_19 [0] : vector<256x128xf32> to vector<128xf32>
      %29 = vector.shape_cast %28 : vector<128xf32> to vector<1x128xf32>
      %30 = vector.shape_cast %29 : vector<1x128xf32> to vector<1x1x128xf32>
      %c0_20 = arith.constant 0 : index
      %c0_21 = arith.constant 0 : index
      %c0_22 = arith.constant 0 : index
      %31 = vector.load %arg7[%c0_20, %c0_21, %c0_22] : memref<1x1x128xf32, #tpu.memory_space<vmem>>, vector<1x1x128xf32>
      tpu.vector_store %arg7[%c0_20, %c0_21, %c0_22], %30 {strides = array<i32>} : memref<1x1x128xf32, #tpu.memory_space<vmem>>, vector<1x1x128xf32>,
      %32 = arith.mulf %27, %27 : vector<256x128xf32>
      %cst_23 = arith.constant dense<0.000000e+00> : vector<128xf32>
      %33 = vector.multi_reduction <add>, %32, %cst_23 [0] : vector<256x128xf32> to vector<128xf32>
      %34 = vector.shape_cast %33 : vector<128xf32> to vector<1x128xf32>
      %35 = vector.shape_cast %34 : vector<1x128xf32> to vector<1x1x128xf32>
      %c0_24 = arith.constant 0 : index
      %c0_25 = arith.constant 0 : index
      %c0_26 = arith.constant 0 : index
      %36 = vector.load %arg8[%c0_24, %c0_25, %c0_26] : memref<1x1x128xf32, #tpu.memory_space<vmem>>, vector<1x1x128xf32>
      tpu.vector_store %arg8[%c0_24, %c0_25, %c0_26], %35 {strides = array<i32>} : memref<1x1x128xf32, #tpu.memory_space<vmem>>, vector<1x1x128xf32>,
    } else {
    }
    return
  }
  func.func @transform_0(%arg0: i32, %arg1: i32) -> (i32, i32) {
    %c0_i32 = arith.constant 0 : i32
    return %arg0, %arg1 : i32, i32
  }
  func.func @transform_1(%arg0: i32, %arg1: i32) -> (i32, i32) {
    %c0_i32 = arith.constant 0 : i32
    %c0_i32_0 = arith.constant 0 : i32
    return %arg1, %c0_i32 : i32, i32
  }
  func.func @transform_2(%arg0: i32, %arg1: i32) -> (i32, i32) {
    %c0_i32 = arith.constant 0 : i32
    %c0_i32_0 = arith.constant 0 : i32
    %c0_i32_1 = arith.constant 0 : i32
    return %c0_i32, %c0_i32_0 : i32, i32
  }
  func.func @transform_3(%arg0: i32, %arg1: i32) -> (i32, i32) {
    %c0_i32 = arith.constant 0 : i32
    %c0_i32_0 = arith.constant 0 : i32
    %c0_i32_1 = arith.constant 0 : i32
    return %c0_i32, %c0_i32_0 : i32, i32
  }
  func.func @transform_4(%arg0: i32, %arg1: i32) -> (i32, i32) {
    %c0_i32 = arith.constant 0 : i32
    %c0_i32_0 = arith.constant 0 : i32
    return %arg0, %c0_i32 : i32, i32
  }
  func.func @transform_5(%arg0: i32, %arg1: i32) -> (i32, i32, i32) {
    %c0_i32 = arith.constant 0 : i32
    %c0_i32_0 = arith.constant 0 : i32
    %c0_i32_1 = arith.constant 0 : i32
    return %arg0, %c0_i32, %c0_i32_0 : i32, i32, i32
  }
  func.func @transform_6(%arg0: i32, %arg1: i32) -> (i32, i32, i32) {
    %c0_i32 = arith.constant 0 : i32
    %c0_i32_0 = arith.constant 0 : i32
    %c0_i32_1 = arith.constant 0 : i32
    return %arg0, %c0_i32, %c0_i32_0 : i32, i32, i32
  }
}

module attributes {stable_mosaic.version = 11 : i64} {
  func.func @bn_act_kernel(%arg0: i32, %arg1: memref<512x128xf32, #tpu.memory_space<vmem>>, %arg2: memref<1x128xf32, #tpu.memory_space<vmem>>, %arg3: memref<1x128xf32, #tpu.memory_space<vmem>>, %arg4: memref<512x128xbf16, #tpu.memory_space<vmem>>) attributes {dimension_semantics = [#tpu.dimension_semantics<parallel>], iteration_bounds = array<i64: 1>, scalar_prefetch = 0 : i64, scratch_operands = 0 : i64, tpu.core_type = #tpu.core_type<tc>, window_params = [{transform_indices = @transform_0, window_bounds = array<i64: 512, 128>}, {pipeline_mode = #tpu.pipeline_mode<synchronous>, transform_indices = @transform_1, window_bounds = array<i64: 1, 128>}, {pipeline_mode = #tpu.pipeline_mode<synchronous>, transform_indices = @transform_2, window_bounds = array<i64: 1, 128>}, {transform_indices = @transform_3, window_bounds = array<i64: 512, 128>}]} {
    %c0 = arith.constant 0 : index
    %c0_0 = arith.constant 0 : index
    %0 = vector.load %arg1[%c0, %c0_0] : memref<512x128xf32, #tpu.memory_space<vmem>>, vector<512x128xf32>
    %c0_1 = arith.constant 0 : index
    %c0_2 = arith.constant 0 : index
    %1 = vector.load %arg2[%c0_1, %c0_2] : memref<1x128xf32, #tpu.memory_space<vmem>>, vector<1x128xf32>
    %2 = vector.broadcast %1 : vector<1x128xf32> to vector<512x128xf32>
    %3 = arith.mulf %0, %2 : vector<512x128xf32>
    %c0_3 = arith.constant 0 : index
    %c0_4 = arith.constant 0 : index
    %4 = vector.load %arg3[%c0_3, %c0_4] : memref<1x128xf32, #tpu.memory_space<vmem>>, vector<1x128xf32>
    %5 = vector.broadcast %4 : vector<1x128xf32> to vector<512x128xf32>
    %6 = arith.addf %3, %5 : vector<512x128xf32>
    %cst = arith.constant 0.000000e+00 : f32
    %7 = vector.broadcast %cst : f32 to vector<512x128xf32>
    %8 = arith.maximumf %6, %7 : vector<512x128xf32>
    %9 = arith.truncf %8 : vector<512x128xf32> to vector<512x128xbf16>
    %c0_5 = arith.constant 0 : index
    %c0_6 = arith.constant 0 : index
    %10 = vector.load %arg4[%c0_5, %c0_6] : memref<512x128xbf16, #tpu.memory_space<vmem>>, vector<512x128xbf16>
    tpu.vector_store %arg4[%c0_5, %c0_6], %9 {strides = array<i32>} : memref<512x128xbf16, #tpu.memory_space<vmem>>, vector<512x128xbf16>,
    return
  }
  func.func @transform_0(%arg0: i32) -> (i32, i32) {
    %c0_i32 = arith.constant 0 : i32
    %c0_i32_0 = arith.constant 0 : i32
    return %arg0, %c0_i32 : i32, i32
  }
  func.func @transform_1(%arg0: i32) -> (i32, i32) {
    %c0_i32 = arith.constant 0 : i32
    %c0_i32_0 = arith.constant 0 : i32
    %c0_i32_1 = arith.constant 0 : i32
    return %c0_i32, %c0_i32_0 : i32, i32
  }
  func.func @transform_2(%arg0: i32) -> (i32, i32) {
    %c0_i32 = arith.constant 0 : i32
    %c0_i32_0 = arith.constant 0 : i32
    %c0_i32_1 = arith.constant 0 : i32
    return %c0_i32, %c0_i32_0 : i32, i32
  }
  func.func @transform_3(%arg0: i32) -> (i32, i32) {
    %c0_i32 = arith.constant 0 : i32
    %c0_i32_0 = arith.constant 0 : i32
    return %arg0, %c0_i32 : i32, i32
  }
}

module attributes {stable_mosaic.version = 11 : i64} {
  func.func @bn_relu_mm_stats_kernel(%arg0: i32, %arg1: memref<256x128xf32, #tpu.memory_space<vmem>>, %arg2: memref<1x128xf32, #tpu.memory_space<vmem>>, %arg3: memref<1x128xf32, #tpu.memory_space<vmem>>, %arg4: memref<128x128xbf16, #tpu.memory_space<vmem>>, %arg5: memref<1x128xf32, #tpu.memory_space<vmem>>, %arg6: memref<256x128xf32, #tpu.memory_space<vmem>>, %arg7: memref<1x1x128xf32, #tpu.memory_space<vmem>>, %arg8: memref<1x1x128xf32, #tpu.memory_space<vmem>>) attributes {dimension_semantics = [#tpu.dimension_semantics<parallel>], iteration_bounds = array<i64: 2>, scalar_prefetch = 0 : i64, scratch_operands = 0 : i64, tpu.core_type = #tpu.core_type<tc>, window_params = [{transform_indices = @transform_0, window_bounds = array<i64: 256, 128>}, {pipeline_mode = #tpu.pipeline_mode<synchronous>, transform_indices = @transform_1, window_bounds = array<i64: 1, 128>}, {pipeline_mode = #tpu.pipeline_mode<synchronous>, transform_indices = @transform_2, window_bounds = array<i64: 1, 128>}, {pipeline_mode = #tpu.pipeline_mode<synchronous>, transform_indices = @transform_3, window_bounds = array<i64: 128, 128>}, {pipeline_mode = #tpu.pipeline_mode<synchronous>, transform_indices = @transform_4, window_bounds = array<i64: 1, 128>}, {transform_indices = @transform_5, window_bounds = array<i64: 256, 128>}, {transform_indices = @transform_6, window_bounds = array<i64: 1, 1, 128>}, {transform_indices = @transform_7, window_bounds = array<i64: 1, 1, 128>}]} {
    %c0 = arith.constant 0 : index
    %c0_0 = arith.constant 0 : index
    %0 = vector.load %arg1[%c0, %c0_0] : memref<256x128xf32, #tpu.memory_space<vmem>>, vector<256x128xf32>
    %c0_1 = arith.constant 0 : index
    %c0_2 = arith.constant 0 : index
    %1 = vector.load %arg2[%c0_1, %c0_2] : memref<1x128xf32, #tpu.memory_space<vmem>>, vector<1x128xf32>
    %2 = vector.broadcast %1 : vector<1x128xf32> to vector<256x128xf32>
    %3 = arith.mulf %0, %2 : vector<256x128xf32>
    %c0_3 = arith.constant 0 : index
    %c0_4 = arith.constant 0 : index
    %4 = vector.load %arg3[%c0_3, %c0_4] : memref<1x128xf32, #tpu.memory_space<vmem>>, vector<1x128xf32>
    %5 = vector.broadcast %4 : vector<1x128xf32> to vector<256x128xf32>
    %6 = arith.addf %3, %5 : vector<256x128xf32>
    %cst = arith.constant 0.000000e+00 : f32
    %7 = vector.broadcast %cst : f32 to vector<256x128xf32>
    %8 = arith.maximumf %6, %7 : vector<256x128xf32>
    %9 = arith.truncf %8 : vector<256x128xf32> to vector<256x128xbf16>
    %c0_5 = arith.constant 0 : index
    %c0_6 = arith.constant 0 : index
    %10 = vector.load %arg4[%c0_5, %c0_6] : memref<128x128xbf16, #tpu.memory_space<vmem>>, vector<128x128xbf16>
    %cst_7 = arith.constant dense<0.000000e+00> : vector<256x128xf32>
    %11 = tpu.matmul %9, %10, %cst_7 {dimension_numbers = #tpu.dot_dimension_numbers<[1], [0], [0], [1], [0, 0, 1, 1], [], []>} : vector<256x128xbf16>, vector<128x128xbf16>, vector<256x128xf32> -> vector<256x128xf32>
    %c0_8 = arith.constant 0 : index
    %c0_9 = arith.constant 0 : index
    %12 = vector.load %arg5[%c0_8, %c0_9] : memref<1x128xf32, #tpu.memory_space<vmem>>, vector<1x128xf32>
    %13 = vector.broadcast %12 : vector<1x128xf32> to vector<256x128xf32>
    %14 = arith.addf %11, %13 : vector<256x128xf32>
    %c0_10 = arith.constant 0 : index
    %c0_11 = arith.constant 0 : index
    %15 = vector.load %arg6[%c0_10, %c0_11] : memref<256x128xf32, #tpu.memory_space<vmem>>, vector<256x128xf32>
    tpu.vector_store %arg6[%c0_10, %c0_11], %14 {strides = array<i32>} : memref<256x128xf32, #tpu.memory_space<vmem>>, vector<256x128xf32>,
    %16 = tpu.iota {dimensions = array<i32: 0>} : vector<256x128xi32>
    %c256_i32 = arith.constant 256 : i32
    %17 = arith.muli %arg0, %c256_i32 : i32
    %18 = vector.broadcast %17 : i32 to vector<256x128xi32>
    %19 = arith.addi %16, %18 : vector<256x128xi32>
    %c300_i32 = arith.constant 300 : i32
    %20 = vector.broadcast %c300_i32 : i32 to vector<256x128xi32>
    %21 = arith.cmpi slt, %19, %20 : vector<256x128xi32>
    %cst_12 = arith.constant 0.000000e+00 : f32
    %22 = vector.broadcast %cst_12 : f32 to vector<256x128xf32>
    %23 = arith.select %21, %14, %22 : vector<256x128xi1>, vector<256x128xf32>
    %cst_13 = arith.constant dense<0.000000e+00> : vector<128xf32>
    %24 = vector.multi_reduction <add>, %23, %cst_13 [0] : vector<256x128xf32> to vector<128xf32>
    %25 = vector.shape_cast %24 : vector<128xf32> to vector<1x128xf32>
    %26 = vector.shape_cast %25 : vector<1x128xf32> to vector<1x1x128xf32>
    %c0_14 = arith.constant 0 : index
    %c0_15 = arith.constant 0 : index
    %c0_16 = arith.constant 0 : index
    %27 = vector.load %arg7[%c0_14, %c0_15, %c0_16] : memref<1x1x128xf32, #tpu.memory_space<vmem>>, vector<1x1x128xf32>
    tpu.vector_store %arg7[%c0_14, %c0_15, %c0_16], %26 {strides = array<i32>} : memref<1x1x128xf32, #tpu.memory_space<vmem>>, vector<1x1x128xf32>,
    %28 = arith.mulf %23, %23 : vector<256x128xf32>
    %cst_17 = arith.constant dense<0.000000e+00> : vector<128xf32>
    %29 = vector.multi_reduction <add>, %28, %cst_17 [0] : vector<256x128xf32> to vector<128xf32>
    %30 = vector.shape_cast %29 : vector<128xf32> to vector<1x128xf32>
    %31 = vector.shape_cast %30 : vector<1x128xf32> to vector<1x1x128xf32>
    %c0_18 = arith.constant 0 : index
    %c0_19 = arith.constant 0 : index
    %c0_20 = arith.constant 0 : index
    %32 = vector.load %arg8[%c0_18, %c0_19, %c0_20] : memref<1x1x128xf32, #tpu.memory_space<vmem>>, vector<1x1x128xf32>
    tpu.vector_store %arg8[%c0_18, %c0_19, %c0_20], %31 {strides = array<i32>} : memref<1x1x128xf32, #tpu.memory_space<vmem>>, vector<1x1x128xf32>,
    return
  }
  func.func @transform_0(%arg0: i32) -> (i32, i32) {
    %c0_i32 = arith.constant 0 : i32
    %c0_i32_0 = arith.constant 0 : i32
    return %arg0, %c0_i32 : i32, i32
  }
  func.func @transform_1(%arg0: i32) -> (i32, i32) {
    %c0_i32 = arith.constant 0 : i32
    %c0_i32_0 = arith.constant 0 : i32
    %c0_i32_1 = arith.constant 0 : i32
    return %c0_i32, %c0_i32_0 : i32, i32
  }
  func.func @transform_2(%arg0: i32) -> (i32, i32) {
    %c0_i32 = arith.constant 0 : i32
    %c0_i32_0 = arith.constant 0 : i32
    %c0_i32_1 = arith.constant 0 : i32
    return %c0_i32, %c0_i32_0 : i32, i32
  }
  func.func @transform_3(%arg0: i32) -> (i32, i32) {
    %c0_i32 = arith.constant 0 : i32
    %c0_i32_0 = arith.constant 0 : i32
    %c0_i32_1 = arith.constant 0 : i32
    return %c0_i32, %c0_i32_0 : i32, i32
  }
  func.func @transform_4(%arg0: i32) -> (i32, i32) {
    %c0_i32 = arith.constant 0 : i32
    %c0_i32_0 = arith.constant 0 : i32
    %c0_i32_1 = arith.constant 0 : i32
    return %c0_i32, %c0_i32_0 : i32, i32
  }
  func.func @transform_5(%arg0: i32) -> (i32, i32) {
    %c0_i32 = arith.constant 0 : i32
    %c0_i32_0 = arith.constant 0 : i32
    return %arg0, %c0_i32 : i32, i32
  }
  func.func @transform_6(%arg0: i32) -> (i32, i32, i32) {
    %c0_i32 = arith.constant 0 : i32
    %c0_i32_0 = arith.constant 0 : i32
    %c0_i32_1 = arith.constant 0 : i32
    return %arg0, %c0_i32, %c0_i32_0 : i32, i32, i32
  }
  func.func @transform_7(%arg0: i32) -> (i32, i32, i32) {
    %c0_i32 = arith.constant 0 : i32
    %c0_i32_0 = arith.constant 0 : i32
    %c0_i32_1 = arith.constant 0 : i32
    return %arg0, %c0_i32, %c0_i32_0 : i32, i32, i32
  }
}

module attributes {stable_mosaic.version = 11 : i64} {
  func.func @bn_act_kernel(%arg0: i32, %arg1: memref<512x128xf32, #tpu.memory_space<vmem>>, %arg2: memref<1x128xf32, #tpu.memory_space<vmem>>, %arg3: memref<1x128xf32, #tpu.memory_space<vmem>>, %arg4: memref<512x128xf32, #tpu.memory_space<vmem>>) attributes {dimension_semantics = [#tpu.dimension_semantics<parallel>], iteration_bounds = array<i64: 1>, scalar_prefetch = 0 : i64, scratch_operands = 0 : i64, tpu.core_type = #tpu.core_type<tc>, window_params = [{transform_indices = @transform_0, window_bounds = array<i64: 512, 128>}, {pipeline_mode = #tpu.pipeline_mode<synchronous>, transform_indices = @transform_1, window_bounds = array<i64: 1, 128>}, {pipeline_mode = #tpu.pipeline_mode<synchronous>, transform_indices = @transform_2, window_bounds = array<i64: 1, 128>}, {transform_indices = @transform_3, window_bounds = array<i64: 512, 128>}]} {
    %c0 = arith.constant 0 : index
    %c0_0 = arith.constant 0 : index
    %0 = vector.load %arg1[%c0, %c0_0] : memref<512x128xf32, #tpu.memory_space<vmem>>, vector<512x128xf32>
    %c0_1 = arith.constant 0 : index
    %c0_2 = arith.constant 0 : index
    %1 = vector.load %arg2[%c0_1, %c0_2] : memref<1x128xf32, #tpu.memory_space<vmem>>, vector<1x128xf32>
    %2 = vector.broadcast %1 : vector<1x128xf32> to vector<512x128xf32>
    %3 = arith.mulf %0, %2 : vector<512x128xf32>
    %c0_3 = arith.constant 0 : index
    %c0_4 = arith.constant 0 : index
    %4 = vector.load %arg3[%c0_3, %c0_4] : memref<1x128xf32, #tpu.memory_space<vmem>>, vector<1x128xf32>
    %5 = vector.broadcast %4 : vector<1x128xf32> to vector<512x128xf32>
    %6 = arith.addf %3, %5 : vector<512x128xf32>
    %c0_5 = arith.constant 0 : index
    %c0_6 = arith.constant 0 : index
    %7 = vector.load %arg4[%c0_5, %c0_6] : memref<512x128xf32, #tpu.memory_space<vmem>>, vector<512x128xf32>
    tpu.vector_store %arg4[%c0_5, %c0_6], %6 {strides = array<i32>} : memref<512x128xf32, #tpu.memory_space<vmem>>, vector<512x128xf32>,
    return
  }
  func.func @transform_0(%arg0: i32) -> (i32, i32) {
    %c0_i32 = arith.constant 0 : i32
    %c0_i32_0 = arith.constant 0 : i32
    return %arg0, %c0_i32 : i32, i32
  }
  func.func @transform_1(%arg0: i32) -> (i32, i32) {
    %c0_i32 = arith.constant 0 : i32
    %c0_i32_0 = arith.constant 0 : i32
    %c0_i32_1 = arith.constant 0 : i32
    return %c0_i32, %c0_i32_0 : i32, i32
  }
  func.func @transform_2(%arg0: i32) -> (i32, i32) {
    %c0_i32 = arith.constant 0 : i32
    %c0_i32_0 = arith.constant 0 : i32
    %c0_i32_1 = arith.constant 0 : i32
    return %c0_i32, %c0_i32_0 : i32, i32
  }
  func.func @transform_3(%arg0: i32) -> (i32, i32) {
    %c0_i32 = arith.constant 0 : i32
    %c0_i32_0 = arith.constant 0 : i32
    return %arg0, %c0_i32 : i32, i32
  }
}

module attributes {stable_mosaic.version = 11 : i64} {
  func.func @mm_bias_kernel(%arg0: i32, %arg1: memref<2x512xf32, #tpu.memory_space<vmem>>, %arg2: memref<512x128xf32, #tpu.memory_space<vmem>>, %arg3: memref<1x128xf32, #tpu.memory_space<vmem>>, %arg4: memref<2x128xf32, #tpu.memory_space<vmem>>) attributes {dimension_semantics = [#tpu.dimension_semantics<parallel>], iteration_bounds = array<i64: 1>, scalar_prefetch = 0 : i64, scratch_operands = 0 : i64, tpu.core_type = #tpu.core_type<tc>, window_params = [{transform_indices = @transform_0, window_bounds = array<i64: 2, 512>}, {pipeline_mode = #tpu.pipeline_mode<synchronous>, transform_indices = @transform_1, window_bounds = array<i64: 512, 128>}, {pipeline_mode = #tpu.pipeline_mode<synchronous>, transform_indices = @transform_2, window_bounds = array<i64: 1, 128>}, {transform_indices = @transform_3, window_bounds = array<i64: 2, 128>}]} {
    %c0 = arith.constant 0 : index
    %c0_0 = arith.constant 0 : index
    %0 = vector.load %arg1[%c0, %c0_0] : memref<2x512xf32, #tpu.memory_space<vmem>>, vector<2x512xf32>
    %c0_1 = arith.constant 0 : index
    %c0_2 = arith.constant 0 : index
    %1 = vector.load %arg2[%c0_1, %c0_2] : memref<512x128xf32, #tpu.memory_space<vmem>>, vector<512x128xf32>
    %cst = arith.constant dense<0.000000e+00> : vector<2x128xf32>
    %2 = tpu.matmul %0, %1, %cst {dimension_numbers = #tpu.dot_dimension_numbers<[1], [0], [0], [1], [0, 0, 1, 1], [], []>} : vector<2x512xf32>, vector<512x128xf32>, vector<2x128xf32> -> vector<2x128xf32>
    %c0_3 = arith.constant 0 : index
    %c0_4 = arith.constant 0 : index
    %3 = vector.load %arg3[%c0_3, %c0_4] : memref<1x128xf32, #tpu.memory_space<vmem>>, vector<1x128xf32>
    %4 = vector.broadcast %3 : vector<1x128xf32> to vector<2x128xf32>
    %5 = arith.addf %2, %4 : vector<2x128xf32>
    %c0_5 = arith.constant 0 : index
    %c0_6 = arith.constant 0 : index
    %6 = vector.load %arg4[%c0_5, %c0_6] : memref<2x128xf32, #tpu.memory_space<vmem>>, vector<2x128xf32>
    tpu.vector_store %arg4[%c0_5, %c0_6], %5 {strides = array<i32>} : memref<2x128xf32, #tpu.memory_space<vmem>>, vector<2x128xf32>,
    return
  }
  func.func @transform_0(%arg0: i32) -> (i32, i32) {
    %c0_i32 = arith.constant 0 : i32
    %c0_i32_0 = arith.constant 0 : i32
    return %arg0, %c0_i32 : i32, i32
  }
  func.func @transform_1(%arg0: i32) -> (i32, i32) {
    %c0_i32 = arith.constant 0 : i32
    %c0_i32_0 = arith.constant 0 : i32
    %c0_i32_1 = arith.constant 0 : i32
    return %c0_i32, %c0_i32_0 : i32, i32
  }
  func.func @transform_2(%arg0: i32) -> (i32, i32) {
    %c0_i32 = arith.constant 0 : i32
    %c0_i32_0 = arith.constant 0 : i32
    %c0_i32_1 = arith.constant 0 : i32
    return %c0_i32, %c0_i32_0 : i32, i32
  }
  func.func @transform_3(%arg0: i32) -> (i32, i32) {
    %c0_i32 = arith.constant 0 : i32
    %c0_i32_0 = arith.constant 0 : i32
    return %arg0, %c0_i32 : i32, i32
  }
}

</mosaic_0001>

<llo_original>
// kernel: eigen_mlp_bn_forward.8
$region0: #{eigen_mlp_bn_forward.8}
  #allocation0 [shape = 'u32[]', space=smem, size = 0x4, offset = 0x4, fixed_abs, tag = 'smem constant byte address 0x4 - core index']
  #allocation1 [shape = 'u32[144,128]{1,0:T(1,128)}', space=vmem, size = 0x12000, scoped, tag = 'internal scratch']
  %s0 = inlined_call_operand.hbm [shape: bf16[512,128], index: 0, kind: input, shape index: {}]
  %s1 = inlined_call_operand.hbm [shape: bf16[128,128], index: 1, kind: input, shape index: {}]
  %s2 = inlined_call_operand.hbm [shape: f32[1,128], index: 2, kind: input, shape index: {}]
  %s3 = inlined_call_operand.hbm [shape: bf16[512,128], index: 3, kind: output, shape index: {}]
  %s4 = sld [smem:[#allocation0]]
  $region57: #{eigen_mlp_bn_forward.8} parent=0
    _
  %s6 = ssub.s32 1, %s4
  %s7 = scalar_select 0, %s6, %s4
  $region1: #{eigen_mlp_bn_forward.8} parent=0
    #allocation2 [shape = 'u8[131072]{0}', space=vmem, size = 0x20000, scoped, tag = 'input window, operand 0']
    #allocation3 [shape = 's32[2]{0}', space=sflag, size = 0x8, scoped, tag = 'scoped memory for eigen_mlp_bn_forward.8']
    #allocation4 [shape = 's32[2]{0}', space=sflag, size = 0x8, scoped, tag = 'scoped memory for eigen_mlp_bn_forward.8']
    #allocation5 [shape = 'u8[32768]{0}', space=vmem, size = 0x8000, scoped, tag = 'input window, operand 1, single buffered']
    #allocation6 [shape = 's32[1]{0}', space=sflag, size = 0x4, scoped, tag = 'scoped memory for eigen_mlp_bn_forward.8']
    #allocation7 [shape = 'u8[512]{0}', space=vmem, size = 0x400, scoped, tag = 'input window, operand 2, single buffered']
    #allocation8 [shape = 'u8[131072]{0}', space=vmem, size = 0x20000, scoped, tag = 'output window, operand 0']
    %8 = vsyncpa [#allocation3], 0
    %s9 = scalar_lea.sflag [#allocation3], 1
    %10 = vsyncpa %s9, 0
    %11 = vsyncpa [#allocation6], 0
    %12 = vsyncpa [#allocation4], 0
    %s13 = scalar_lea.sflag [#allocation4], 1
    %14 = vsyncpa %s13, 0
    loop: start=0, step=1, limit=4
    $region2: #{eigen_mlp_bn_forward.8} parent=1 // loop_pre_header
      _
    $region3: #{eigen_mlp_bn_forward.8} parent=1 // loop_header
      %s16 = sphi 0, %s20
      %p17 = scmp.ge.s32.totalorder %s16, 4
      %s26 = sphi 0, %s28
      %s29 = sphi 0, %s26
      %s30 = sphi 0, %s29
      %s46 = sphi 0, %s30
      %s50 = sphi 0, %s50
      %s52 = sphi 0, %s50
      %s53 = sphi 0, %s52
      %s67 = sphi 0, %s53
      %s71 = sphi 0, %s71
      %s73 = sphi 0, %s71
      %s74 = sphi 0, %s73
      %s88 = sphi 0, %s74
      %s94 = sphi 0, %s96
      %s97 = sphi 0, %s94
      %s98 = sphi 0, %s97
      %s114 = sphi 0, %s98
    $region4: #{eigen_mlp_bn_forward.8} parent=1 // loop_header_branch
      %19 = sbr.rel (%p17) target = $region8
    $region5: #{eigen_mlp_bn_forward.8} parent=1 // loop_body
      %s21 = ssub.s32 %s16, 1
      %s22 = ssub.s32 %s16, 2
      %s23 = sadd.s32 %s16, 1
      %s24 = ssub.s32 %s16, %s23
      %p25 = scmp.eq.s32.totalorder %s24, 0
      %s27 = sadd.s32 %s26, 1
      %s28 = scalar_select %p25, %s26, %s27
      %p31 = pneg %p25
      %p32 = scmp.eq.s32.totalorder %s16, 1
      %p33 = por %p31, %p32
      %p34 = scmp.ne.s32.totalorder %s26, %s29
      %p35 = scmp.eq.s32.totalorder %s16, 0
      %p36 = por %p34, %p35
      %p37 = scmp.ne.s32.totalorder %s26, %s29
      %p38 = scmp.eq.s32.totalorder %s21, 1
      %p39 = por %p37, %p38
      %p40 = scmp.ne.s32.totalorder %s29, %s30
      %p41 = scmp.eq.s32.totalorder %s21, 0
      %p42 = por %p40, %p41
      %p43 = scmp.ne.s32.totalorder %s29, %s30
      %p44 = scmp.eq.s32.totalorder %s22, 1
      %p45 = por %p43, %p44
      %p47 = scmp.ne.s32.totalorder %s30, %s46
      %p48 = scmp.eq.s32.totalorder %s22, 0
      %p49 = por %p47, %p48
      %s51 = sadd.s32 %s50, 1
      %p54 = scmp.eq.s32.totalorder %s16, 1
      %p55 = scmp.ne.s32.totalorder %s50, %s52
      %p56 = scmp.eq.s32.totalorder %s16, 0
      %p57 = por %p55, %p56
      %p58 = scmp.ne.s32.totalorder %s50, %s52
      %p59 = scmp.eq.s32.totalorder %s21, 1
      %p60 = por %p58, %p59
      %p61 = scmp.ne.s32.totalorder %s52, %s53
      %p62 = scmp.eq.s32.totalorder %s21, 0
      %p63 = por %p61, %p62
      %p64 = scmp.ne.s32.totalorder %s52, %s53
      %p65 = scmp.eq.s32.totalorder %s22, 1
      %p66 = por %p64, %p65
      %p68 = scmp.ne.s32.totalorder %s53, %s67
      %p69 = scmp.eq.s32.totalorder %s22, 0
      %p70 = por %p68, %p69
      %s72 = sadd.s32 %s71, 1
      %p75 = scmp.eq.s32.totalorder %s16, 1
      %p76 = scmp.ne.s32.totalorder %s71, %s73
      %p77 = scmp.eq.s32.totalorder %s16, 0
      %p78 = por %p76, %p77
      %p79 = scmp.ne.s32.totalorder %s71, %s73
      %p80 = scmp.eq.s32.totalorder %s21, 1
      %p81 = por %p79, %p80
      %p82 = scmp.ne.s32.totalorder %s73, %s74
      %p83 = scmp.eq.s32.totalorder %s21, 0
      %p84 = por %p82, %p83
      %p85 = scmp.ne.s32.totalorder %s73, %s74
      %p86 = scmp.eq.s32.totalorder %s22, 1
      %p87 = por %p85, %p86
      %p89 = scmp.ne.s32.totalorder %s74, %s88
      %p90 = scmp.eq.s32.totalorder %s22, 0
      %p91 = por %p89, %p90
      %s92 = ssub.s32 %s16, %s23
      %p93 = scmp.eq.s32.totalorder %s92, 0
      %s95 = sadd.s32 %s94, 1
      %s96 = scalar_select %p93, %s94, %s95
      %p99 = pneg %p93
      %p100 = scmp.eq.s32.totalorder %s16, 1
      %p101 = por %p99, %p100
      %p102 = scmp.ne.s32.totalorder %s94, %s97
      %p103 = scmp.eq.s32.totalorder %s16, 0
      %p104 = por %p102, %p103
      %p105 = scmp.ne.s32.totalorder %s94, %s97
      %p106 = scmp.eq.s32.totalorder %s21, 1
      %p107 = por %p105, %p106
      %p108 = scmp.ne.s32.totalorder %s97, %s98
      %p109 = scmp.eq.s32.totalorder %s21, 0
      %p110 = por %p108, %p109
      %p111 = scmp.ne.s32.totalorder %s97, %s98
      %p112 = scmp.eq.s32.totalorder %s22, 1
      %p113 = por %p111, %p112
      %p115 = scmp.ne.s32.totalorder %s98, %s114
      %p116 = scmp.eq.s32.totalorder %s22, 0
      %p117 = por %p115, %p116
      %p118 = scmp.le.s32.totalorder 1, %s16
      %p119 = scmp.lt.s32.totalorder %s16, 3
      %p120 = pnand %p118, %p119
      %p121 = pneg %p120
      // Predicated region
      $region9: #{eigen_mlp_bn_forward.8} parent=5 // pred_check
        _
      $region10: #{eigen_mlp_bn_forward.8} parent=5 // pred_check_branch
        %123 = sbr.rel (%p120) target = $region12
      $region11: #{eigen_mlp_bn_forward.8} parent=5 // pred_region
        %s124 = ssub.s32 %s16, 1
        // Predicated region
        $region13: #{eigen_mlp_bn_forward.8} parent=11 // pred_check
          %p125 = pneg %p63
        $region14: #{eigen_mlp_bn_forward.8} parent=11 // pred_check_branch
          %127 = sbr.rel (%p125) target = $region16
        $region15: #{eigen_mlp_bn_forward.8} parent=11 // pred_region
          %s129 = ssub.s32 1024, 1024
          %130 = vsyncadd [#allocation6], %s129
          %s131 = sshll.u32 [#allocation5], 4
          %s132 = int_to_ptr.vmem [resolvable:$true] %s131
          %137 = dma.hbm_to_vmem [thread:$0]  %s1, 1024, %s132, [#allocation6], 64, 64, 4
        $region16: #{eigen_mlp_bn_forward.8} parent=11 // pred_fallthru
          _
        // Predicated region
        $region17: #{eigen_mlp_bn_forward.8} parent=11 // pred_check
          %p138 = pneg %p84
        $region18: #{eigen_mlp_bn_forward.8} parent=11 // pred_check_branch
          %140 = sbr.rel (%p138) target = $region20
        $region19: #{eigen_mlp_bn_forward.8} parent=11 // pred_region
          %s142 = ssub.s32 16, 16
          %143 = vsyncadd [#allocation6], %s142
          %s145 = sshll.u32 [#allocation7], 4
          %s146 = int_to_ptr.vmem [resolvable:$true] %s145
          %148 = dma.hbm_to_vmem [thread:$0]  %s2, 16, %s146, [#allocation6]
        $region20: #{eigen_mlp_bn_forward.8} parent=11 // pred_fallthru
          _
      $region12: #{eigen_mlp_bn_forward.8} parent=5 // pred_fallthru
        _
      %p149 = scmp.lt.s32.totalorder %s16, 2
      // Predicated region
      $region21: #{eigen_mlp_bn_forward.8} parent=5 // pred_check
        %p150 = pneg %p149
      $region22: #{eigen_mlp_bn_forward.8} parent=5 // pred_check_branch
        %152 = sbr.rel (%p150) target = $region24
      $region23: #{eigen_mlp_bn_forward.8} parent=5 // pred_region
        // Predicated region
        $region25: #{eigen_mlp_bn_forward.8} parent=23 // pred_check
          %p153 = pneg %p36
        $region26: #{eigen_mlp_bn_forward.8} parent=23 // pred_check_branch
          %155 = sbr.rel (%p153) target = $region28
        $region27: #{eigen_mlp_bn_forward.8} parent=23 // pred_region
          %s156 = sand.u32 %s26, 1
          %s157 = scalar_lea.sflag [#allocation3], %s156
          %s158 = sand.u32 %s26, 1
          %s159 = smul.addr %s158, 128
          %s160 = scalar_lea.vmem [#allocation2], %s159
          %s161 = smul.u32 32, %s16
          %s163 = ssub.s32 2048, 2048
          %164 = vsyncadd %s157, %s163
          %s165 = smul.addr %s161, 64
          %s166 = scalar_lea.hbm %s0, %s165
          %s167 = sshll.u32 %s160, 4
          %s168 = int_to_ptr.vmem [resolvable:$true] %s167
          %173 = dma.hbm_to_vmem [thread:$0]  %s166, 2048, %s168, %s157, 64, 64, 4
        $region28: #{eigen_mlp_bn_forward.8} parent=23 // pred_fallthru
          _
      $region24: #{eigen_mlp_bn_forward.8} parent=5 // pred_fallthru
        _
      %p174 = scmp.le.s32.totalorder 1, %s16
      %p175 = scmp.lt.s32.totalorder %s16, 3
      %p176 = pnand %p174, %p175
      %p177 = pneg %p176
      // Predicated region
      $region29: #{eigen_mlp_bn_forward.8} parent=5 // pred_check
        _
      $region30: #{eigen_mlp_bn_forward.8} parent=5 // pred_check_branch
        %179 = sbr.rel (%p176) target = $region32
      $region31: #{eigen_mlp_bn_forward.8} parent=5 // pred_region
        %s180 = ssub.s32 %s16, 1
        %s181 = sand.u32 %s29, 1
        %s182 = scalar_lea.sflag [#allocation3], %s181
        %s183 = sand.u32 %s29, 1
        %s184 = smul.addr %s183, 128
        %s185 = scalar_lea.vmem [#allocation2], %s184
        // Predicated region
        $region33: #{eigen_mlp_bn_forward.8} parent=31 // pred_check
          %p186 = pneg %p42
        $region34: #{eigen_mlp_bn_forward.8} parent=31 // pred_check_branch
          %188 = sbr.rel (%p186) target = $region36
        $region35: #{eigen_mlp_bn_forward.8} parent=31 // pred_region
          %189 = dma.done %s182, 2048
        $region36: #{eigen_mlp_bn_forward.8} parent=31 // pred_fallthru
          _
        // Predicated region
        $region37: #{eigen_mlp_bn_forward.8} parent=31 // pred_check
          %p190 = pneg %p63
        $region38: #{eigen_mlp_bn_forward.8} parent=31 // pred_check_branch
          %192 = sbr.rel (%p190) target = $region40
        $region39: #{eigen_mlp_bn_forward.8} parent=31 // pred_region
          %193 = dma.done [#allocation6], 1024
        $region40: #{eigen_mlp_bn_forward.8} parent=31 // pred_fallthru
          _
        // Predicated region
        $region41: #{eigen_mlp_bn_forward.8} parent=31 // pred_check
          %p194 = pneg %p84
        $region42: #{eigen_mlp_bn_forward.8} parent=31 // pred_check_branch
          %196 = sbr.rel (%p194) target = $region44
        $region43: #{eigen_mlp_bn_forward.8} parent=31 // pred_region
          %197 = dma.done [#allocation6], 16
        $region44: #{eigen_mlp_bn_forward.8} parent=31 // pred_fallthru
          _
        %s198 = sand.u32 %s29, 1
        %s199 = scalar_lea.sflag [#allocation3], %s198
        %s200 = sand.u32 %s29, 1
        %s201 = smul.addr %s200, 128
        %s202 = scalar_lea.vmem [#allocation2], %s201
        %p203 = pneg %p42
        %p204 = pneg %p39
        %p205 = pneg %p63
        %p206 = pneg %p60
        %p207 = pneg %p84
        %p208 = pneg %p81
        %p209 = pneg %p110
        %p210 = pneg %p107
        %s211 = sand.u32 %s97, 1
        %s212 = scalar_lea.sflag [#allocation4], %s211
        %s213 = sand.u32 %s97, 1
        %s214 = smul.addr %s213, 128
        %s215 = scalar_lea.vmem [#allocation8], %s214
        %s216 = smul.u32 32, %s21
        %s217 = smul.u32 32, %s21
        %v219 = vld [vmem:[%s185] sm:$0xf]
        %v220 = vld [vmem:[%s185 + $0x4] sm:$0xf]
        %v221 = vld [vmem:[%s185 + $0x8] sm:$0xf]
        %v222 = vld [vmem:[%s185 + $0xc] sm:$0xf]
        %v223 = vld [vmem:[%s185 + $0x10] sm:$0xf]
        %v224 = vld [vmem:[%s185 + $0x14] sm:$0xf]
        %v225 = vld [vmem:[%s185 + $0x18] sm:$0xf]
        %v226 = vld [vmem:[%s185 + $0x1c] sm:$0xf]
        %v227 = vld [vmem:[%s185 + $0x20] sm:$0xf]
        %v228 = vld [vmem:[%s185 + $0x24] sm:$0xf]
        %v229 = vld [vmem:[%s185 + $0x28] sm:$0xf]
        %v230 = vld [vmem:[%s185 + $0x2c] sm:$0xf]
        %v231 = vld [vmem:[%s185 + $0x30] sm:$0xf]
        %v232 = vld [vmem:[%s185 + $0x34] sm:$0xf]
        %v233 = vld [vmem:[%s185 + $0x38] sm:$0xf]
        %v234 = vld [vmem:[%s185 + $0x3c] sm:$0xf]
        %v235 = vld [vmem:[%s185 + $0x40] sm:$0xf]
        %v236 = vld [vmem:[%s185 + $0x44] sm:$0xf]
        %v237 = vld [vmem:[%s185 + $0x48] sm:$0xf]
        %v238 = vld [vmem:[%s185 + $0x4c] sm:$0xf]
        %v239 = vld [vmem:[%s185 + $0x50] sm:$0xf]
        %v240 = vld [vmem:[%s185 + $0x54] sm:$0xf]
        %v241 = vld [vmem:[%s185 + $0x58] sm:$0xf]
        %v242 = vld [vmem:[%s185 + $0x5c] sm:$0xf]
        %v243 = vld [vmem:[%s185 + $0x60] sm:$0xf]
        %v244 = vld [vmem:[%s185 + $0x64] sm:$0xf]
        %v245 = vld [vmem:[%s185 + $0x68] sm:$0xf]
        %v246 = vld [vmem:[%s185 + $0x6c] sm:$0xf]
        %v247 = vld [vmem:[%s185 + $0x70] sm:$0xf]
        %v248 = vld [vmem:[%s185 + $0x74] sm:$0xf]
        %v249 = vld [vmem:[%s185 + $0x78] sm:$0xf]
        %v250 = vld [vmem:[%s185 + $0x7c] sm:$0xf]
        %v251 = vld [vmem:[#allocation5] sm:$0xf]
        %v252 = vld [vmem:[#allocation5 + $0x4] sm:$0xf]
        %v253 = vld [vmem:[#allocation5 + $0x8] sm:$0xf]
        %v254 = vld [vmem:[#allocation5 + $0xc] sm:$0xf]
        %v255 = vld [vmem:[#allocation5 + $0x10] sm:$0xf]
        %v256 = vld [vmem:[#allocation5 + $0x14] sm:$0xf]
        %v257 = vld [vmem:[#allocation5 + $0x18] sm:$0xf]
        %v258 = vld [vmem:[#allocation5 + $0x1c] sm:$0xf]
        %v259 = vld [vmem:[#allocation5 + $0x20] sm:$0xf]
        %v260 = vld [vmem:[#allocation5 + $0x24] sm:$0xf]
        %v261 = vld [vmem:[#allocation5 + $0x28] sm:$0xf]
        %v262 = vld [vmem:[#allocation5 + $0x2c] sm:$0xf]
        %v263 = vld [vmem:[#allocation5 + $0x30] sm:$0xf]
        %v264 = vld [vmem:[#allocation5 + $0x34] sm:$0xf]
        %v265 = vld [vmem:[#allocation5 + $0x38] sm:$0xf]
        %v266 = vld [vmem:[#allocation5 + $0x3c] sm:$0xf]
        %v267 = vld [vmem:[#allocation7] sm:$0x1]
        %v269 = vlaneseq
        %v270 = vshrl.u32 %v269, 7
        %v271 = vsub.s32 0, %v270
        %v272 = vrot.slane %v267, %v271
        %v306 = vunpack.c.l.b16 %v219
        %v307 = vunpack.c.l.b16 %v220
        %v308 = vunpack.c.l.b16 %v221
        %v309 = vunpack.c.l.b16 %v222
        %v310 = vunpack.c.l.b16 %v223
        %v311 = vunpack.c.l.b16 %v224
        %v312 = vunpack.c.l.b16 %v225
        %v313 = vunpack.c.l.b16 %v226
        %v314 = vunpack.c.l.b16 %v227
        %v315 = vunpack.c.l.b16 %v228
        %v316 = vunpack.c.l.b16 %v229
        %v317 = vunpack.c.l.b16 %v230
        %v318 = vunpack.c.l.b16 %v231
        %v319 = vunpack.c.l.b16 %v232
        %v320 = vunpack.c.l.b16 %v233
        %v321 = vunpack.c.l.b16 %v234
        %v322 = vunpack.c.l.b16 %v235
        %v323 = vunpack.c.l.b16 %v236
        %v324 = vunpack.c.l.b16 %v237
        %v325 = vunpack.c.l.b16 %v238
        %v326 = vunpack.c.l.b16 %v239
        %v327 = vunpack.c.l.b16 %v240
        %v328 = vunpack.c.l.b16 %v241
        %v329 = vunpack.c.l.b16 %v242
        %v330 = vunpack.c.l.b16 %v243
        %v331 = vunpack.c.l.b16 %v244
        %v332 = vunpack.c.l.b16 %v245
        %v333 = vunpack.c.l.b16 %v246
        %v334 = vunpack.c.l.b16 %v247
        %v335 = vunpack.c.l.b16 %v248
        %v336 = vunpack.c.l.b16 %v249
        %v337 = vunpack.c.l.b16 %v250
        %v338 = vpack.c.b16 %v307, %v306
        %v339 = vpack.c.b16 %v309, %v308
        %v340 = vpack.c.b16 %v311, %v310
        %v341 = vpack.c.b16 %v313, %v312
        %v342 = vpack.c.b16 %v315, %v314
        %v343 = vpack.c.b16 %v317, %v316
        %v344 = vpack.c.b16 %v319, %v318
        %v345 = vpack.c.b16 %v321, %v320
        %v346 = vpack.c.b16 %v323, %v322
        %v347 = vpack.c.b16 %v325, %v324
        %v348 = vpack.c.b16 %v327, %v326
        %v349 = vpack.c.b16 %v329, %v328
        %v350 = vpack.c.b16 %v331, %v330
        %v351 = vpack.c.b16 %v333, %v332
        %v352 = vpack.c.b16 %v335, %v334
        %v353 = vpack.c.b16 %v337, %v336
        %v386 = vunpack.c.l.b16 %v251
        %v387 = vunpack.c.l.b16 %v252
        %v388 = vunpack.c.l.b16 %v253
        %v389 = vunpack.c.l.b16 %v254
        %v390 = vunpack.c.l.b16 %v255
        %v391 = vunpack.c.l.b16 %v256
        %v392 = vunpack.c.l.b16 %v257
        %v393 = vunpack.c.l.b16 %v258
        %v394 = vunpack.c.l.b16 %v259
        %v395 = vunpack.c.l.b16 %v260
        %v396 = vunpack.c.l.b16 %v261
        %v397 = vunpack.c.l.b16 %v262
        %v398 = vunpack.c.l.b16 %v263
        %v399 = vunpack.c.l.b16 %v264
        %v400 = vunpack.c.l.b16 %v265
        %v401 = vunpack.c.l.b16 %v266
        %v402 = vpack.c.b16 %v387, %v386
        %v403 = vpack.c.b16 %v389, %v388
        %v404 = vpack.c.b16 %v391, %v390
        %v405 = vpack.c.b16 %v393, %v392
        %v406 = vpack.c.b16 %v395, %v394
        %v407 = vpack.c.b16 %v397, %v396
        %v408 = vpack.c.b16 %v399, %v398
        %v409 = vpack.c.b16 %v401, %v400
        %418 = vmatprep.subr.bf16.mxu0 0
        %419 = vmatpush1.bf16.msra.mxu0 %v402
        %420 = vmatprep.subr.bf16.mxu0 0
        %421 = vmatpush1.bf16.msra.mxu0 %v403
        %422 = vmatprep.subr.bf16.mxu0 0
        %423 = vmatpush1.bf16.msra.mxu0 %v404
        %424 = vmatprep.subr.bf16.mxu0 0
        %425 = vmatpush1.bf16.msra.mxu0 %v405
        %426 = vmatprep.subr.bf16.mxu0 0
        %427 = vmatpush1.bf16.msra.mxu0 %v406
        %428 = vmatprep.subr.bf16.mxu0 0
        %429 = vmatpush1.bf16.msra.mxu0 %v407
        %430 = vmatprep.subr.bf16.mxu0 0
        %431 = vmatpush1.bf16.msra.mxu0 %v408
        %432 = vmatprep.subr.bf16.mxu0 0
        %433 = vmatpush1.bf16.msra.mxu0 %v409
        %434 = vmatprep.subr.bf16.mxu0 0
        %435 = vmatpush1.bf16.msra.mxu0 0
        %436 = vmatprep.subr.bf16.mxu0 0
        %437 = vmatpush1.bf16.msra.mxu0 0
        %438 = vmatprep.subr.bf16.mxu0 0
        %439 = vmatpush1.bf16.msra.mxu0 0
        %440 = vmatprep.subr.bf16.mxu0 0
        %441 = vmatpush1.bf16.msra.mxu0 0
        %442 = vmatprep.subr.bf16.mxu0 0
        %443 = vmatpush1.bf16.msra.mxu0 0
        %444 = vmatprep.subr.bf16.mxu0 0
        %445 = vmatpush1.bf16.msra.mxu0 0
        %446 = vmatprep.subr.bf16.mxu0 0
        %447 = vmatpush1.bf16.msra.mxu0 0
        %448 = vmatprep.subr.bf16.mxu0 0
        %449 = vmatpush1.bf16.msra.mxu0 0
        %450 = vmatprep.mubr.bf16.mxu0 0
        %451 = vmatmul.mubr.bf16.gmra.mrb[0].mxu0 %v338
        %v452 = vpop.f32.mrb[0].mxu0
        %v453 = vadd.f32 %v272, %v452
        %v454 = vpop.f32.mrb[0].mxu0
        %v455 = vpop.f32.mrb[0].mxu0
        %v456 = vadd.f32 %v272, %v455
        %v457 = vpop.f32.mrb[0].mxu0
        %458 = vmatprep.mubr.bf16.mxu0 0
        %459 = vmatmul.mubr.bf16.gmra.mrb[0].mxu0 %v339
        %v460 = vpop.f32.mrb[0].mxu0
        %v461 = vadd.f32 %v272, %v460
        %v462 = vpop.f32.mrb[0].mxu0
        %v463 = vpop.f32.mrb[0].mxu0
        %v464 = vadd.f32 %v272, %v463
        %v465 = vpop.f32.mrb[0].mxu0
        %466 = vmatprep.mubr.bf16.mxu0 0
        %467 = vmatmul.mubr.bf16.gmra.mrb[0].mxu0 %v340
        %v468 = vpop.f32.mrb[0].mxu0
        %v469 = vadd.f32 %v272, %v468
        %v470 = vpop.f32.mrb[0].mxu0
        %v471 = vpop.f32.mrb[0].mxu0
        %v472 = vadd.f32 %v272, %v471
        %v473 = vpop.f32.mrb[0].mxu0
        %474 = vmatprep.mubr.bf16.mxu0 0
        %475 = vmatmul.mubr.bf16.gmra.mrb[0].mxu0 %v341
        %v476 = vpop.f32.mrb[0].mxu0
        %v477 = vadd.f32 %v272, %v476
        %v478 = vpop.f32.mrb[0].mxu0
        %v479 = vpop.f32.mrb[0].mxu0
        %v480 = vadd.f32 %v272, %v479
        %v481 = vpop.f32.mrb[0].mxu0
        %482 = vmatprep.mubr.bf16.mxu0 0
        %483 = vmatmul.mubr.bf16.gmra.mrb[0].mxu0 %v342
        %v484 = vpop.f32.mrb[0].mxu0
        %v485 = vadd.f32 %v272, %v484
        %v486 = vpop.f32.mrb[0].mxu0
        %v487 = vpop.f32.mrb[0].mxu0
        %v488 = vadd.f32 %v272, %v487
        %v489 = vpop.f32.mrb[0].mxu0
        %490 = vmatprep.mubr.bf16.mxu0 0
        %491 = vmatmul.mubr.bf16.gmra.mrb[0].mxu0 %v343
        %v492 = vpop.f32.mrb[0].mxu0
        %v493 = vadd.f32 %v272, %v492
        %v494 = vpop.f32.mrb[0].mxu0
        %v495 = vpop.f32.mrb[0].mxu0
        %v496 = vadd.f32 %v272, %v495
        %v497 = vpop.f32.mrb[0].mxu0
        %498 = vmatprep.mubr.bf16.mxu0 0
        %499 = vmatmul.mubr.bf16.gmra.mrb[0].mxu0 %v344
        %v500 = vpop.f32.mrb[0].mxu0
        %v501 = vadd.f32 %v272, %v500
        %v502 = vpop.f32.mrb[0].mxu0
        %v503 = vpop.f32.mrb[0].mxu0
        %v504 = vadd.f32 %v272, %v503
        %v505 = vpop.f32.mrb[0].mxu0
        %506 = vmatprep.mubr.bf16.mxu0 0
        %507 = vmatmul.mubr.bf16.gmra.mrb[0].mxu0 %v345
        %v508 = vpop.f32.mrb[0].mxu0
        %v509 = vadd.f32 %v272, %v508
        %v510 = vpop.f32.mrb[0].mxu0
        %v511 = vpop.f32.mrb[0].mxu0
        %v512 = vadd.f32 %v272, %v511
        %v513 = vpop.f32.mrb[0].mxu0
        %514 = vmatprep.mubr.bf16.mxu0 0
        %515 = vmatmul.mubr.bf16.gmra.mrb[0].mxu0 %v346
        %v516 = vpop.f32.mrb[0].mxu0
        %v517 = vadd.f32 %v272, %v516
        %v518 = vpop.f32.mrb[0].mxu0
        %v519 = vpop.f32.mrb[0].mxu0
        %v520 = vadd.f32 %v272, %v519
        %v521 = vpop.f32.mrb[0].mxu0
        %522 = vmatprep.mubr.bf16.mxu0 0
        %523 = vmatmul.mubr.bf16.gmra.mrb[0].mxu0 %v347
        %v524 = vpop.f32.mrb[0].mxu0
        %v525 = vadd.f32 %v272, %v524
        %v526 = vpop.f32.mrb[0].mxu0
        %v527 = vpop.f32.mrb[0].mxu0
        %v528 = vadd.f32 %v272, %v527
        %v529 = vpop.f32.mrb[0].mxu0
        %530 = vmatprep.mubr.bf16.mxu0 0
        %531 = vmatmul.mubr.bf16.gmra.mrb[0].mxu0 %v348
        %v532 = vpop.f32.mrb[0].mxu0
        %v533 = vadd.f32 %v272, %v532
        %v534 = vpop.f32.mrb[0].mxu0
        %v535 = vpop.f32.mrb[0].mxu0
        %v536 = vadd.f32 %v272, %v535
        %v537 = vpop.f32.mrb[0].mxu0
        %538 = vmatprep.mubr.bf16.mxu0 0
        %539 = vmatmul.mubr.bf16.gmra.mrb[0].mxu0 %v349
        %v540 = vpop.f32.mrb[0].mxu0
        %v541 = vadd.f32 %v272, %v540
        %v542 = vpop.f32.mrb[0].mxu0
        %v543 = vpop.f32.mrb[0].mxu0
        %v544 = vadd.f32 %v272, %v543
        %v545 = vpop.f32.mrb[0].mxu0
        %546 = vmatprep.mubr.bf16.mxu0 0
        %547 = vmatmul.mubr.bf16.gmra.mrb[0].mxu0 %v350
        %v548 = vpop.f32.mrb[0].mxu0
        %v549 = vadd.f32 %v272, %v548
        %v550 = vpop.f32.mrb[0].mxu0
        %v551 = vpop.f32.mrb[0].mxu0
        %v552 = vadd.f32 %v272, %v551
        %v553 = vpop.f32.mrb[0].mxu0
        %554 = vmatprep.mubr.bf16.mxu0 0
        %555 = vmatmul.mubr.bf16.gmra.mrb[0].mxu0 %v351
        %v556 = vpop.f32.mrb[0].mxu0
        %v557 = vadd.f32 %v272, %v556
        %v558 = vpop.f32.mrb[0].mxu0
        %v559 = vpop.f32.mrb[0].mxu0
        %v560 = vadd.f32 %v272, %v559
        %v561 = vpop.f32.mrb[0].mxu0
        %562 = vmatprep.mubr.bf16.mxu0 0
        %563 = vmatmul.mubr.bf16.gmra.mrb[0].mxu0 %v352
        %v564 = vpop.f32.mrb[0].mxu0
        %v565 = vadd.f32 %v272, %v564
        %v566 = vpop.f32.mrb[0].mxu0
        %v567 = vpop.f32.mrb[0].mxu0
        %v568 = vadd.f32 %v272, %v567
        %v569 = vpop.f32.mrb[0].mxu0
        %570 = vmatprep.mubr.bf16.mxu0 0
        %571 = vmatmul.mubr.bf16.gmra.mrb[0].mxu0 %v353
        %v572 = vpop.f32.mrb[0].mxu0
        %v573 = vadd.f32 %v272, %v572
        %v574 = vpop.f32.mrb[0].mxu0
        %v575 = vpop.f32.mrb[0].mxu0
        %v576 = vadd.f32 %v272, %v575
        %v577 = vpop.f32.mrb[0].mxu0
        %578 = vdwg.mxu0
        %v579 = vpack.c.bf16 %v456, %v453
        %v580 = vpack.c.bf16 %v464, %v461
        %v581 = vpack.c.bf16 %v472, %v469
        %v582 = vpack.c.bf16 %v480, %v477
        %v583 = vpack.c.bf16 %v488, %v485
        %v584 = vpack.c.bf16 %v496, %v493
        %v585 = vpack.c.bf16 %v504, %v501
        %v586 = vpack.c.bf16 %v512, %v509
        %v587 = vpack.c.bf16 %v520, %v517
        %v588 = vpack.c.bf16 %v528, %v525
        %v589 = vpack.c.bf16 %v536, %v533
        %v590 = vpack.c.bf16 %v544, %v541
        %v591 = vpack.c.bf16 %v552, %v549
        %v592 = vpack.c.bf16 %v560, %v557
        %v593 = vpack.c.bf16 %v568, %v565
        %v594 = vpack.c.bf16 %v576, %v573
        %v611 = vunpack.c.l.b16 %v579
        %v612 = vunpack.c.h.b16 %v579
        %v613 = vunpack.c.l.b16 %v580
        %v614 = vunpack.c.h.b16 %v580
        %v615 = vunpack.c.l.b16 %v581
        %v616 = vunpack.c.h.b16 %v581
        %v617 = vunpack.c.l.b16 %v582
        %v618 = vunpack.c.h.b16 %v582
        %v619 = vunpack.c.l.b16 %v583
        %v620 = vunpack.c.h.b16 %v583
        %v621 = vunpack.c.l.b16 %v584
        %v622 = vunpack.c.h.b16 %v584
        %v623 = vunpack.c.l.b16 %v585
        %v624 = vunpack.c.h.b16 %v585
        %v625 = vunpack.c.l.b16 %v586
        %v626 = vunpack.c.h.b16 %v586
        %v627 = vunpack.c.l.b16 %v587
        %v628 = vunpack.c.h.b16 %v587
        %v629 = vunpack.c.l.b16 %v588
        %v630 = vunpack.c.h.b16 %v588
        %v631 = vunpack.c.l.b16 %v589
        %v632 = vunpack.c.h.b16 %v589
        %v633 = vunpack.c.l.b16 %v590
        %v634 = vunpack.c.h.b16 %v590
        %v635 = vunpack.c.l.b16 %v591
        %v636 = vunpack.c.h.b16 %v591
        %v637 = vunpack.c.l.b16 %v592
        %v638 = vunpack.c.h.b16 %v592
        %v639 = vunpack.c.l.b16 %v593
        %v640 = vunpack.c.h.b16 %v593
        %v641 = vunpack.c.l.b16 %v594
        %v642 = vunpack.c.h.b16 %v594
        %v643 = vpack.c.b16 %v611, %v611
        %v644 = vpack.c.b16 %v612, %v612
        %v645 = vpack.c.b16 %v613, %v613
        %v646 = vpack.c.b16 %v614, %v614
        %v647 = vpack.c.b16 %v615, %v615
        %v648 = vpack.c.b16 %v616, %v616
        %v649 = vpack.c.b16 %v617, %v617
        %v650 = vpack.c.b16 %v618, %v618
        %v651 = vpack.c.b16 %v619, %v619
        %v652 = vpack.c.b16 %v620, %v620
        %v653 = vpack.c.b16 %v621, %v621
        %v654 = vpack.c.b16 %v622, %v622
        %v655 = vpack.c.b16 %v623, %v623
        %v656 = vpack.c.b16 %v624, %v624
        %v657 = vpack.c.b16 %v625, %v625
        %v658 = vpack.c.b16 %v626, %v626
        %v659 = vpack.c.b16 %v627, %v627
        %v660 = vpack.c.b16 %v628, %v628
        %v661 = vpack.c.b16 %v629, %v629
        %v662 = vpack.c.b16 %v630, %v630
        %v663 = vpack.c.b16 %v631, %v631
        %v664 = vpack.c.b16 %v632, %v632
        %v665 = vpack.c.b16 %v633, %v633
        %v666 = vpack.c.b16 %v634, %v634
        %v667 = vpack.c.b16 %v635, %v635
        %v668 = vpack.c.b16 %v636, %v636
        %v669 = vpack.c.b16 %v637, %v637
        %v670 = vpack.c.b16 %v638, %v638
        %v671 = vpack.c.b16 %v639, %v639
        %v672 = vpack.c.b16 %v640, %v640
        %v673 = vpack.c.b16 %v641, %v641
        %v674 = vpack.c.b16 %v642, %v642
        %707 = vst [vmem:[%s215] sm:$0xf] %v643
        %708 = vst [vmem:[%s215 + $0x4] sm:$0xf] %v644
        %709 = vst [vmem:[%s215 + $0x8] sm:$0xf] %v645
        %710 = vst [vmem:[%s215 + $0xc] sm:$0xf] %v646
        %711 = vst [vmem:[%s215 + $0x10] sm:$0xf] %v647
        %712 = vst [vmem:[%s215 + $0x14] sm:$0xf] %v648
        %713 = vst [vmem:[%s215 + $0x18] sm:$0xf] %v649
        %714 = vst [vmem:[%s215 + $0x1c] sm:$0xf] %v650
        %715 = vst [vmem:[%s215 + $0x20] sm:$0xf] %v651
        %716 = vst [vmem:[%s215 + $0x24] sm:$0xf] %v652
        %717 = vst [vmem:[%s215 + $0x28] sm:$0xf] %v653
        %718 = vst [vmem:[%s215 + $0x2c] sm:$0xf] %v654
        %719 = vst [vmem:[%s215 + $0x30] sm:$0xf] %v655
        %720 = vst [vmem:[%s215 + $0x34] sm:$0xf] %v656
        %721 = vst [vmem:[%s215 + $0x38] sm:$0xf] %v657
        %722 = vst [vmem:[%s215 + $0x3c] sm:$0xf] %v658
        %723 = vst [vmem:[%s215 + $0x40] sm:$0xf] %v659
        %724 = vst [vmem:[%s215 + $0x44] sm:$0xf] %v660
        %725 = vst [vmem:[%s215 + $0x48] sm:$0xf] %v661
        %726 = vst [vmem:[%s215 + $0x4c] sm:$0xf] %v662
        %727 = vst [vmem:[%s215 + $0x50] sm:$0xf] %v663
        %728 = vst [vmem:[%s215 + $0x54] sm:$0xf] %v664
        %729 = vst [vmem:[%s215 + $0x58] sm:$0xf] %v665
        %730 = vst [vmem:[%s215 + $0x5c] sm:$0xf] %v666
        %731 = vst [vmem:[%s215 + $0x60] sm:$0xf] %v667
        %732 = vst [vmem:[%s215 + $0x64] sm:$0xf] %v668
        %733 = vst [vmem:[%s215 + $0x68] sm:$0xf] %v669
        %734 = vst [vmem:[%s215 + $0x6c] sm:$0xf] %v670
        %735 = vst [vmem:[%s215 + $0x70] sm:$0xf] %v671
        %736 = vst [vmem:[%s215 + $0x74] sm:$0xf] %v672
        %737 = vst [vmem:[%s215 + $0x78] sm:$0xf] %v673
        %738 = vst [vmem:[%s215 + $0x7c] sm:$0xf] %v674
        %s739 = sand.u32 %s97, 1
        %s740 = scalar_lea.sflag [#allocation4], %s739
        %s741 = sand.u32 %s97, 1
        %s742 = smul.addr %s741, 128
        %s743 = scalar_lea.vmem [#allocation8], %s742
        // Predicated region
        $region45: #{eigen_mlp_bn_forward.8} parent=31 // pred_check
          %p744 = pneg %p107
        $region46: #{eigen_mlp_bn_forward.8} parent=31 // pred_check_branch
          %746 = sbr.rel (%p744) target = $region48
        $region47: #{eigen_mlp_bn_forward.8} parent=31 // pred_region
          %s747 = smul.u32 32, %s21
          %s749 = ssub.s32 2048, 2048
          %750 = vsyncadd %s740, %s749
          %s751 = smul.addr %s747, 64
          %s752 = scalar_lea.hbm %s3, %s751
          %s753 = sshll.u32 %s743, 4
          %s754 = int_to_ptr.vmem [resolvable:$true] %s753
          %759 = dma.vmem_to_hbm [thread:$0]  %s754, 2048, %s752, %s740, 64, 64, 4
        $region48: #{eigen_mlp_bn_forward.8} parent=31 // pred_fallthru
          _
      $region32: #{eigen_mlp_bn_forward.8} parent=5 // pred_fallthru
        _
      %p760 = scmp.le.s32.totalorder 2, %s16
      // Predicated region
      $region49: #{eigen_mlp_bn_forward.8} parent=5 // pred_check
        %p761 = pneg %p760
      $region50: #{eigen_mlp_bn_forward.8} parent=5 // pred_check_branch
        %763 = sbr.rel (%p761) target = $region52
      $region51: #{eigen_mlp_bn_forward.8} parent=5 // pred_region
        %s764 = ssub.s32 %s16, 2
        // Predicated region
        $region53: #{eigen_mlp_bn_forward.8} parent=51 // pred_check
          %p765 = pneg %p113
        $region54: #{eigen_mlp_bn_forward.8} parent=51 // pred_check_branch
          %767 = sbr.rel (%p765) target = $region56
        $region55: #{eigen_mlp_bn_forward.8} parent=51 // pred_region
          %s768 = sand.u32 %s98, 1
          %s769 = scalar_lea.sflag [#allocation4], %s768
          %s770 = sand.u32 %s98, 1
          %s771 = smul.addr %s770, 128
          %s772 = scalar_lea.vmem [#allocation8], %s771
          %773 = dma.done %s769, 2048
        $region56: #{eigen_mlp_bn_forward.8} parent=51 // pred_fallthru
          _
      $region52: #{eigen_mlp_bn_forward.8} parent=5 // pred_fallthru
        _
    $region6: #{eigen_mlp_bn_forward.8} parent=1 // loop_footer
      %s20 = sadd.s32 1, %s16
    $region7: #{eigen_mlp_bn_forward.8} parent=1 // loop_footer_branch
      %15 = sbr.rel target = $region3
    $region8: #{eigen_mlp_bn_forward.8} parent=1 // loop_exit
      _
    %774 = vsyncpa [#allocation3], 1
    %s775 = scalar_lea.sflag [#allocation3], 1
    %776 = vsyncpa %s775, 1
    %777 = vsyncpa [#allocation6], 1
    %778 = vsyncpa [#allocation4], 1
    %s779 = scalar_lea.sflag [#allocation4], 1
    %780 = vsyncpa %s779, 1

// kernel: eigen_mlp_bn_forward.11
$region0: #{eigen_mlp_bn_forward.11}
  #allocation0 [shape = 'u32[]', space=smem, size = 0x4, offset = 0x4, fixed_abs, tag = 'smem constant byte address 0x4 - core index']
  #allocation1 [shape = 'u32[144,128]{1,0:T(1,128)}', space=vmem, size = 0x12000, scoped, tag = 'internal scratch']
  %s0 = inlined_call_operand.hbm [shape: f32[512,128], index: 0, kind: input, shape index: {}]
  %s1 = inlined_call_operand.hbm [shape: f32[1,128], index: 1, kind: input, shape index: {}]
  %s2 = inlined_call_operand.hbm [shape: f32[1,128], index: 2, kind: input, shape index: {}]
  %s3 = inlined_call_operand.hbm [shape: bf16[512,128], index: 3, kind: output, shape index: {}]
  %s4 = sld [smem:[#allocation0]]
  $region34: #{eigen_mlp_bn_forward.11} parent=0
    _
  %s6 = ssub.s32 1, %s4
  %s7 = scalar_select 0, %s6, %s4
  $region1: #{eigen_mlp_bn_forward.11} parent=0
    #allocation2 [shape = 'u8[262144]{0}', space=vmem, size = 0x40000, scoped, tag = 'input window, operand 0, single buffered']
    #allocation3 [shape = 's32[1]{0}', space=sflag, size = 0x4, scoped, tag = 'scoped memory for eigen_mlp_bn_forward.11']
    #allocation4 [shape = 's32[1]{0}', space=sflag, size = 0x4, scoped, tag = 'scoped memory for eigen_mlp_bn_forward.11']
    #allocation5 [shape = 'u8[512]{0}', space=vmem, size = 0x400, scoped, tag = 'input window, operand 1, single buffered']
    #allocation6 [shape = 's32[1]{0}', space=sflag, size = 0x4, scoped, tag = 'scoped memory for eigen_mlp_bn_forward.11']
    #allocation7 [shape = 'u8[512]{0}', space=vmem, size = 0x400, scoped, tag = 'input window, operand 2, single buffered']
    #allocation8 [shape = 'u8[131072]{0}', space=vmem, size = 0x20000, scoped, tag = 'output window, operand 0, single buffered']
    %8 = vsyncpa [#allocation3], 0
    %9 = vsyncpa [#allocation6], 0
    %10 = vsyncpa [#allocation4], 0
    // Predicated region
    $region2: #{eigen_mlp_bn_forward.11} parent=1 // pred_check
      _
    $region3: #{eigen_mlp_bn_forward.11} parent=1 // pred_check_branch
      %12 = sbr.rel (0) target = $region5
    $region4: #{eigen_mlp_bn_forward.11} parent=1 // pred_region
      %s14 = ssub.s32 8192, 8192
      %15 = vsyncadd [#allocation3], %s14
      %s16 = sshll.u32 [#allocation2], 4
      %s17 = int_to_ptr.vmem [resolvable:$true] %s16
      %22 = dma.hbm_to_vmem [thread:$0]  %s0, 8192, %s17, [#allocation3], 128, 128, 8
    $region5: #{eigen_mlp_bn_forward.11} parent=1 // pred_fallthru
      _
    // Predicated region
    $region6: #{eigen_mlp_bn_forward.11} parent=1 // pred_check
      _
    $region7: #{eigen_mlp_bn_forward.11} parent=1 // pred_check_branch
      %24 = sbr.rel (0) target = $region9
    $region8: #{eigen_mlp_bn_forward.11} parent=1 // pred_region
      %s26 = ssub.s32 16, 16
      %27 = vsyncadd [#allocation6], %s26
      %s29 = sshll.u32 [#allocation5], 4
      %s30 = int_to_ptr.vmem [resolvable:$true] %s29
      %32 = dma.hbm_to_vmem [thread:$0]  %s1, 16, %s30, [#allocation6]
    $region9: #{eigen_mlp_bn_forward.11} parent=1 // pred_fallthru
      _
    // Predicated region
    $region10: #{eigen_mlp_bn_forward.11} parent=1 // pred_check
      _
    $region11: #{eigen_mlp_bn_forward.11} parent=1 // pred_check_branch
      %34 = sbr.rel (0) target = $region13
    $region12: #{eigen_mlp_bn_forward.11} parent=1 // pred_region
      %s36 = ssub.s32 16, 16
      %37 = vsyncadd [#allocation6], %s36
      %s39 = sshll.u32 [#allocation7], 4
      %s40 = int_to_ptr.vmem [resolvable:$true] %s39
      %42 = dma.hbm_to_vmem [thread:$0]  %s2, 16, %s40, [#allocation6]
    $region13: #{eigen_mlp_bn_forward.11} parent=1 // pred_fallthru
      _
    // Predicated region
    $region14: #{eigen_mlp_bn_forward.11} parent=1 // pred_check
      _
    $region15: #{eigen_mlp_bn_forward.11} parent=1 // pred_check_branch
      %44 = sbr.rel (0) target = $region17
    $region16: #{eigen_mlp_bn_forward.11} parent=1 // pred_region
      %45 = dma.done [#allocation3], 8192
    $region17: #{eigen_mlp_bn_forward.11} parent=1 // pred_fallthru
      _
    // Predicated region
    $region18: #{eigen_mlp_bn_forward.11} parent=1 // pred_check
      _
    $region19: #{eigen_mlp_bn_forward.11} parent=1 // pred_check_branch
      %47 = sbr.rel (0) target = $region21
    $region20: #{eigen_mlp_bn_forward.11} parent=1 // pred_region
      %48 = dma.done [#allocation6], 16
    $region21: #{eigen_mlp_bn_forward.11} parent=1 // pred_fallthru
      _
    // Predicated region
    $region22: #{eigen_mlp_bn_forward.11} parent=1 // pred_check
      _
    $region23: #{eigen_mlp_bn_forward.11} parent=1 // pred_check_branch
      %50 = sbr.rel (0) target = $region25
    $region24: #{eigen_mlp_bn_forward.11} parent=1 // pred_region
      %51 = dma.done [#allocation6], 16
    $region25: #{eigen_mlp_bn_forward.11} parent=1 // pred_fallthru
      _
    %v52 = vld [vmem:[#allocation2] sm:$0xff]
    %v53 = vld [vmem:[#allocation2 + $0x8] sm:$0xff]
    %v54 = vld [vmem:[#allocation2 + $0x10] sm:$0xff]
    %v55 = vld [vmem:[#allocation2 + $0x18] sm:$0xff]
    %v56 = vld [vmem:[#allocation2 + $0x20] sm:$0xff]
    %v57 = vld [vmem:[#allocation2 + $0x28] sm:$0xff]
    %v58 = vld [vmem:[#allocation2 + $0x30] sm:$0xff]
    %v59 = vld [vmem:[#allocation2 + $0x38] sm:$0xff]
    %v60 = vld [vmem:[#allocation2 + $0x40] sm:$0xff]
    %v61 = vld [vmem:[#allocation2 + $0x48] sm:$0xff]
    %v62 = vld [vmem:[#allocation2 + $0x50] sm:$0xff]
    %v63 = vld [vmem:[#allocation2 + $0x58] sm:$0xff]
    %v64 = vld [vmem:[#allocation2 + $0x60] sm:$0xff]
    %v65 = vld [vmem:[#allocation2 + $0x68] sm:$0xff]
    %v66 = vld [vmem:[#allocation2 + $0x70] sm:$0xff]
    %v67 = vld [vmem:[#allocation2 + $0x78] sm:$0xff]
    %v68 = vld [vmem:[#allocation2 + $0x80] sm:$0xff]
    %v69 = vld [vmem:[#allocation2 + $0x88] sm:$0xff]
    %v70 = vld [vmem:[#allocation2 + $0x90] sm:$0xff]
    %v71 = vld [vmem:[#allocation2 + $0x98] sm:$0xff]
    %v72 = vld [vmem:[#allocation2 + $0xa0] sm:$0xff]
    %v73 = vld [vmem:[#allocation2 + $0xa8] sm:$0xff]
    %v74 = vld [vmem:[#allocation2 + $0xb0] sm:$0xff]
    %v75 = vld [vmem:[#allocation2 + $0xb8] sm:$0xff]
    %v76 = vld [vmem:[#allocation2 + $0xc0] sm:$0xff]
    %v77 = vld [vmem:[#allocation2 + $0xc8] sm:$0xff]
    %v78 = vld [vmem:[#allocation2 + $0xd0] sm:$0xff]
    %v79 = vld [vmem:[#allocation2 + $0xd8] sm:$0xff]
    %v80 = vld [vmem:[#allocation2 + $0xe0] sm:$0xff]
    %v81 = vld [vmem:[#allocation2 + $0xe8] sm:$0xff]
    %v82 = vld [vmem:[#allocation2 + $0xf0] sm:$0xff]
    %v83 = vld [vmem:[#allocation2 + $0xf8] sm:$0xff]
    %v84 = vld [vmem:[#allocation2 + $0x100] sm:$0xff]
    %v85 = vld [vmem:[#allocation2 + $0x108] sm:$0xff]
    %v86 = vld [vmem:[#allocation2 + $0x110] sm:$0xff]
    %v87 = vld [vmem:[#allocation2 + $0x118] sm:$0xff]
    %v88 = vld [vmem:[#allocation2 + $0x120] sm:$0xff]
    %v89 = vld [vmem:[#allocation2 + $0x128] sm:$0xff]
    %v90 = vld [vmem:[#allocation2 + $0x130] sm:$0xff]
    %v91 = vld [vmem:[#allocation2 + $0x138] sm:$0xff]
    %v92 = vld [vmem:[#allocation2 + $0x140] sm:$0xff]
    %v93 = vld [vmem:[#allocation2 + $0x148] sm:$0xff]
    %v94 = vld [vmem:[#allocation2 + $0x150] sm:$0xff]
    %v95 = vld [vmem:[#allocation2 + $0x158] sm:$0xff]
    %v96 = vld [vmem:[#allocation2 + $0x160] sm:$0xff]
    %v97 = vld [vmem:[#allocation2 + $0x168] sm:$0xff]
    %v98 = vld [vmem:[#allocation2 + $0x170] sm:$0xff]
    %v99 = vld [vmem:[#allocation2 + $0x178] sm:$0xff]
    %v100 = vld [vmem:[#allocation2 + $0x180] sm:$0xff]
    %v101 = vld [vmem:[#allocation2 + $0x188] sm:$0xff]
    %v102 = vld [vmem:[#allocation2 + $0x190] sm:$0xff]
    %v103 = vld [vmem:[#allocation2 + $0x198] sm:$0xff]
    %v104 = vld [vmem:[#allocation2 + $0x1a0] sm:$0xff]
    %v105 = vld [vmem:[#allocation2 + $0x1a8] sm:$0xff]
    %v106 = vld [vmem:[#allocation2 + $0x1b0] sm:$0xff]
    %v107 = vld [vmem:[#allocation2 + $0x1b8] sm:$0xff]
    %v108 = vld [vmem:[#allocation2 + $0x1c0] sm:$0xff]
    %v109 = vld [vmem:[#allocation2 + $0x1c8] sm:$0xff]
    %v110 = vld [vmem:[#allocation2 + $0x1d0] sm:$0xff]
    %v111 = vld [vmem:[#allocation2 + $0x1d8] sm:$0xff]
    %v112 = vld [vmem:[#allocation2 + $0x1e0] sm:$0xff]
    %v113 = vld [vmem:[#allocation2 + $0x1e8] sm:$0xff]
    %v114 = vld [vmem:[#allocation2 + $0x1f0] sm:$0xff]
    %v115 = vld [vmem:[#allocation2 + $0x1f8] sm:$0xff]
    %v116 = vld [vmem:[#allocation5] sm:$0x1]
    %v118 = vlaneseq
    %v119 = vshrl.u32 %v118, 7
    %v120 = vsub.s32 0, %v119
    %v121 = vrot.slane %v116, %v120
    %v123 = vmul.f32 %v52, %v121
    %v124 = vmul.f32 %v53, %v121
    %v125 = vmul.f32 %v54, %v121
    %v126 = vmul.f32 %v55, %v121
    %v127 = vmul.f32 %v56, %v121
    %v128 = vmul.f32 %v57, %v121
    %v129 = vmul.f32 %v58, %v121
    %v130 = vmul.f32 %v59, %v121
    %v131 = vmul.f32 %v60, %v121
    %v132 = vmul.f32 %v61, %v121
    %v133 = vmul.f32 %v62, %v121
    %v134 = vmul.f32 %v63, %v121
    %v135 = vmul.f32 %v64, %v121
    %v136 = vmul.f32 %v65, %v121
    %v137 = vmul.f32 %v66, %v121
    %v138 = vmul.f32 %v67, %v121
    %v139 = vmul.f32 %v68, %v121
    %v140 = vmul.f32 %v69, %v121
    %v141 = vmul.f32 %v70, %v121
    %v142 = vmul.f32 %v71, %v121
    %v143 = vmul.f32 %v72, %v121
    %v144 = vmul.f32 %v73, %v121
    %v145 = vmul.f32 %v74, %v121
    %v146 = vmul.f32 %v75, %v121
    %v147 = vmul.f32 %v76, %v121
    %v148 = vmul.f32 %v77, %v121
    %v149 = vmul.f32 %v78, %v121
    %v150 = vmul.f32 %v79, %v121
    %v151 = vmul.f32 %v80, %v121
    %v152 = vmul.f32 %v81, %v121
    %v153 = vmul.f32 %v82, %v121
    %v154 = vmul.f32 %v83, %v121
    %v155 = vmul.f32 %v84, %v121
    %v156 = vmul.f32 %v85, %v121
    %v157 = vmul.f32 %v86, %v121
    %v158 = vmul.f32 %v87, %v121
    %v159 = vmul.f32 %v88, %v121
    %v160 = vmul.f32 %v89, %v121
    %v161 = vmul.f32 %v90, %v121
    %v162 = vmul.f32 %v91, %v121
    %v163 = vmul.f32 %v92, %v121
    %v164 = vmul.f32 %v93, %v121
    %v165 = vmul.f32 %v94, %v121
    %v166 = vmul.f32 %v95, %v121
    %v167 = vmul.f32 %v96, %v121
    %v168 = vmul.f32 %v97, %v121
    %v169 = vmul.f32 %v98, %v121
    %v170 = vmul.f32 %v99, %v121
    %v171 = vmul.f32 %v100, %v121
    %v172 = vmul.f32 %v101, %v121
    %v173 = vmul.f32 %v102, %v121
    %v174 = vmul.f32 %v103, %v121
    %v175 = vmul.f32 %v104, %v121
    %v176 = vmul.f32 %v105, %v121
    %v177 = vmul.f32 %v106, %v121
    %v178 = vmul.f32 %v107, %v121
    %v179 = vmul.f32 %v108, %v121
    %v180 = vmul.f32 %v109, %v121
    %v181 = vmul.f32 %v110, %v121
    %v182 = vmul.f32 %v111, %v121
    %v183 = vmul.f32 %v112, %v121
    %v184 = vmul.f32 %v113, %v121
    %v185 = vmul.f32 %v114, %v121
    %v186 = vmul.f32 %v115, %v121
    %v187 = vld [vmem:[#allocation7] sm:$0x1]
    %v189 = vlaneseq
    %v190 = vshrl.u32 %v189, 7
    %v191 = vsub.s32 0, %v190
    %v192 = vrot.slane %v187, %v191
    %v194 = vadd.f32 %v123, %v192
    %v195 = vadd.f32 %v124, %v192
    %v196 = vadd.f32 %v125, %v192
    %v197 = vadd.f32 %v126, %v192
    %v198 = vadd.f32 %v127, %v192
    %v199 = vadd.f32 %v128, %v192
    %v200 = vadd.f32 %v129, %v192
    %v201 = vadd.f32 %v130, %v192
    %v202 = vadd.f32 %v131, %v192
    %v203 = vadd.f32 %v132, %v192
    %v204 = vadd.f32 %v133, %v192
    %v205 = vadd.f32 %v134, %v192
    %v206 = vadd.f32 %v135, %v192
    %v207 = vadd.f32 %v136, %v192
    %v208 = vadd.f32 %v137, %v192
    %v209 = vadd.f32 %v138, %v192
    %v210 = vadd.f32 %v139, %v192
    %v211 = vadd.f32 %v140, %v192
    %v212 = vadd.f32 %v141, %v192
    %v213 = vadd.f32 %v142, %v192
    %v214 = vadd.f32 %v143, %v192
    %v215 = vadd.f32 %v144, %v192
    %v216 = vadd.f32 %v145, %v192
    %v217 = vadd.f32 %v146, %v192
    %v218 = vadd.f32 %v147, %v192
    %v219 = vadd.f32 %v148, %v192
    %v220 = vadd.f32 %v149, %v192
    %v221 = vadd.f32 %v150, %v192
    %v222 = vadd.f32 %v151, %v192
    %v223 = vadd.f32 %v152, %v192
    %v224 = vadd.f32 %v153, %v192
    %v225 = vadd.f32 %v154, %v192
    %v226 = vadd.f32 %v155, %v192
    %v227 = vadd.f32 %v156, %v192
    %v228 = vadd.f32 %v157, %v192
    %v229 = vadd.f32 %v158, %v192
    %v230 = vadd.f32 %v159, %v192
    %v231 = vadd.f32 %v160, %v192
    %v232 = vadd.f32 %v161, %v192
    %v233 = vadd.f32 %v162, %v192
    %v234 = vadd.f32 %v163, %v192
    %v235 = vadd.f32 %v164, %v192
    %v236 = vadd.f32 %v165, %v192
    %v237 = vadd.f32 %v166, %v192
    %v238 = vadd.f32 %v167, %v192
    %v239 = vadd.f32 %v168, %v192
    %v240 = vadd.f32 %v169, %v192
    %v241 = vadd.f32 %v170, %v192
    %v242 = vadd.f32 %v171, %v192
    %v243 = vadd.f32 %v172, %v192
    %v244 = vadd.f32 %v173, %v192
    %v245 = vadd.f32 %v174, %v192
    %v246 = vadd.f32 %v175, %v192
    %v247 = vadd.f32 %v176, %v192
    %v248 = vadd.f32 %v177, %v192
    %v249 = vadd.f32 %v178, %v192
    %v250 = vadd.f32 %v179, %v192
    %v251 = vadd.f32 %v180, %v192
    %v252 = vadd.f32 %v181, %v192
    %v253 = vadd.f32 %v182, %v192
    %v254 = vadd.f32 %v183, %v192
    %v255 = vadd.f32 %v184, %v192
    %v256 = vadd.f32 %v185, %v192
    %v257 = vadd.f32 %v186, %v192
    %v258 = vmax.f32 %v194, 0.0
    %v259 = vmax.f32 %v195, 0.0
    %v260 = vmax.f32 %v196, 0.0
    %v261 = vmax.f32 %v197, 0.0
    %v262 = vmax.f32 %v198, 0.0
    %v263 = vmax.f32 %v199, 0.0
    %v264 = vmax.f32 %v200, 0.0
    %v265 = vmax.f32 %v201, 0.0
    %v266 = vmax.f32 %v202, 0.0
    %v267 = vmax.f32 %v203, 0.0
    %v268 = vmax.f32 %v204, 0.0
    %v269 = vmax.f32 %v205, 0.0
    %v270 = vmax.f32 %v206, 0.0
    %v271 = vmax.f32 %v207, 0.0
    %v272 = vmax.f32 %v208, 0.0
    %v273 = vmax.f32 %v209, 0.0
    %v274 = vmax.f32 %v210, 0.0
    %v275 = vmax.f32 %v211, 0.0
    %v276 = vmax.f32 %v212, 0.0
    %v277 = vmax.f32 %v213, 0.0
    %v278 = vmax.f32 %v214, 0.0
    %v279 = vmax.f32 %v215, 0.0
    %v280 = vmax.f32 %v216, 0.0
    %v281 = vmax.f32 %v217, 0.0
    %v282 = vmax.f32 %v218, 0.0
    %v283 = vmax.f32 %v219, 0.0
    %v284 = vmax.f32 %v220, 0.0
    %v285 = vmax.f32 %v221, 0.0
    %v286 = vmax.f32 %v222, 0.0
    %v287 = vmax.f32 %v223, 0.0
    %v288 = vmax.f32 %v224, 0.0
    %v289 = vmax.f32 %v225, 0.0
    %v290 = vmax.f32 %v226, 0.0
    %v291 = vmax.f32 %v227, 0.0
    %v292 = vmax.f32 %v228, 0.0
    %v293 = vmax.f32 %v229, 0.0
    %v294 = vmax.f32 %v230, 0.0
    %v295 = vmax.f32 %v231, 0.0
    %v296 = vmax.f32 %v232, 0.0
    %v297 = vmax.f32 %v233, 0.0
    %v298 = vmax.f32 %v234, 0.0
    %v299 = vmax.f32 %v235, 0.0
    %v300 = vmax.f32 %v236, 0.0
    %v301 = vmax.f32 %v237, 0.0
    %v302 = vmax.f32 %v238, 0.0
    %v303 = vmax.f32 %v239, 0.0
    %v304 = vmax.f32 %v240, 0.0
    %v305 = vmax.f32 %v241, 0.0
    %v306 = vmax.f32 %v242, 0.0
    %v307 = vmax.f32 %v243, 0.0
    %v308 = vmax.f32 %v244, 0.0
    %v309 = vmax.f32 %v245, 0.0
    %v310 = vmax.f32 %v246, 0.0
    %v311 = vmax.f32 %v247, 0.0
    %v312 = vmax.f32 %v248, 0.0
    %v313 = vmax.f32 %v249, 0.0
    %v314 = vmax.f32 %v250, 0.0
    %v315 = vmax.f32 %v251, 0.0
    %v316 = vmax.f32 %v252, 0.0
    %v317 = vmax.f32 %v253, 0.0
    %v318 = vmax.f32 %v254, 0.0
    %v319 = vmax.f32 %v255, 0.0
    %v320 = vmax.f32 %v256, 0.0
    %v321 = vmax.f32 %v257, 0.0
    %v322 = vpack.c.bf16 %v259, %v258
    %v323 = vpack.c.bf16 %v261, %v260
    %v324 = vpack.c.bf16 %v263, %v262
    %v325 = vpack.c.bf16 %v265, %v264
    %v326 = vpack.c.bf16 %v267, %v266
    %v327 = vpack.c.bf16 %v269, %v268
    %v328 = vpack.c.bf16 %v271, %v270
    %v329 = vpack.c.bf16 %v273, %v272
    %v330 = vpack.c.bf16 %v275, %v274
    %v331 = vpack.c.bf16 %v277, %v276
    %v332 = vpack.c.bf16 %v279, %v278
    %v333 = vpack.c.bf16 %v281, %v280
    %v334 = vpack.c.bf16 %v283, %v282
    %v335 = vpack.c.bf16 %v285, %v284
    %v336 = vpack.c.bf16 %v287, %v286
    %v337 = vpack.c.bf16 %v289, %v288
    %v338 = vpack.c.bf16 %v291, %v290
    %v339 = vpack.c.bf16 %v293, %v292
    %v340 = vpack.c.bf16 %v295, %v294
    %v341 = vpack.c.bf16 %v297, %v296
    %v342 = vpack.c.bf16 %v299, %v298
    %v343 = vpack.c.bf16 %v301, %v300
    %v344 = vpack.c.bf16 %v303, %v302
    %v345 = vpack.c.bf16 %v305, %v304
    %v346 = vpack.c.bf16 %v307, %v306
    %v347 = vpack.c.bf16 %v309, %v308
    %v348 = vpack.c.bf16 %v311, %v310
    %v349 = vpack.c.bf16 %v313, %v312
    %v350 = vpack.c.bf16 %v315, %v314
    %v351 = vpack.c.bf16 %v317, %v316
    %v352 = vpack.c.bf16 %v319, %v318
    %v353 = vpack.c.bf16 %v321, %v320
    %v386 = vunpack.c.l.b16 %v322
    %v387 = vunpack.c.h.b16 %v322
    %v388 = vunpack.c.l.b16 %v323
    %v389 = vunpack.c.h.b16 %v323
    %v390 = vunpack.c.l.b16 %v324
    %v391 = vunpack.c.h.b16 %v324
    %v392 = vunpack.c.l.b16 %v325
    %v393 = vunpack.c.h.b16 %v325
    %v394 = vunpack.c.l.b16 %v326
    %v395 = vunpack.c.h.b16 %v326
    %v396 = vunpack.c.l.b16 %v327
    %v397 = vunpack.c.h.b16 %v327
    %v398 = vunpack.c.l.b16 %v328
    %v399 = vunpack.c.h.b16 %v328
    %v400 = vunpack.c.l.b16 %v329
    %v401 = vunpack.c.h.b16 %v329
    %v402 = vunpack.c.l.b16 %v330
    %v403 = vunpack.c.h.b16 %v330
    %v404 = vunpack.c.l.b16 %v331
    %v405 = vunpack.c.h.b16 %v331
    %v406 = vunpack.c.l.b16 %v332
    %v407 = vunpack.c.h.b16 %v332
    %v408 = vunpack.c.l.b16 %v333
    %v409 = vunpack.c.h.b16 %v333
    %v410 = vunpack.c.l.b16 %v334
    %v411 = vunpack.c.h.b16 %v334
    %v412 = vunpack.c.l.b16 %v335
    %v413 = vunpack.c.h.b16 %v335
    %v414 = vunpack.c.l.b16 %v336
    %v415 = vunpack.c.h.b16 %v336
    %v416 = vunpack.c.l.b16 %v337
    %v417 = vunpack.c.h.b16 %v337
    %v418 = vunpack.c.l.b16 %v338
    %v419 = vunpack.c.h.b16 %v338
    %v420 = vunpack.c.l.b16 %v339
    %v421 = vunpack.c.h.b16 %v339
    %v422 = vunpack.c.l.b16 %v340
    %v423 = vunpack.c.h.b16 %v340
    %v424 = vunpack.c.l.b16 %v341
    %v425 = vunpack.c.h.b16 %v341
    %v426 = vunpack.c.l.b16 %v342
    %v427 = vunpack.c.h.b16 %v342
    %v428 = vunpack.c.l.b16 %v343
    %v429 = vunpack.c.h.b16 %v343
    %v430 = vunpack.c.l.b16 %v344
    %v431 = vunpack.c.h.b16 %v344
    %v432 = vunpack.c.l.b16 %v345
    %v433 = vunpack.c.h.b16 %v345
    %v434 = vunpack.c.l.b16 %v346
    %v435 = vunpack.c.h.b16 %v346
    %v436 = vunpack.c.l.b16 %v347
    %v437 = vunpack.c.h.b16 %v347
    %v438 = vunpack.c.l.b16 %v348
    %v439 = vunpack.c.h.b16 %v348
    %v440 = vunpack.c.l.b16 %v349
    %v441 = vunpack.c.h.b16 %v349
    %v442 = vunpack.c.l.b16 %v350
    %v443 = vunpack.c.h.b16 %v350
    %v444 = vunpack.c.l.b16 %v351
    %v445 = vunpack.c.h.b16 %v351
    %v446 = vunpack.c.l.b16 %v352
    %v447 = vunpack.c.h.b16 %v352
    %v448 = vunpack.c.l.b16 %v353
    %v449 = vunpack.c.h.b16 %v353
    %v450 = vpack.c.b16 %v386, %v386
    %v451 = vpack.c.b16 %v387, %v387
    %v452 = vpack.c.b16 %v388, %v388
    %v453 = vpack.c.b16 %v389, %v389
    %v454 = vpack.c.b16 %v390, %v390
    %v455 = vpack.c.b16 %v391, %v391
    %v456 = vpack.c.b16 %v392, %v392
    %v457 = vpack.c.b16 %v393, %v393
    %v458 = vpack.c.b16 %v394, %v394
    %v459 = vpack.c.b16 %v395, %v395
    %v460 = vpack.c.b16 %v396, %v396
    %v461 = vpack.c.b16 %v397, %v397
    %v462 = vpack.c.b16 %v398, %v398
    %v463 = vpack.c.b16 %v399, %v399
    %v464 = vpack.c.b16 %v400, %v400
    %v465 = vpack.c.b16 %v401, %v401
    %v466 = vpack.c.b16 %v402, %v402
    %v467 = vpack.c.b16 %v403, %v403
    %v468 = vpack.c.b16 %v404, %v404
    %v469 = vpack.c.b16 %v405, %v405
    %v470 = vpack.c.b16 %v406, %v406
    %v471 = vpack.c.b16 %v407, %v407
    %v472 = vpack.c.b16 %v408, %v408
    %v473 = vpack.c.b16 %v409, %v409
    %v474 = vpack.c.b16 %v410, %v410
    %v475 = vpack.c.b16 %v411, %v411
    %v476 = vpack.c.b16 %v412, %v412
    %v477 = vpack.c.b16 %v413, %v413
    %v478 = vpack.c.b16 %v414, %v414
    %v479 = vpack.c.b16 %v415, %v415
    %v480 = vpack.c.b16 %v416, %v416
    %v481 = vpack.c.b16 %v417, %v417
    %v482 = vpack.c.b16 %v418, %v418
    %v483 = vpack.c.b16 %v419, %v419
    %v484 = vpack.c.b16 %v420, %v420
    %v485 = vpack.c.b16 %v421, %v421
    %v486 = vpack.c.b16 %v422, %v422
    %v487 = vpack.c.b16 %v423, %v423
    %v488 = vpack.c.b16 %v424, %v424
    %v489 = vpack.c.b16 %v425, %v425
    %v490 = vpack.c.b16 %v426, %v426
    %v491 = vpack.c.b16 %v427, %v427
    %v492 = vpack.c.b16 %v428, %v428
    %v493 = vpack.c.b16 %v429, %v429
    %v494 = vpack.c.b16 %v430, %v430
    %v495 = vpack.c.b16 %v431, %v431
    %v496 = vpack.c.b16 %v432, %v432
    %v497 = vpack.c.b16 %v433, %v433
    %v498 = vpack.c.b16 %v434, %v434
    %v499 = vpack.c.b16 %v435, %v435
    %v500 = vpack.c.b16 %v436, %v436
    %v501 = vpack.c.b16 %v437, %v437
    %v502 = vpack.c.b16 %v438, %v438
    %v503 = vpack.c.b16 %v439, %v439
    %v504 = vpack.c.b16 %v440, %v440
    %v505 = vpack.c.b16 %v441, %v441
    %v506 = vpack.c.b16 %v442, %v442
    %v507 = vpack.c.b16 %v443, %v443
    %v508 = vpack.c.b16 %v444, %v444
    %v509 = vpack.c.b16 %v445, %v445
    %v510 = vpack.c.b16 %v446, %v446
    %v511 = vpack.c.b16 %v447, %v447
    %v512 = vpack.c.b16 %v448, %v448
    %v513 = vpack.c.b16 %v449, %v449
    %578 = vst [vmem:[#allocation8] sm:$0xf] %v450
    %579 = vst [vmem:[#allocation8 + $0x4] sm:$0xf] %v451
    %580 = vst [vmem:[#allocation8 + $0x8] sm:$0xf] %v452
    %581 = vst [vmem:[#allocation8 + $0xc] sm:$0xf] %v453
    %582 = vst [vmem:[#allocation8 + $0x10] sm:$0xf] %v454
    %583 = vst [vmem:[#allocation8 + $0x14] sm:$0xf] %v455
    %584 = vst [vmem:[#allocation8 + $0x18] sm:$0xf] %v456
    %585 = vst [vmem:[#allocation8 + $0x1c] sm:$0xf] %v457
    %586 = vst [vmem:[#allocation8 + $0x20] sm:$0xf] %v458
    %587 = vst [vmem:[#allocation8 + $0x24] sm:$0xf] %v459
    %588 = vst [vmem:[#allocation8 + $0x28] sm:$0xf] %v460
    %589 = vst [vmem:[#allocation8 + $0x2c] sm:$0xf] %v461
    %590 = vst [vmem:[#allocation8 + $0x30] sm:$0xf] %v462
    %591 = vst [vmem:[#allocation8 + $0x34] sm:$0xf] %v463
    %592 = vst [vmem:[#allocation8 + $0x38] sm:$0xf] %v464
    %593 = vst [vmem:[#allocation8 + $0x3c] sm:$0xf] %v465
    %594 = vst [vmem:[#allocation8 + $0x40] sm:$0xf] %v466
    %595 = vst [vmem:[#allocation8 + $0x44] sm:$0xf] %v467
    %596 = vst [vmem:[#allocation8 + $0x48] sm:$0xf] %v468
    %597 = vst [vmem:[#allocation8 + $0x4c] sm:$0xf] %v469
    %598 = vst [vmem:[#allocation8 + $0x50] sm:$0xf] %v470
    %599 = vst [vmem:[#allocation8 + $0x54] sm:$0xf] %v471
    %600 = vst [vmem:[#allocation8 + $0x58] sm:$0xf] %v472
    %601 = vst [vmem:[#allocation8 + $0x5c] sm:$0xf] %v473
    %602 = vst [vmem:[#allocation8 + $0x60] sm:$0xf] %v474
    %603 = vst [vmem:[#allocation8 + $0x64] sm:$0xf] %v475
    %604 = vst [vmem:[#allocation8 + $0x68] sm:$0xf] %v476
    %605 = vst [vmem:[#allocation8 + $0x6c] sm:$0xf] %v477
    %606 = vst [vmem:[#allocation8 + $0x70] sm:$0xf] %v478
    %607 = vst [vmem:[#allocation8 + $0x74] sm:$0xf] %v479
    %608 = vst [vmem:[#allocation8 + $0x78] sm:$0xf] %v480
    %609 = vst [vmem:[#allocation8 + $0x7c] sm:$0xf] %v481
    %610 = vst [vmem:[#allocation8 + $0x80] sm:$0xf] %v482
    %611 = vst [vmem:[#allocation8 + $0x84] sm:$0xf] %v483
    %612 = vst [vmem:[#allocation8 + $0x88] sm:$0xf] %v484
    %613 = vst [vmem:[#allocation8 + $0x8c] sm:$0xf] %v485
    %614 = vst [vmem:[#allocation8 + $0x90] sm:$0xf] %v486
    %615 = vst [vmem:[#allocation8 + $0x94] sm:$0xf] %v487
    %616 = vst [vmem:[#allocation8 + $0x98] sm:$0xf] %v488
    %617 = vst [vmem:[#allocation8 + $0x9c] sm:$0xf] %v489
    %618 = vst [vmem:[#allocation8 + $0xa0] sm:$0xf] %v490
    %619 = vst [vmem:[#allocation8 + $0xa4] sm:$0xf] %v491
    %620 = vst [vmem:[#allocation8 + $0xa8] sm:$0xf] %v492
    %621 = vst [vmem:[#allocation8 + $0xac] sm:$0xf] %v493
    %622 = vst [vmem:[#allocation8 + $0xb0] sm:$0xf] %v494
    %623 = vst [vmem:[#allocation8 + $0xb4] sm:$0xf] %v495
    %624 = vst [vmem:[#allocation8 + $0xb8] sm:$0xf] %v496
    %625 = vst [vmem:[#allocation8 + $0xbc] sm:$0xf] %v497
    %626 = vst [vmem:[#allocation8 + $0xc0] sm:$0xf] %v498
    %627 = vst [vmem:[#allocation8 + $0xc4] sm:$0xf] %v499
    %628 = vst [vmem:[#allocation8 + $0xc8] sm:$0xf] %v500
    %629 = vst [vmem:[#allocation8 + $0xcc] sm:$0xf] %v501
    %630 = vst [vmem:[#allocation8 + $0xd0] sm:$0xf] %v502
    %631 = vst [vmem:[#allocation8 + $0xd4] sm:$0xf] %v503
    %632 = vst [vmem:[#allocation8 + $0xd8] sm:$0xf] %v504
    %633 = vst [vmem:[#allocation8 + $0xdc] sm:$0xf] %v505
    %634 = vst [vmem:[#allocation8 + $0xe0] sm:$0xf] %v506
    %635 = vst [vmem:[#allocation8 + $0xe4] sm:$0xf] %v507
    %636 = vst [vmem:[#allocation8 + $0xe8] sm:$0xf] %v508
    %637 = vst [vmem:[#allocation8 + $0xec] sm:$0xf] %v509
    %638 = vst [vmem:[#allocation8 + $0xf0] sm:$0xf] %v510
    %639 = vst [vmem:[#allocation8 + $0xf4] sm:$0xf] %v511
    %640 = vst [vmem:[#allocation8 + $0xf8] sm:$0xf] %v512
    %641 = vst [vmem:[#allocation8 + $0xfc] sm:$0xf] %v513
    // Predicated region
    $region26: #{eigen_mlp_bn_forward.11} parent=1 // pred_check
      _
    $region27: #{eigen_mlp_bn_forward.11} parent=1 // pred_check_branch
      %643 = sbr.rel (0) target = $region29
    $region28: #{eigen_mlp_bn_forward.11} parent=1 // pred_region
      %s645 = ssub.s32 4096, 4096
      %646 = vsyncadd [#allocation4], %s645
      %s647 = sshll.u32 [#allocation8], 4
      %s648 = int_to_ptr.vmem [resolvable:$true] %s647
      %653 = dma.vmem_to_hbm [thread:$0]  %s648, 4096, %s3, [#allocation4], 64, 64, 4
    $region29: #{eigen_mlp_bn_forward.11} parent=1 // pred_fallthru
      _
    // Predicated region
    $region30: #{eigen_mlp_bn_forward.11} parent=1 // pred_check
      _
    $region31: #{eigen_mlp_bn_forward.11} parent=1 // pred_check_branch
      %655 = sbr.rel (0) target = $region33
    $region32: #{eigen_mlp_bn_forward.11} parent=1 // pred_region
      %656 = dma.done [#allocation4], 4096
    $region33: #{eigen_mlp_bn_forward.11} parent=1 // pred_fallthru
      _
    %657 = vsyncpa [#allocation3], 1
    %658 = vsyncpa [#allocation6], 1
    %659 = vsyncpa [#allocation4], 1

// kernel: eigen_mlp_bn_forward.10
$region0: #{eigen_mlp_bn_forward.10}
  #allocation0 [shape = 'u32[]', space=smem, size = 0x4, offset = 0x4, fixed_abs, tag = 'smem constant byte address 0x4 - core index']
  #allocation1 [shape = 'u32[144,128]{1,0:T(1,128)}', space=vmem, size = 0x12000, scoped, tag = 'internal scratch']
  %s0 = inlined_call_operand.hbm [shape: f32[512,128], index: 0, kind: input, shape index: {}]
  %s1 = inlined_call_operand.hbm [shape: f32[1,128], index: 1, kind: input, shape index: {}]
  %s2 = inlined_call_operand.hbm [shape: f32[1,128], index: 2, kind: input, shape index: {}]
  %s3 = inlined_call_operand.hbm [shape: bf16[128,128], index: 3, kind: input, shape index: {}]
  %s4 = inlined_call_operand.hbm [shape: f32[1,128], index: 4, kind: input, shape index: {}]
  %s5 = inlined_call_operand.hbm [shape: f32[512,128], index: 5, kind: output, shape index: {0}]
  %s6 = inlined_call_operand.hbm [shape: f32[2,1,128], index: 6, kind: output, shape index: {1}]
  %s7 = inlined_call_operand.hbm [shape: f32[2,1,128], index: 7, kind: output, shape index: {2}]
  %8 = xla_tuple %s5, %s6, %s7
  %s9 = sld [smem:[#allocation0]]
  $region89: #{eigen_mlp_bn_forward.10} parent=0
    _
  %s11 = ssub.s32 1, %s9
  %s12 = scalar_select 0, %s11, %s9
  $region1: #{eigen_mlp_bn_forward.10} parent=0
    #allocation2 [shape = 'u8[262144]{0}', space=vmem, size = 0x40000, scoped, tag = 'input window, operand 0']
    #allocation3 [shape = 's32[2]{0}', space=sflag, size = 0x8, scoped, tag = 'scoped memory for eigen_mlp_bn_forward.10']
    #allocation4 [shape = 's32[2]{0}', space=sflag, size = 0x8, scoped, tag = 'scoped memory for eigen_mlp_bn_forward.10']
    #allocation5 [shape = 'u8[512]{0}', space=vmem, size = 0x400, scoped, tag = 'input window, operand 1, single buffered']
    #allocation6 [shape = 's32[1]{0}', space=sflag, size = 0x4, scoped, tag = 'scoped memory for eigen_mlp_bn_forward.10']
    #allocation7 [shape = 'u8[512]{0}', space=vmem, size = 0x400, scoped, tag = 'input window, operand 2, single buffered']
    #allocation8 [shape = 'u8[32768]{0}', space=vmem, size = 0x8000, scoped, tag = 'input window, operand 3, single buffered']
    #allocation9 [shape = 's32[1]{0}', space=sflag, size = 0x4, scoped, tag = 'scoped memory for eigen_mlp_bn_forward.10']
    #allocation10 [shape = 'u8[512]{0}', space=vmem, size = 0x400, scoped, tag = 'input window, operand 4, single buffered']
    #allocation11 [shape = 'u8[262144]{0}', space=vmem, size = 0x40000, scoped, tag = 'output window, operand 0']
    #allocation12 [shape = 'u8[1024]{0}', space=vmem, size = 0x400, scoped, tag = 'output window, operand 1']
    #allocation13 [shape = 's32[2]{0}', space=sflag, size = 0x8, scoped, tag = 'scoped memory for eigen_mlp_bn_forward.10']
    #allocation14 [shape = 'u8[1024]{0}', space=vmem, size = 0x400, scoped, tag = 'output window, operand 2']
    %13 = vsyncpa [#allocation3], 0
    %s14 = scalar_lea.sflag [#allocation3], 1
    %15 = vsyncpa %s14, 0
    %16 = vsyncpa [#allocation6], 0
    %17 = vsyncpa [#allocation9], 0
    %18 = vsyncpa [#allocation4], 0
    %s19 = scalar_lea.sflag [#allocation4], 1
    %20 = vsyncpa %s19, 0
    %21 = vsyncpa [#allocation13], 0
    %s22 = scalar_lea.sflag [#allocation13], 1
    %23 = vsyncpa %s22, 0
    loop: start=0, step=1, limit=4
    $region2: #{eigen_mlp_bn_forward.10} parent=1 // loop_pre_header
      _
    $region3: #{eigen_mlp_bn_forward.10} parent=1 // loop_header
      %s25 = sphi 0, %s29
      %p26 = scmp.ge.s32.totalorder %s25, 4
      %s35 = sphi 0, %s37
      %s38 = sphi 0, %s35
      %s39 = sphi 0, %s38
      %s55 = sphi 0, %s39
      %s59 = sphi 0, %s59
      %s61 = sphi 0, %s59
      %s62 = sphi 0, %s61
      %s76 = sphi 0, %s62
      %s80 = sphi 0, %s80
      %s82 = sphi 0, %s80
      %s83 = sphi 0, %s82
      %s97 = sphi 0, %s83
      %s101 = sphi 0, %s101
      %s103 = sphi 0, %s101
      %s104 = sphi 0, %s103
      %s118 = sphi 0, %s104
      %s122 = sphi 0, %s122
      %s124 = sphi 0, %s122
      %s125 = sphi 0, %s124
      %s139 = sphi 0, %s125
      %s145 = sphi 0, %s147
      %s148 = sphi 0, %s145
      %s149 = sphi 0, %s148
      %s165 = sphi 0, %s149
      %s171 = sphi 0, %s173
      %s174 = sphi 0, %s171
      %s175 = sphi 0, %s174
      %s191 = sphi 0, %s175
      %s197 = sphi 0, %s199
      %s200 = sphi 0, %s197
      %s201 = sphi 0, %s200
      %s217 = sphi 0, %s201
    $region4: #{eigen_mlp_bn_forward.10} parent=1 // loop_header_branch
      %28 = sbr.rel (%p26) target = $region8
    $region5: #{eigen_mlp_bn_forward.10} parent=1 // loop_body
      %s30 = ssub.s32 %s25, 1
      %s31 = ssub.s32 %s25, 2
      %s32 = sadd.s32 %s25, 1
      %s33 = ssub.s32 %s25, %s32
      %p34 = scmp.eq.s32.totalorder %s33, 0
      %s36 = sadd.s32 %s35, 1
      %s37 = scalar_select %p34, %s35, %s36
      %p40 = pneg %p34
      %p41 = scmp.eq.s32.totalorder %s25, 1
      %p42 = por %p40, %p41
      %p43 = scmp.ne.s32.totalorder %s35, %s38
      %p44 = scmp.eq.s32.totalorder %s25, 0
      %p45 = por %p43, %p44
      %p46 = scmp.ne.s32.totalorder %s35, %s38
      %p47 = scmp.eq.s32.totalorder %s30, 1
      %p48 = por %p46, %p47
      %p49 = scmp.ne.s32.totalorder %s38, %s39
      %p50 = scmp.eq.s32.totalorder %s30, 0
      %p51 = por %p49, %p50
      %p52 = scmp.ne.s32.totalorder %s38, %s39
      %p53 = scmp.eq.s32.totalorder %s31, 1
      %p54 = por %p52, %p53
      %p56 = scmp.ne.s32.totalorder %s39, %s55
      %p57 = scmp.eq.s32.totalorder %s31, 0
      %p58 = por %p56, %p57
      %s60 = sadd.s32 %s59, 1
      %p63 = scmp.eq.s32.totalorder %s25, 1
      %p64 = scmp.ne.s32.totalorder %s59, %s61
      %p65 = scmp.eq.s32.totalorder %s25, 0
      %p66 = por %p64, %p65
      %p67 = scmp.ne.s32.totalorder %s59, %s61
      %p68 = scmp.eq.s32.totalorder %s30, 1
      %p69 = por %p67, %p68
      %p70 = scmp.ne.s32.totalorder %s61, %s62
      %p71 = scmp.eq.s32.totalorder %s30, 0
      %p72 = por %p70, %p71
      %p73 = scmp.ne.s32.totalorder %s61, %s62
      %p74 = scmp.eq.s32.totalorder %s31, 1
      %p75 = por %p73, %p74
      %p77 = scmp.ne.s32.totalorder %s62, %s76
      %p78 = scmp.eq.s32.totalorder %s31, 0
      %p79 = por %p77, %p78
      %s81 = sadd.s32 %s80, 1
      %p84 = scmp.eq.s32.totalorder %s25, 1
      %p85 = scmp.ne.s32.totalorder %s80, %s82
      %p86 = scmp.eq.s32.totalorder %s25, 0
      %p87 = por %p85, %p86
      %p88 = scmp.ne.s32.totalorder %s80, %s82
      %p89 = scmp.eq.s32.totalorder %s30, 1
      %p90 = por %p88, %p89
      %p91 = scmp.ne.s32.totalorder %s82, %s83
      %p92 = scmp.eq.s32.totalorder %s30, 0
      %p93 = por %p91, %p92
      %p94 = scmp.ne.s32.totalorder %s82, %s83
      %p95 = scmp.eq.s32.totalorder %s31, 1
      %p96 = por %p94, %p95
      %p98 = scmp.ne.s32.totalorder %s83, %s97
      %p99 = scmp.eq.s32.totalorder %s31, 0
      %p100 = por %p98, %p99
      %s102 = sadd.s32 %s101, 1
      %p105 = scmp.eq.s32.totalorder %s25, 1
      %p106 = scmp.ne.s32.totalorder %s101, %s103
      %p107 = scmp.eq.s32.totalorder %s25, 0
      %p108 = por %p106, %p107
      %p109 = scmp.ne.s32.totalorder %s101, %s103
      %p110 = scmp.eq.s32.totalorder %s30, 1
      %p111 = por %p109, %p110
      %p112 = scmp.ne.s32.totalorder %s103, %s104
      %p113 = scmp.eq.s32.totalorder %s30, 0
      %p114 = por %p112, %p113
      %p115 = scmp.ne.s32.totalorder %s103, %s104
      %p116 = scmp.eq.s32.totalorder %s31, 1
      %p117 = por %p115, %p116
      %p119 = scmp.ne.s32.totalorder %s104, %s118
      %p120 = scmp.eq.s32.totalorder %s31, 0
      %p121 = por %p119, %p120
      %s123 = sadd.s32 %s122, 1
      %p126 = scmp.eq.s32.totalorder %s25, 1
      %p127 = scmp.ne.s32.totalorder %s122, %s124
      %p128 = scmp.eq.s32.totalorder %s25, 0
      %p129 = por %p127, %p128
      %p130 = scmp.ne.s32.totalorder %s122, %s124
      %p131 = scmp.eq.s32.totalorder %s30, 1
      %p132 = por %p130, %p131
      %p133 = scmp.ne.s32.totalorder %s124, %s125
      %p134 = scmp.eq.s32.totalorder %s30, 0
      %p135 = por %p133, %p134
      %p136 = scmp.ne.s32.totalorder %s124, %s125
      %p137 = scmp.eq.s32.totalorder %s31, 1
      %p138 = por %p136, %p137
      %p140 = scmp.ne.s32.totalorder %s125, %s139
      %p141 = scmp.eq.s32.totalorder %s31, 0
      %p142 = por %p140, %p141
      %s143 = ssub.s32 %s25, %s32
      %p144 = scmp.eq.s32.totalorder %s143, 0
      %s146 = sadd.s32 %s145, 1
      %s147 = scalar_select %p144, %s145, %s146
      %p150 = pneg %p144
      %p151 = scmp.eq.s32.totalorder %s25, 1
      %p152 = por %p150, %p151
      %p153 = scmp.ne.s32.totalorder %s145, %s148
      %p154 = scmp.eq.s32.totalorder %s25, 0
      %p155 = por %p153, %p154
      %p156 = scmp.ne.s32.totalorder %s145, %s148
      %p157 = scmp.eq.s32.totalorder %s30, 1
      %p158 = por %p156, %p157
      %p159 = scmp.ne.s32.totalorder %s148, %s149
      %p160 = scmp.eq.s32.totalorder %s30, 0
      %p161 = por %p159, %p160
      %p162 = scmp.ne.s32.totalorder %s148, %s149
      %p163 = scmp.eq.s32.totalorder %s31, 1
      %p164 = por %p162, %p163
      %p166 = scmp.ne.s32.totalorder %s149, %s165
      %p167 = scmp.eq.s32.totalorder %s31, 0
      %p168 = por %p166, %p167
      %s169 = ssub.s32 %s25, %s32
      %p170 = scmp.eq.s32.totalorder %s169, 0
      %s172 = sadd.s32 %s171, 1
      %s173 = scalar_select %p170, %s171, %s172
      %p176 = pneg %p170
      %p177 = scmp.eq.s32.totalorder %s25, 1
      %p178 = por %p176, %p177
      %p179 = scmp.ne.s32.totalorder %s171, %s174
      %p180 = scmp.eq.s32.totalorder %s25, 0
      %p181 = por %p179, %p180
      %p182 = scmp.ne.s32.totalorder %s171, %s174
      %p183 = scmp.eq.s32.totalorder %s30, 1
      %p184 = por %p182, %p183
      %p185 = scmp.ne.s32.totalorder %s174, %s175
      %p186 = scmp.eq.s32.totalorder %s30, 0
      %p187 = por %p185, %p186
      %p188 = scmp.ne.s32.totalorder %s174, %s175
      %p189 = scmp.eq.s32.totalorder %s31, 1
      %p190 = por %p188, %p189
      %p192 = scmp.ne.s32.totalorder %s175, %s191
      %p193 = scmp.eq.s32.totalorder %s31, 0
      %p194 = por %p192, %p193
      %s195 = ssub.s32 %s25, %s32
      %p196 = scmp.eq.s32.totalorder %s195, 0
      %s198 = sadd.s32 %s197, 1
      %s199 = scalar_select %p196, %s197, %s198
      %p202 = pneg %p196
      %p203 = scmp.eq.s32.totalorder %s25, 1
      %p204 = por %p202, %p203
      %p205 = scmp.ne.s32.totalorder %s197, %s200
      %p206 = scmp.eq.s32.totalorder %s25, 0
      %p207 = por %p205, %p206
      %p208 = scmp.ne.s32.totalorder %s197, %s200
      %p209 = scmp.eq.s32.totalorder %s30, 1
      %p210 = por %p208, %p209
      %p211 = scmp.ne.s32.totalorder %s200, %s201
      %p212 = scmp.eq.s32.totalorder %s30, 0
      %p213 = por %p211, %p212
      %p214 = scmp.ne.s32.totalorder %s200, %s201
      %p215 = scmp.eq.s32.totalorder %s31, 1
      %p216 = por %p214, %p215
      %p218 = scmp.ne.s32.totalorder %s201, %s217
      %p219 = scmp.eq.s32.totalorder %s31, 0
      %p220 = por %p218, %p219
      %p221 = scmp.le.s32.totalorder 1, %s25
      %p222 = scmp.lt.s32.totalorder %s25, 3
      %p223 = pnand %p221, %p222
      %p224 = pneg %p223
      // Predicated region
      $region9: #{eigen_mlp_bn_forward.10} parent=5 // pred_check
        _
      $region10: #{eigen_mlp_bn_forward.10} parent=5 // pred_check_branch
        %226 = sbr.rel (%p223) target = $region12
      $region11: #{eigen_mlp_bn_forward.10} parent=5 // pred_region
        %s227 = ssub.s32 %s25, 1
        // Predicated region
        $region13: #{eigen_mlp_bn_forward.10} parent=11 // pred_check
          %p228 = pneg %p72
        $region14: #{eigen_mlp_bn_forward.10} parent=11 // pred_check_branch
          %230 = sbr.rel (%p228) target = $region16
        $region15: #{eigen_mlp_bn_forward.10} parent=11 // pred_region
          %s232 = ssub.s32 16, 16
          %233 = vsyncadd [#allocation6], %s232
          %s235 = sshll.u32 [#allocation5], 4
          %s236 = int_to_ptr.vmem [resolvable:$true] %s235
          %238 = dma.hbm_to_vmem [thread:$0]  %s1, 16, %s236, [#allocation6]
        $region16: #{eigen_mlp_bn_forward.10} parent=11 // pred_fallthru
          _
        // Predicated region
        $region17: #{eigen_mlp_bn_forward.10} parent=11 // pred_check
          %p239 = pneg %p93
        $region18: #{eigen_mlp_bn_forward.10} parent=11 // pred_check_branch
          %241 = sbr.rel (%p239) target = $region20
        $region19: #{eigen_mlp_bn_forward.10} parent=11 // pred_region
          %s243 = ssub.s32 16, 16
          %244 = vsyncadd [#allocation6], %s243
          %s246 = sshll.u32 [#allocation7], 4
          %s247 = int_to_ptr.vmem [resolvable:$true] %s246
          %249 = dma.hbm_to_vmem [thread:$0]  %s2, 16, %s247, [#allocation6]
        $region20: #{eigen_mlp_bn_forward.10} parent=11 // pred_fallthru
          _
        // Predicated region
        $region21: #{eigen_mlp_bn_forward.10} parent=11 // pred_check
          %p250 = pneg %p114
        $region22: #{eigen_mlp_bn_forward.10} parent=11 // pred_check_branch
          %252 = sbr.rel (%p250) target = $region24
        $region23: #{eigen_mlp_bn_forward.10} parent=11 // pred_region
          %s254 = ssub.s32 1024, 1024
          %255 = vsyncadd [#allocation9], %s254
          %s256 = sshll.u32 [#allocation8], 4
          %s257 = int_to_ptr.vmem [resolvable:$true] %s256
          %262 = dma.hbm_to_vmem [thread:$0]  %s3, 1024, %s257, [#allocation9], 64, 64, 4
        $region24: #{eigen_mlp_bn_forward.10} parent=11 // pred_fallthru
          _
        // Predicated region
        $region25: #{eigen_mlp_bn_forward.10} parent=11 // pred_check
          %p263 = pneg %p135
        $region26: #{eigen_mlp_bn_forward.10} parent=11 // pred_check_branch
          %265 = sbr.rel (%p263) target = $region28
        $region27: #{eigen_mlp_bn_forward.10} parent=11 // pred_region
          %s267 = ssub.s32 16, 16
          %268 = vsyncadd [#allocation9], %s267
          %s270 = sshll.u32 [#allocation10], 4
          %s271 = int_to_ptr.vmem [resolvable:$true] %s270
          %273 = dma.hbm_to_vmem [thread:$0]  %s4, 16, %s271, [#allocation9]
        $region28: #{eigen_mlp_bn_forward.10} parent=11 // pred_fallthru
          _
      $region12: #{eigen_mlp_bn_forward.10} parent=5 // pred_fallthru
        _
      %p274 = scmp.lt.s32.totalorder %s25, 2
      // Predicated region
      $region29: #{eigen_mlp_bn_forward.10} parent=5 // pred_check
        %p275 = pneg %p274
      $region30: #{eigen_mlp_bn_forward.10} parent=5 // pred_check_branch
        %277 = sbr.rel (%p275) target = $region32
      $region31: #{eigen_mlp_bn_forward.10} parent=5 // pred_region
        // Predicated region
        $region33: #{eigen_mlp_bn_forward.10} parent=31 // pred_check
          %p278 = pneg %p45
        $region34: #{eigen_mlp_bn_forward.10} parent=31 // pred_check_branch
          %280 = sbr.rel (%p278) target = $region36
        $region35: #{eigen_mlp_bn_forward.10} parent=31 // pred_region
          %s281 = sand.u32 %s35, 1
          %s282 = scalar_lea.sflag [#allocation3], %s281
          %s283 = sand.u32 %s35, 1
          %s284 = smul.addr %s283, 256
          %s285 = scalar_lea.vmem [#allocation2], %s284
          %s286 = smul.u32 32, %s25
          %s288 = ssub.s32 4096, 4096
          %289 = vsyncadd %s282, %s288
          %s290 = smul.addr %s286, 128
          %s291 = scalar_lea.hbm %s0, %s290
          %s292 = sshll.u32 %s285, 4
          %s293 = int_to_ptr.vmem [resolvable:$true] %s292
          %298 = dma.hbm_to_vmem [thread:$0]  %s291, 4096, %s293, %s282, 128, 128, 8
        $region36: #{eigen_mlp_bn_forward.10} parent=31 // pred_fallthru
          _
      $region32: #{eigen_mlp_bn_forward.10} parent=5 // pred_fallthru
        _
      %p299 = scmp.le.s32.totalorder 1, %s25
      %p300 = scmp.lt.s32.totalorder %s25, 3
      %p301 = pnand %p299, %p300
      %p302 = pneg %p301
      // Predicated region
      $region37: #{eigen_mlp_bn_forward.10} parent=5 // pred_check
        _
      $region38: #{eigen_mlp_bn_forward.10} parent=5 // pred_check_branch
        %304 = sbr.rel (%p301) target = $region40
      $region39: #{eigen_mlp_bn_forward.10} parent=5 // pred_region
        %s305 = ssub.s32 %s25, 1
        %s306 = sand.u32 %s38, 1
        %s307 = scalar_lea.sflag [#allocation3], %s306
        %s308 = sand.u32 %s38, 1
        %s309 = smul.addr %s308, 256
        %s310 = scalar_lea.vmem [#allocation2], %s309
        // Predicated region
        $region41: #{eigen_mlp_bn_forward.10} parent=39 // pred_check
          %p311 = pneg %p51
        $region42: #{eigen_mlp_bn_forward.10} parent=39 // pred_check_branch
          %313 = sbr.rel (%p311) target = $region44
        $region43: #{eigen_mlp_bn_forward.10} parent=39 // pred_region
          %314 = dma.done %s307, 4096
        $region44: #{eigen_mlp_bn_forward.10} parent=39 // pred_fallthru
          _
        // Predicated region
        $region45: #{eigen_mlp_bn_forward.10} parent=39 // pred_check
          %p315 = pneg %p72
        $region46: #{eigen_mlp_bn_forward.10} parent=39 // pred_check_branch
          %317 = sbr.rel (%p315) target = $region48
        $region47: #{eigen_mlp_bn_forward.10} parent=39 // pred_region
          %318 = dma.done [#allocation6], 16
        $region48: #{eigen_mlp_bn_forward.10} parent=39 // pred_fallthru
          _
        // Predicated region
        $region49: #{eigen_mlp_bn_forward.10} parent=39 // pred_check
          %p319 = pneg %p93
        $region50: #{eigen_mlp_bn_forward.10} parent=39 // pred_check_branch
          %321 = sbr.rel (%p319) target = $region52
        $region51: #{eigen_mlp_bn_forward.10} parent=39 // pred_region
          %322 = dma.done [#allocation6], 16
        $region52: #{eigen_mlp_bn_forward.10} parent=39 // pred_fallthru
          _
        // Predicated region
        $region53: #{eigen_mlp_bn_forward.10} parent=39 // pred_check
          %p323 = pneg %p114
        $region54: #{eigen_mlp_bn_forward.10} parent=39 // pred_check_branch
          %325 = sbr.rel (%p323) target = $region56
        $region55: #{eigen_mlp_bn_forward.10} parent=39 // pred_region
          %326 = dma.done [#allocation9], 1024
        $region56: #{eigen_mlp_bn_forward.10} parent=39 // pred_fallthru
          _
        // Predicated region
        $region57: #{eigen_mlp_bn_forward.10} parent=39 // pred_check
          %p327 = pneg %p135
        $region58: #{eigen_mlp_bn_forward.10} parent=39 // pred_check_branch
          %329 = sbr.rel (%p327) target = $region60
        $region59: #{eigen_mlp_bn_forward.10} parent=39 // pred_region
          %330 = dma.done [#allocation9], 16
        $region60: #{eigen_mlp_bn_forward.10} parent=39 // pred_fallthru
          _
        %s331 = sand.u32 %s38, 1
        %s332 = scalar_lea.sflag [#allocation3], %s331
        %s333 = sand.u32 %s38, 1
        %s334 = smul.addr %s333, 256
        %s335 = scalar_lea.vmem [#allocation2], %s334
        %p336 = pneg %p51
        %p337 = pneg %p48
        %p338 = pneg %p72
        %p339 = pneg %p69
        %p340 = pneg %p93
        %p341 = pneg %p90
        %p342 = pneg %p114
        %p343 = pneg %p111
        %p344 = pneg %p135
        %p345 = pneg %p132
        %p346 = pneg %p161
        %p347 = pneg %p158
        %s348 = sand.u32 %s148, 1
        %s349 = scalar_lea.sflag [#allocation4], %s348
        %s350 = sand.u32 %s148, 1
        %s351 = smul.addr %s350, 256
        %s352 = scalar_lea.vmem [#allocation11], %s351
        %p353 = pneg %p187
        %p354 = pneg %p184
        %s355 = sand.u32 %s30, 1
        %s356 = scalar_lea.sflag [#allocation13], %s355
        %s357 = sand.u32 %s174, 1
        %s358 = scalar_lea.vmem [#allocation12], %s357
        %p359 = pneg %p213
        %p360 = pneg %p210
        %s361 = sand.u32 %s30, 1
        %s362 = scalar_lea.sflag [#allocation13], %s361
        %s363 = sand.u32 %s200, 1
        %s364 = scalar_lea.vmem [#allocation14], %s363
        %s365 = smul.u32 32, %s30
        %s366 = smul.u32 32, %s30
        %v368 = vld [vmem:[%s310] sm:$0xff]
        %v369 = vld [vmem:[%s310 + $0x8] sm:$0xff]
        %v370 = vld [vmem:[%s310 + $0x10] sm:$0xff]
        %v371 = vld [vmem:[%s310 + $0x18] sm:$0xff]
        %v372 = vld [vmem:[%s310 + $0x20] sm:$0xff]
        %v373 = vld [vmem:[%s310 + $0x28] sm:$0xff]
        %v374 = vld [vmem:[%s310 + $0x30] sm:$0xff]
        %v375 = vld [vmem:[%s310 + $0x38] sm:$0xff]
        %v376 = vld [vmem:[%s310 + $0x40] sm:$0xff]
        %v377 = vld [vmem:[%s310 + $0x48] sm:$0xff]
        %v378 = vld [vmem:[%s310 + $0x50] sm:$0xff]
        %v379 = vld [vmem:[%s310 + $0x58] sm:$0xff]
        %v380 = vld [vmem:[%s310 + $0x60] sm:$0xff]
        %v381 = vld [vmem:[%s310 + $0x68] sm:$0xff]
        %v382 = vld [vmem:[%s310 + $0x70] sm:$0xff]
        %v383 = vld [vmem:[%s310 + $0x78] sm:$0xff]
        %v384 = vld [vmem:[%s310 + $0x80] sm:$0xff]
        %v385 = vld [vmem:[%s310 + $0x88] sm:$0xff]
        %v386 = vld [vmem:[%s310 + $0x90] sm:$0xff]
        %v387 = vld [vmem:[%s310 + $0x98] sm:$0xff]
        %v388 = vld [vmem:[%s310 + $0xa0] sm:$0xff]
        %v389 = vld [vmem:[%s310 + $0xa8] sm:$0xff]
        %v390 = vld [vmem:[%s310 + $0xb0] sm:$0xff]
        %v391 = vld [vmem:[%s310 + $0xb8] sm:$0xff]
        %v392 = vld [vmem:[%s310 + $0xc0] sm:$0xff]
        %v393 = vld [vmem:[%s310 + $0xc8] sm:$0xff]
        %v394 = vld [vmem:[%s310 + $0xd0] sm:$0xff]
        %v395 = vld [vmem:[%s310 + $0xd8] sm:$0xff]
        %v396 = vld [vmem:[%s310 + $0xe0] sm:$0xff]
        %v397 = vld [vmem:[%s310 + $0xe8] sm:$0xff]
        %v398 = vld [vmem:[%s310 + $0xf0] sm:$0xff]
        %v399 = vld [vmem:[%s310 + $0xf8] sm:$0xff]
        %v400 = vld [vmem:[#allocation5] sm:$0x1]
        %v402 = vlaneseq
        %v403 = vshrl.u32 %v402, 7
        %v404 = vsub.s32 0, %v403
        %v405 = vrot.slane %v400, %v404
        %v407 = vmul.f32 %v368, %v405
        %v408 = vmul.f32 %v369, %v405
        %v409 = vmul.f32 %v370, %v405
        %v410 = vmul.f32 %v371, %v405
        %v411 = vmul.f32 %v372, %v405
        %v412 = vmul.f32 %v373, %v405
        %v413 = vmul.f32 %v374, %v405
        %v414 = vmul.f32 %v375, %v405
        %v415 = vmul.f32 %v376, %v405
        %v416 = vmul.f32 %v377, %v405
        %v417 = vmul.f32 %v378, %v405
        %v418 = vmul.f32 %v379, %v405
        %v419 = vmul.f32 %v380, %v405
        %v420 = vmul.f32 %v381, %v405
        %v421 = vmul.f32 %v382, %v405
        %v422 = vmul.f32 %v383, %v405
        %v423 = vmul.f32 %v384, %v405
        %v424 = vmul.f32 %v385, %v405
        %v425 = vmul.f32 %v386, %v405
        %v426 = vmul.f32 %v387, %v405
        %v427 = vmul.f32 %v388, %v405
        %v428 = vmul.f32 %v389, %v405
        %v429 = vmul.f32 %v390, %v405
        %v430 = vmul.f32 %v391, %v405
        %v431 = vmul.f32 %v392, %v405
        %v432 = vmul.f32 %v393, %v405
        %v433 = vmul.f32 %v394, %v405
        %v434 = vmul.f32 %v395, %v405
        %v435 = vmul.f32 %v396, %v405
        %v436 = vmul.f32 %v397, %v405
        %v437 = vmul.f32 %v398, %v405
        %v438 = vmul.f32 %v399, %v405
        %v439 = vld [vmem:[#allocation7] sm:$0x1]
        %v441 = vlaneseq
        %v442 = vshrl.u32 %v441, 7
        %v443 = vsub.s32 0, %v442
        %v444 = vrot.slane %v439, %v443
        %v446 = vadd.f32 %v407, %v444
        %v447 = vadd.f32 %v408, %v444
        %v448 = vadd.f32 %v409, %v444
        %v449 = vadd.f32 %v410, %v444
        %v450 = vadd.f32 %v411, %v444
        %v451 = vadd.f32 %v412, %v444
        %v452 = vadd.f32 %v413, %v444
        %v453 = vadd.f32 %v414, %v444
        %v454 = vadd.f32 %v415, %v444
        %v455 = vadd.f32 %v416, %v444
        %v456 = vadd.f32 %v417, %v444
        %v457 = vadd.f32 %v418, %v444
        %v458 = vadd.f32 %v419, %v444
        %v459 = vadd.f32 %v420, %v444
        %v460 = vadd.f32 %v421, %v444
        %v461 = vadd.f32 %v422, %v444
        %v462 = vadd.f32 %v423, %v444
        %v463 = vadd.f32 %v424, %v444
        %v464 = vadd.f32 %v425, %v444
        %v465 = vadd.f32 %v426, %v444
        %v466 = vadd.f32 %v427, %v444
        %v467 = vadd.f32 %v428, %v444
        %v468 = vadd.f32 %v429, %v444
        %v469 = vadd.f32 %v430, %v444
        %v470 = vadd.f32 %v431, %v444
        %v471 = vadd.f32 %v432, %v444
        %v472 = vadd.f32 %v433, %v444
        %v473 = vadd.f32 %v434, %v444
        %v474 = vadd.f32 %v435, %v444
        %v475 = vadd.f32 %v436, %v444
        %v476 = vadd.f32 %v437, %v444
        %v477 = vadd.f32 %v438, %v444
        %v478 = vmax.f32 %v446, 0.0
        %v479 = vmax.f32 %v447, 0.0
        %v480 = vmax.f32 %v448, 0.0
        %v481 = vmax.f32 %v449, 0.0
        %v482 = vmax.f32 %v450, 0.0
        %v483 = vmax.f32 %v451, 0.0
        %v484 = vmax.f32 %v452, 0.0
        %v485 = vmax.f32 %v453, 0.0
        %v486 = vmax.f32 %v454, 0.0
        %v487 = vmax.f32 %v455, 0.0
        %v488 = vmax.f32 %v456, 0.0
        %v489 = vmax.f32 %v457, 0.0
        %v490 = vmax.f32 %v458, 0.0
        %v491 = vmax.f32 %v459, 0.0
        %v492 = vmax.f32 %v460, 0.0
        %v493 = vmax.f32 %v461, 0.0
        %v494 = vmax.f32 %v462, 0.0
        %v495 = vmax.f32 %v463, 0.0
        %v496 = vmax.f32 %v464, 0.0
        %v497 = vmax.f32 %v465, 0.0
        %v498 = vmax.f32 %v466, 0.0
        %v499 = vmax.f32 %v467, 0.0
        %v500 = vmax.f32 %v468, 0.0
        %v501 = vmax.f32 %v469, 0.0
        %v502 = vmax.f32 %v470, 0.0
        %v503 = vmax.f32 %v471, 0.0
        %v504 = vmax.f32 %v472, 0.0
        %v505 = vmax.f32 %v473, 0.0
        %v506 = vmax.f32 %v474, 0.0
        %v507 = vmax.f32 %v475, 0.0
        %v508 = vmax.f32 %v476, 0.0
        %v509 = vmax.f32 %v477, 0.0
        %v510 = vpack.c.bf16 %v479, %v478
        %v511 = vpack.c.bf16 %v481, %v480
        %v512 = vpack.c.bf16 %v483, %v482
        %v513 = vpack.c.bf16 %v485, %v484
        %v514 = vpack.c.bf16 %v487, %v486
        %v515 = vpack.c.bf16 %v489, %v488
        %v516 = vpack.c.bf16 %v491, %v490
        %v517 = vpack.c.bf16 %v493, %v492
        %v518 = vpack.c.bf16 %v495, %v494
        %v519 = vpack.c.bf16 %v497, %v496
        %v520 = vpack.c.bf16 %v499, %v498
        %v521 = vpack.c.bf16 %v501, %v500
        %v522 = vpack.c.bf16 %v503, %v502
        %v523 = vpack.c.bf16 %v505, %v504
        %v524 = vpack.c.bf16 %v507, %v506
        %v525 = vpack.c.bf16 %v509, %v508
        %v526 = vld [vmem:[#allocation8] sm:$0xf]
        %v527 = vld [vmem:[#allocation8 + $0x4] sm:$0xf]
        %v528 = vld [vmem:[#allocation8 + $0x8] sm:$0xf]
        %v529 = vld [vmem:[#allocation8 + $0xc] sm:$0xf]
        %v530 = vld [vmem:[#allocation8 + $0x10] sm:$0xf]
        %v531 = vld [vmem:[#allocation8 + $0x14] sm:$0xf]
        %v532 = vld [vmem:[#allocation8 + $0x18] sm:$0xf]
        %v533 = vld [vmem:[#allocation8 + $0x1c] sm:$0xf]
        %v534 = vld [vmem:[#allocation8 + $0x20] sm:$0xf]
        %v535 = vld [vmem:[#allocation8 + $0x24] sm:$0xf]
        %v536 = vld [vmem:[#allocation8 + $0x28] sm:$0xf]
        %v537 = vld [vmem:[#allocation8 + $0x2c] sm:$0xf]
        %v538 = vld [vmem:[#allocation8 + $0x30] sm:$0xf]
        %v539 = vld [vmem:[#allocation8 + $0x34] sm:$0xf]
        %v540 = vld [vmem:[#allocation8 + $0x38] sm:$0xf]
        %v541 = vld [vmem:[#allocation8 + $0x3c] sm:$0xf]
        %v542 = vld [vmem:[#allocation10] sm:$0x1]
        %v544 = vlaneseq
        %v545 = vshrl.u32 %v544, 7
        %v546 = vsub.s32 0, %v545
        %v547 = vrot.slane %v542, %v546
        %v565 = vunpack.c.l.b16 %v526
        %v566 = vunpack.c.l.b16 %v527
        %v567 = vunpack.c.l.b16 %v528
        %v568 = vunpack.c.l.b16 %v529
        %v569 = vunpack.c.l.b16 %v530
        %v570 = vunpack.c.l.b16 %v531
        %v571 = vunpack.c.l.b16 %v532
        %v572 = vunpack.c.l.b16 %v533
        %v573 = vunpack.c.l.b16 %v534
        %v574 = vunpack.c.l.b16 %v535
        %v575 = vunpack.c.l.b16 %v536
        %v576 = vunpack.c.l.b16 %v537
        %v577 = vunpack.c.l.b16 %v538
        %v578 = vunpack.c.l.b16 %v539
        %v579 = vunpack.c.l.b16 %v540
        %v580 = vunpack.c.l.b16 %v541
        %v581 = vpack.c.b16 %v566, %v565
        %v582 = vpack.c.b16 %v568, %v567
        %v583 = vpack.c.b16 %v570, %v569
        %v584 = vpack.c.b16 %v572, %v571
        %v585 = vpack.c.b16 %v574, %v573
        %v586 = vpack.c.b16 %v576, %v575
        %v587 = vpack.c.b16 %v578, %v577
        %v588 = vpack.c.b16 %v580, %v579
        %597 = vmatprep.subr.bf16.mxu0 0
        %598 = vmatpush1.bf16.msra.mxu0 %v581
        %599 = vmatprep.subr.bf16.mxu0 0
        %600 = vmatpush1.bf16.msra.mxu0 %v582
        %601 = vmatprep.subr.bf16.mxu0 0
        %602 = vmatpush1.bf16.msra.mxu0 %v583
        %603 = vmatprep.subr.bf16.mxu0 0
        %604 = vmatpush1.bf16.msra.mxu0 %v584
        %605 = vmatprep.subr.bf16.mxu0 0
        %606 = vmatpush1.bf16.msra.mxu0 %v585
        %607 = vmatprep.subr.bf16.mxu0 0
        %608 = vmatpush1.bf16.msra.mxu0 %v586
        %609 = vmatprep.subr.bf16.mxu0 0
        %610 = vmatpush1.bf16.msra.mxu0 %v587
        %611 = vmatprep.subr.bf16.mxu0 0
        %612 = vmatpush1.bf16.msra.mxu0 %v588
        %613 = vmatprep.subr.bf16.mxu0 0
        %614 = vmatpush1.bf16.msra.mxu0 0
        %615 = vmatprep.subr.bf16.mxu0 0
        %616 = vmatpush1.bf16.msra.mxu0 0
        %617 = vmatprep.subr.bf16.mxu0 0
        %618 = vmatpush1.bf16.msra.mxu0 0
        %619 = vmatprep.subr.bf16.mxu0 0
        %620 = vmatpush1.bf16.msra.mxu0 0
        %621 = vmatprep.subr.bf16.mxu0 0
        %622 = vmatpush1.bf16.msra.mxu0 0
        %623 = vmatprep.subr.bf16.mxu0 0
        %624 = vmatpush1.bf16.msra.mxu0 0
        %625 = vmatprep.subr.bf16.mxu0 0
        %626 = vmatpush1.bf16.msra.mxu0 0
        %627 = vmatprep.subr.bf16.mxu0 0
        %628 = vmatpush1.bf16.msra.mxu0 0
        %629 = vmatprep.mubr.bf16.mxu0 0
        %630 = vmatmul.mubr.bf16.gmra.mrb[0].mxu0 %v510
        %v631 = vpop.f32.mrb[0].mxu0
        %v632 = vadd.f32 %v547, %v631
        %v633 = vpop.f32.mrb[0].mxu0
        %v634 = vpop.f32.mrb[0].mxu0
        %v635 = vadd.f32 %v547, %v634
        %v636 = vpop.f32.mrb[0].mxu0
        %637 = vmatprep.mubr.bf16.mxu0 0
        %638 = vmatmul.mubr.bf16.gmra.mrb[0].mxu0 %v511
        %v639 = vpop.f32.mrb[0].mxu0
        %v640 = vadd.f32 %v547, %v639
        %v641 = vpop.f32.mrb[0].mxu0
        %v642 = vpop.f32.mrb[0].mxu0
        %v643 = vadd.f32 %v547, %v642
        %v644 = vpop.f32.mrb[0].mxu0
        %645 = vmatprep.mubr.bf16.mxu0 0
        %646 = vmatmul.mubr.bf16.gmra.mrb[0].mxu0 %v512
        %v647 = vpop.f32.mrb[0].mxu0
        %v648 = vadd.f32 %v547, %v647
        %v649 = vpop.f32.mrb[0].mxu0
        %v650 = vpop.f32.mrb[0].mxu0
        %v651 = vadd.f32 %v547, %v650
        %v652 = vpop.f32.mrb[0].mxu0
        %653 = vmatprep.mubr.bf16.mxu0 0
        %654 = vmatmul.mubr.bf16.gmra.mrb[0].mxu0 %v513
        %v655 = vpop.f32.mrb[0].mxu0
        %v656 = vadd.f32 %v547, %v655
        %v657 = vpop.f32.mrb[0].mxu0
        %v658 = vpop.f32.mrb[0].mxu0
        %v659 = vadd.f32 %v547, %v658
        %v660 = vpop.f32.mrb[0].mxu0
        %661 = vmatprep.mubr.bf16.mxu0 0
        %662 = vmatmul.mubr.bf16.gmra.mrb[0].mxu0 %v514
        %v663 = vpop.f32.mrb[0].mxu0
        %v664 = vadd.f32 %v547, %v663
        %v665 = vpop.f32.mrb[0].mxu0
        %v666 = vpop.f32.mrb[0].mxu0
        %v667 = vadd.f32 %v547, %v666
        %v668 = vpop.f32.mrb[0].mxu0
        %669 = vmatprep.mubr.bf16.mxu0 0
        %670 = vmatmul.mubr.bf16.gmra.mrb[0].mxu0 %v515
        %v671 = vpop.f32.mrb[0].mxu0
        %v672 = vadd.f32 %v547, %v671
        %v673 = vpop.f32.mrb[0].mxu0
        %v674 = vpop.f32.mrb[0].mxu0
        %v675 = vadd.f32 %v547, %v674
        %v676 = vpop.f32.mrb[0].mxu0
        %677 = vmatprep.mubr.bf16.mxu0 0
        %678 = vmatmul.mubr.bf16.gmra.mrb[0].mxu0 %v516
        %v679 = vpop.f32.mrb[0].mxu0
        %v680 = vadd.f32 %v547, %v679
        %v681 = vpop.f32.mrb[0].mxu0
        %v682 = vpop.f32.mrb[0].mxu0
        %v683 = vadd.f32 %v547, %v682
        %v684 = vpop.f32.mrb[0].mxu0
        %685 = vmatprep.mubr.bf16.mxu0 0
        %686 = vmatmul.mubr.bf16.gmra.mrb[0].mxu0 %v517
        %v687 = vpop.f32.mrb[0].mxu0
        %v688 = vadd.f32 %v547, %v687
        %v689 = vpop.f32.mrb[0].mxu0
        %v690 = vpop.f32.mrb[0].mxu0
        %v691 = vadd.f32 %v547, %v690
        %v692 = vpop.f32.mrb[0].mxu0
        %693 = vmatprep.mubr.bf16.mxu0 0
        %694 = vmatmul.mubr.bf16.gmra.mrb[0].mxu0 %v518
        %v695 = vpop.f32.mrb[0].mxu0
        %v696 = vadd.f32 %v547, %v695
        %v697 = vpop.f32.mrb[0].mxu0
        %v698 = vpop.f32.mrb[0].mxu0
        %v699 = vadd.f32 %v547, %v698
        %v700 = vpop.f32.mrb[0].mxu0
        %701 = vmatprep.mubr.bf16.mxu0 0
        %702 = vmatmul.mubr.bf16.gmra.mrb[0].mxu0 %v519
        %v703 = vpop.f32.mrb[0].mxu0
        %v704 = vadd.f32 %v547, %v703
        %v705 = vpop.f32.mrb[0].mxu0
        %v706 = vpop.f32.mrb[0].mxu0
        %v707 = vadd.f32 %v547, %v706
        %v708 = vpop.f32.mrb[0].mxu0
        %709 = vmatprep.mubr.bf16.mxu0 0
        %710 = vmatmul.mubr.bf16.gmra.mrb[0].mxu0 %v520
        %v711 = vpop.f32.mrb[0].mxu0
        %v712 = vadd.f32 %v547, %v711
        %v713 = vpop.f32.mrb[0].mxu0
        %v714 = vpop.f32.mrb[0].mxu0
        %v715 = vadd.f32 %v547, %v714
        %v716 = vpop.f32.mrb[0].mxu0
        %717 = vmatprep.mubr.bf16.mxu0 0
        %718 = vmatmul.mubr.bf16.gmra.mrb[0].mxu0 %v521
        %v719 = vpop.f32.mrb[0].mxu0
        %v720 = vadd.f32 %v547, %v719
        %v721 = vpop.f32.mrb[0].mxu0
        %v722 = vpop.f32.mrb[0].mxu0
        %v723 = vadd.f32 %v547, %v722
        %v724 = vpop.f32.mrb[0].mxu0
        %725 = vmatprep.mubr.bf16.mxu0 0
        %726 = vmatmul.mubr.bf16.gmra.mrb[0].mxu0 %v522
        %v727 = vpop.f32.mrb[0].mxu0
        %v728 = vadd.f32 %v547, %v727
        %v729 = vpop.f32.mrb[0].mxu0
        %v730 = vpop.f32.mrb[0].mxu0
        %v731 = vadd.f32 %v547, %v730
        %v732 = vpop.f32.mrb[0].mxu0
        %733 = vmatprep.mubr.bf16.mxu0 0
        %734 = vmatmul.mubr.bf16.gmra.mrb[0].mxu0 %v523
        %v735 = vpop.f32.mrb[0].mxu0
        %v736 = vadd.f32 %v547, %v735
        %v737 = vpop.f32.mrb[0].mxu0
        %v738 = vpop.f32.mrb[0].mxu0
        %v739 = vadd.f32 %v547, %v738
        %v740 = vpop.f32.mrb[0].mxu0
        %741 = vmatprep.mubr.bf16.mxu0 0
        %742 = vmatmul.mubr.bf16.gmra.mrb[0].mxu0 %v524
        %v743 = vpop.f32.mrb[0].mxu0
        %v744 = vadd.f32 %v547, %v743
        %v745 = vpop.f32.mrb[0].mxu0
        %v746 = vpop.f32.mrb[0].mxu0
        %v747 = vadd.f32 %v547, %v746
        %v748 = vpop.f32.mrb[0].mxu0
        %749 = vmatprep.mubr.bf16.mxu0 0
        %750 = vmatmul.mubr.bf16.gmra.mrb[0].mxu0 %v525
        %v751 = vpop.f32.mrb[0].mxu0
        %v752 = vadd.f32 %v547, %v751
        %v753 = vpop.f32.mrb[0].mxu0
        %v754 = vpop.f32.mrb[0].mxu0
        %v755 = vadd.f32 %v547, %v754
        %v756 = vpop.f32.mrb[0].mxu0
        %757 = vdwg.mxu0
        %758 = vst [vmem:[%s352] sm:$0xff] %v632
        %759 = vst [vmem:[%s352 + $0x8] sm:$0xff] %v635
        %760 = vst [vmem:[%s352 + $0x10] sm:$0xff] %v640
        %761 = vst [vmem:[%s352 + $0x18] sm:$0xff] %v643
        %762 = vst [vmem:[%s352 + $0x20] sm:$0xff] %v648
        %763 = vst [vmem:[%s352 + $0x28] sm:$0xff] %v651
        %764 = vst [vmem:[%s352 + $0x30] sm:$0xff] %v656
        %765 = vst [vmem:[%s352 + $0x38] sm:$0xff] %v659
        %766 = vst [vmem:[%s352 + $0x40] sm:$0xff] %v664
        %767 = vst [vmem:[%s352 + $0x48] sm:$0xff] %v667
        %768 = vst [vmem:[%s352 + $0x50] sm:$0xff] %v672
        %769 = vst [vmem:[%s352 + $0x58] sm:$0xff] %v675
        %770 = vst [vmem:[%s352 + $0x60] sm:$0xff] %v680
        %771 = vst [vmem:[%s352 + $0x68] sm:$0xff] %v683
        %772 = vst [vmem:[%s352 + $0x70] sm:$0xff] %v688
        %773 = vst [vmem:[%s352 + $0x78] sm:$0xff] %v691
        %774 = vst [vmem:[%s352 + $0x80] sm:$0xff] %v696
        %775 = vst [vmem:[%s352 + $0x88] sm:$0xff] %v699
        %776 = vst [vmem:[%s352 + $0x90] sm:$0xff] %v704
        %777 = vst [vmem:[%s352 + $0x98] sm:$0xff] %v707
        %778 = vst [vmem:[%s352 + $0xa0] sm:$0xff] %v712
        %779 = vst [vmem:[%s352 + $0xa8] sm:$0xff] %v715
        %780 = vst [vmem:[%s352 + $0xb0] sm:$0xff] %v720
        %781 = vst [vmem:[%s352 + $0xb8] sm:$0xff] %v723
        %782 = vst [vmem:[%s352 + $0xc0] sm:$0xff] %v728
        %783 = vst [vmem:[%s352 + $0xc8] sm:$0xff] %v731
        %784 = vst [vmem:[%s352 + $0xd0] sm:$0xff] %v736
        %785 = vst [vmem:[%s352 + $0xd8] sm:$0xff] %v739
        %786 = vst [vmem:[%s352 + $0xe0] sm:$0xff] %v744
        %787 = vst [vmem:[%s352 + $0xe8] sm:$0xff] %v747
        %788 = vst [vmem:[%s352 + $0xf0] sm:$0xff] %v752
        %789 = vst [vmem:[%s352 + $0xf8] sm:$0xff] %v755
        %v790 = vlaneseq
        %v791 = vshrl.u32 %v790, 7
        %v792 = vadd.s32 %v791, 8
        %v793 = vadd.s32 %v791, 16
        %v794 = vadd.s32 %v791, 24
        %v795 = vadd.s32 %v791, 32
        %v796 = vadd.s32 %v791, 40
        %v797 = vadd.s32 %v791, 48
        %v798 = vadd.s32 %v791, 56
        %v799 = vadd.s32 %v791, 64
        %v800 = vadd.s32 %v791, 72
        %v801 = vadd.s32 %v791, 80
        %v802 = vadd.s32 %v791, 88
        %v803 = vadd.s32 %v791, 96
        %v804 = vadd.s32 %v791, 104
        %v805 = vadd.s32 %v791, 112
        %v806 = vadd.s32 %v791, 120
        %v807 = vadd.s32 %v791, 128
        %v808 = vadd.s32 %v791, 136
        %v809 = vadd.s32 %v791, 144
        %v810 = vadd.s32 %v791, 152
        %v811 = vadd.s32 %v791, 160
        %v812 = vadd.s32 %v791, 168
        %v813 = vadd.s32 %v791, 176
        %v814 = vadd.s32 %v791, 184
        %v815 = vadd.s32 %v791, 192
        %v816 = vadd.s32 %v791, 200
        %v817 = vadd.s32 %v791, 208
        %v818 = vadd.s32 %v791, 216
        %v819 = vadd.s32 %v791, 224
        %v820 = vadd.s32 %v791, 232
        %v821 = vadd.s32 %v791, 240
        %v822 = vadd.s32 %v791, 248
        %s823 = smul.u32 %s30, 256
        %v824 = vstv %s823
        %v825 = vadd.s32 %v791, %v824
        %v826 = vadd.s32 %v792, %v824
        %v827 = vadd.s32 %v793, %v824
        %v828 = vadd.s32 %v794, %v824
        %v829 = vadd.s32 %v795, %v824
        %v830 = vadd.s32 %v796, %v824
        %v831 = vadd.s32 %v797, %v824
        %v832 = vadd.s32 %v798, %v824
        %v833 = vadd.s32 %v799, %v824
        %v834 = vadd.s32 %v800, %v824
        %v835 = vadd.s32 %v801, %v824
        %v836 = vadd.s32 %v802, %v824
        %v837 = vadd.s32 %v803, %v824
        %v838 = vadd.s32 %v804, %v824
        %v839 = vadd.s32 %v805, %v824
        %v840 = vadd.s32 %v806, %v824
        %v841 = vadd.s32 %v807, %v824
        %v842 = vadd.s32 %v808, %v824
        %v843 = vadd.s32 %v809, %v824
        %v844 = vadd.s32 %v810, %v824
        %v845 = vadd.s32 %v811, %v824
        %v846 = vadd.s32 %v812, %v824
        %v847 = vadd.s32 %v813, %v824
        %v848 = vadd.s32 %v814, %v824
        %v849 = vadd.s32 %v815, %v824
        %v850 = vadd.s32 %v816, %v824
        %v851 = vadd.s32 %v817, %v824
        %v852 = vadd.s32 %v818, %v824
        %v853 = vadd.s32 %v819, %v824
        %v854 = vadd.s32 %v820, %v824
        %v855 = vadd.s32 %v821, %v824
        %v856 = vadd.s32 %v822, %v824
        %vm857 = vcmp.lt.s32.totalorder %v825, 300
        %vm858 = vcmp.lt.s32.totalorder %v826, 300
        %vm859 = vcmp.lt.s32.totalorder %v827, 300
        %vm860 = vcmp.lt.s32.totalorder %v828, 300
        %vm861 = vcmp.lt.s32.totalorder %v829, 300
        %vm862 = vcmp.lt.s32.totalorder %v830, 300
        %vm863 = vcmp.lt.s32.totalorder %v831, 300
        %vm864 = vcmp.lt.s32.totalorder %v832, 300
        %vm865 = vcmp.lt.s32.totalorder %v833, 300
        %vm866 = vcmp.lt.s32.totalorder %v834, 300
        %vm867 = vcmp.lt.s32.totalorder %v835, 300
        %vm868 = vcmp.lt.s32.totalorder %v836, 300
        %vm869 = vcmp.lt.s32.totalorder %v837, 300
        %vm870 = vcmp.lt.s32.totalorder %v838, 300
        %vm871 = vcmp.lt.s32.totalorder %v839, 300
        %vm872 = vcmp.lt.s32.totalorder %v840, 300
        %vm873 = vcmp.lt.s32.totalorder %v841, 300
        %vm874 = vcmp.lt.s32.totalorder %v842, 300
        %vm875 = vcmp.lt.s32.totalorder %v843, 300
        %vm876 = vcmp.lt.s32.totalorder %v844, 300
        %vm877 = vcmp.lt.s32.totalorder %v845, 300
        %vm878 = vcmp.lt.s32.totalorder %v846, 300
        %vm879 = vcmp.lt.s32.totalorder %v847, 300
        %vm880 = vcmp.lt.s32.totalorder %v848, 300
        %vm881 = vcmp.lt.s32.totalorder %v849, 300
        %vm882 = vcmp.lt.s32.totalorder %v850, 300
        %vm883 = vcmp.lt.s32.totalorder %v851, 300
        %vm884 = vcmp.lt.s32.totalorder %v852, 300
        %vm885 = vcmp.lt.s32.totalorder %v853, 300
        %vm886 = vcmp.lt.s32.totalorder %v854, 300
        %vm887 = vcmp.lt.s32.totalorder %v855, 300
        %vm888 = vcmp.lt.s32.totalorder %v856, 300
        %v889 = vsel %vm857, %v632, 0.0
        %v890 = vsel %vm858, %v635, 0.0
        %v891 = vsel %vm859, %v640, 0.0
        %v892 = vsel %vm860, %v643, 0.0
        %v893 = vsel %vm861, %v648, 0.0
        %v894 = vsel %vm862, %v651, 0.0
        %v895 = vsel %vm863, %v656, 0.0
        %v896 = vsel %vm864, %v659, 0.0
        %v897 = vsel %vm865, %v664, 0.0
        %v898 = vsel %vm866, %v667, 0.0
        %v899 = vsel %vm867, %v672, 0.0
        %v900 = vsel %vm868, %v675, 0.0
        %v901 = vsel %vm869, %v680, 0.0
        %v902 = vsel %vm870, %v683, 0.0
        %v903 = vsel %vm871, %v688, 0.0
        %v904 = vsel %vm872, %v691, 0.0
        %v905 = vsel %vm873, %v696, 0.0
        %v906 = vsel %vm874, %v699, 0.0
        %v907 = vsel %vm875, %v704, 0.0
        %v908 = vsel %vm876, %v707, 0.0
        %v909 = vsel %vm877, %v712, 0.0
        %v910 = vsel %vm878, %v715, 0.0
        %v911 = vsel %vm879, %v720, 0.0
        %v912 = vsel %vm880, %v723, 0.0
        %v913 = vsel %vm881, %v728, 0.0
        %v914 = vsel %vm882, %v731, 0.0
        %v915 = vsel %vm883, %v736, 0.0
        %v916 = vsel %vm884, %v739, 0.0
        %v917 = vsel %vm885, %v744, 0.0
        %v918 = vsel %vm886, %v747, 0.0
        %v919 = vsel %vm887, %v752, 0.0
        %v920 = vsel %vm888, %v755, 0.0
        %v921 = vadd.f32 %v889, %v890
        %v922 = vadd.f32 %v921, %v891
        %v923 = vadd.f32 %v922, %v892
        %v924 = vadd.f32 %v923, %v893
        %v925 = vadd.f32 %v924, %v894
        %v926 = vadd.f32 %v925, %v895
        %v927 = vadd.f32 %v926, %v896
        %v928 = vadd.f32 %v927, %v897
        %v929 = vadd.f32 %v928, %v898
        %v930 = vadd.f32 %v929, %v899
        %v931 = vadd.f32 %v930, %v900
        %v932 = vadd.f32 %v931, %v901
        %v933 = vadd.f32 %v932, %v902
        %v934 = vadd.f32 %v933, %v903
        %v935 = vadd.f32 %v934, %v904
        %v936 = vadd.f32 %v935, %v905
        %v937 = vadd.f32 %v936, %v906
        %v938 = vadd.f32 %v937, %v907
        %v939 = vadd.f32 %v938, %v908
        %v940 = vadd.f32 %v939, %v909
        %v941 = vadd.f32 %v940, %v910
        %v942 = vadd.f32 %v941, %v911
        %v943 = vadd.f32 %v942, %v912
        %v944 = vadd.f32 %v943, %v913
        %v945 = vadd.f32 %v944, %v914
        %v946 = vadd.f32 %v945, %v915
        %v947 = vadd.f32 %v946, %v916
        %v948 = vadd.f32 %v947, %v917
        %v949 = vadd.f32 %v948, %v918
        %v950 = vadd.f32 %v949, %v919
        %v951 = vadd.f32 %v950, %v920
        %v952 = vrot.slane %v951, 4
        %v953 = vadd.f32 %v951, %v952
        %v954 = vrot.slane %v953, 2
        %v955 = vadd.f32 %v953, %v954
        %v956 = vrot.slane %v955, 1
        %v957 = vadd.f32 %v955, %v956
        %958 = vst [vmem:[%s358] sm:$0x1] %v957
        %v959 = vmul.f32 %v889, %v889
        %v960 = vmul.f32 %v890, %v890
        %v961 = vmul.f32 %v891, %v891
        %v962 = vmul.f32 %v892, %v892
        %v963 = vmul.f32 %v893, %v893
        %v964 = vmul.f32 %v894, %v894
        %v965 = vmul.f32 %v895, %v895
        %v966 = vmul.f32 %v896, %v896
        %v967 = vmul.f32 %v897, %v897
        %v968 = vmul.f32 %v898, %v898
        %v969 = vmul.f32 %v899, %v899
        %v970 = vmul.f32 %v900, %v900
        %v971 = vmul.f32 %v901, %v901
        %v972 = vmul.f32 %v902, %v902
        %v973 = vmul.f32 %v903, %v903
        %v974 = vmul.f32 %v904, %v904
        %v975 = vmul.f32 %v905, %v905
        %v976 = vmul.f32 %v906, %v906
        %v977 = vmul.f32 %v907, %v907
        %v978 = vmul.f32 %v908, %v908
        %v979 = vmul.f32 %v909, %v909
        %v980 = vmul.f32 %v910, %v910
        %v981 = vmul.f32 %v911, %v911
        %v982 = vmul.f32 %v912, %v912
        %v983 = vmul.f32 %v913, %v913
        %v984 = vmul.f32 %v914, %v914
        %v985 = vmul.f32 %v915, %v915
        %v986 = vmul.f32 %v916, %v916
        %v987 = vmul.f32 %v917, %v917
        %v988 = vmul.f32 %v918, %v918
        %v989 = vmul.f32 %v919, %v919
        %v990 = vmul.f32 %v920, %v920
        %v991 = vadd.f32 %v959, %v960
        %v992 = vadd.f32 %v991, %v961
        %v993 = vadd.f32 %v992, %v962
        %v994 = vadd.f32 %v993, %v963
        %v995 = vadd.f32 %v994, %v964
        %v996 = vadd.f32 %v995, %v965
        %v997 = vadd.f32 %v996, %v966
        %v998 = vadd.f32 %v997, %v967
        %v999 = vadd.f32 %v998, %v968
        %v1000 = vadd.f32 %v999, %v969
        %v1001 = vadd.f32 %v1000, %v970
        %v1002 = vadd.f32 %v1001, %v971
        %v1003 = vadd.f32 %v1002, %v972
        %v1004 = vadd.f32 %v1003, %v973
        %v1005 = vadd.f32 %v1004, %v974
        %v1006 = vadd.f32 %v1005, %v975
        %v1007 = vadd.f32 %v1006, %v976
        %v1008 = vadd.f32 %v1007, %v977
        %v1009 = vadd.f32 %v1008, %v978
        %v1010 = vadd.f32 %v1009, %v979
        %v1011 = vadd.f32 %v1010, %v980
        %v1012 = vadd.f32 %v1011, %v981
        %v1013 = vadd.f32 %v1012, %v982
        %v1014 = vadd.f32 %v1013, %v983
        %v1015 = vadd.f32 %v1014, %v984
        %v1016 = vadd.f32 %v1015, %v985
        %v1017 = vadd.f32 %v1016, %v986
        %v1018 = vadd.f32 %v1017, %v987
        %v1019 = vadd.f32 %v1018, %v988
        %v1020 = vadd.f32 %v1019, %v989
        %v1021 = vadd.f32 %v1020, %v990
        %v1022 = vrot.slane %v1021, 4
        %v1023 = vadd.f32 %v1021, %v1022
        %v1024 = vrot.slane %v1023, 2
        %v1025 = vadd.f32 %v1023, %v1024
        %v1026 = vrot.slane %v1025, 1
        %v1027 = vadd.f32 %v1025, %v1026
        %1028 = vst [vmem:[%s364] sm:$0x1] %v1027
        %s1029 = sand.u32 %s148, 1
        %s1030 = scalar_lea.sflag [#allocation4], %s1029
        %s1031 = sand.u32 %s148, 1
        %s1032 = smul.addr %s1031, 256
        %s1033 = scalar_lea.vmem [#allocation11], %s1032
        %s1034 = sand.u32 %s30, 1
        %s1035 = scalar_lea.sflag [#allocation13], %s1034
        %s1036 = sand.u32 %s174, 1
        %s1037 = scalar_lea.vmem [#allocation12], %s1036
        %s1038 = sand.u32 %s30, 1
        %s1039 = scalar_lea.sflag [#allocation13], %s1038
        %s1040 = sand.u32 %s200, 1
        %s1041 = scalar_lea.vmem [#allocation14], %s1040
        // Predicated region
        $region61: #{eigen_mlp_bn_forward.10} parent=39 // pred_check
          %p1042 = pneg %p158
        $region62: #{eigen_mlp_bn_forward.10} parent=39 // pred_check_branch
          %1044 = sbr.rel (%p1042) target = $region64
        $region63: #{eigen_mlp_bn_forward.10} parent=39 // pred_region
          %s1045 = smul.u32 32, %s30
          %s1047 = ssub.s32 4096, 4096
          %1048 = vsyncadd %s1030, %s1047
          %s1049 = smul.addr %s1045, 128
          %s1050 = scalar_lea.hbm %s5, %s1049
          %s1051 = sshll.u32 %s1033, 4
          %s1052 = int_to_ptr.vmem [resolvable:$true] %s1051
          %1057 = dma.vmem_to_hbm [thread:$0]  %s1052, 4096, %s1050, %s1030, 128, 128, 8
        $region64: #{eigen_mlp_bn_forward.10} parent=39 // pred_fallthru
          _
        // Predicated region
        $region65: #{eigen_mlp_bn_forward.10} parent=39 // pred_check
          %p1058 = pneg %p184
        $region66: #{eigen_mlp_bn_forward.10} parent=39 // pred_check_branch
          %1060 = sbr.rel (%p1058) target = $region68
        $region67: #{eigen_mlp_bn_forward.10} parent=39 // pred_region
          %s1062 = ssub.s32 16, 16
          %1063 = vsyncadd %s1035, %s1062
          %s1064 = smul.addr %s30, 16
          %s1065 = scalar_lea.hbm %s6, %s1064
          %s1067 = sshll.u32 %s1037, 4
          %s1068 = int_to_ptr.vmem [resolvable:$true] %s1067
          %1070 = dma.vmem_to_hbm [thread:$0]  %s1068, 16, %s1065, %s1035
        $region68: #{eigen_mlp_bn_forward.10} parent=39 // pred_fallthru
          _
        // Predicated region
        $region69: #{eigen_mlp_bn_forward.10} parent=39 // pred_check
          %p1071 = pneg %p210
        $region70: #{eigen_mlp_bn_forward.10} parent=39 // pred_check_branch
          %1073 = sbr.rel (%p1071) target = $region72
        $region71: #{eigen_mlp_bn_forward.10} parent=39 // pred_region
          %s1075 = ssub.s32 16, 16
          %1076 = vsyncadd %s1039, %s1075
          %s1077 = smul.addr %s30, 16
          %s1078 = scalar_lea.hbm %s7, %s1077
          %s1080 = sshll.u32 %s1041, 4
          %s1081 = int_to_ptr.vmem [resolvable:$true] %s1080
          %1083 = dma.vmem_to_hbm [thread:$0]  %s1081, 16, %s1078, %s1039
        $region72: #{eigen_mlp_bn_forward.10} parent=39 // pred_fallthru
          _
      $region40: #{eigen_mlp_bn_forward.10} parent=5 // pred_fallthru
        _
      %p1084 = scmp.le.s32.totalorder 2, %s25
      // Predicated region
      $region73: #{eigen_mlp_bn_forward.10} parent=5 // pred_check
        %p1085 = pneg %p1084
      $region74: #{eigen_mlp_bn_forward.10} parent=5 // pred_check_branch
        %1087 = sbr.rel (%p1085) target = $region76
      $region75: #{eigen_mlp_bn_forward.10} parent=5 // pred_region
        %s1088 = ssub.s32 %s25, 2
        // Predicated region
        $region77: #{eigen_mlp_bn_forward.10} parent=75 // pred_check
          %p1089 = pneg %p164
        $region78: #{eigen_mlp_bn_forward.10} parent=75 // pred_check_branch
          %1091 = sbr.rel (%p1089) target = $region80
        $region79: #{eigen_mlp_bn_forward.10} parent=75 // pred_region
          %s1092 = sand.u32 %s149, 1
          %s1093 = scalar_lea.sflag [#allocation4], %s1092
          %s1094 = sand.u32 %s149, 1
          %s1095 = smul.addr %s1094, 256
          %s1096 = scalar_lea.vmem [#allocation11], %s1095
          %1097 = dma.done %s1093, 4096
        $region80: #{eigen_mlp_bn_forward.10} parent=75 // pred_fallthru
          _
        // Predicated region
        $region81: #{eigen_mlp_bn_forward.10} parent=75 // pred_check
          %p1098 = pneg %p190
        $region82: #{eigen_mlp_bn_forward.10} parent=75 // pred_check_branch
          %1100 = sbr.rel (%p1098) target = $region84
        $region83: #{eigen_mlp_bn_forward.10} parent=75 // pred_region
          %s1101 = sand.u32 %s31, 1
          %s1102 = scalar_lea.sflag [#allocation13], %s1101
          %s1103 = sand.u32 %s175, 1
          %s1104 = scalar_lea.vmem [#allocation12], %s1103
          %1105 = dma.done %s1102, 16
        $region84: #{eigen_mlp_bn_forward.10} parent=75 // pred_fallthru
          _
        // Predicated region
        $region85: #{eigen_mlp_bn_forward.10} parent=75 // pred_check
          %p1106 = pneg %p216
        $region86: #{eigen_mlp_bn_forward.10} parent=75 // pred_check_branch
          %1108 = sbr.rel (%p1106) target = $region88
        $region87: #{eigen_mlp_bn_forward.10} parent=75 // pred_region
          %s1109 = sand.u32 %s31, 1
          %s1110 = scalar_lea.sflag [#allocation13], %s1109
          %s1111 = sand.u32 %s201, 1
          %s1112 = scalar_lea.vmem [#allocation14], %s1111
          %1113 = dma.done %s1110, 16
        $region88: #{eigen_mlp_bn_forward.10} parent=75 // pred_fallthru
          _
      $region76: #{eigen_mlp_bn_forward.10} parent=5 // pred_fallthru
        _
    $region6: #{eigen_mlp_bn_forward.10} parent=1 // loop_footer
      %s29 = sadd.s32 1, %s25
    $region7: #{eigen_mlp_bn_forward.10} parent=1 // loop_footer_branch
      %24 = sbr.rel target = $region3
    $region8: #{eigen_mlp_bn_forward.10} parent=1 // loop_exit
      _
    %1114 = vsyncpa [#allocation3], 1
    %s1115 = scalar_lea.sflag [#allocation3], 1
    %1116 = vsyncpa %s1115, 1
    %1117 = vsyncpa [#allocation6], 1
    %1118 = vsyncpa [#allocation9], 1
    %1119 = vsyncpa [#allocation4], 1
    %s1120 = scalar_lea.sflag [#allocation4], 1
    %1121 = vsyncpa %s1120, 1
    %1122 = vsyncpa [#allocation13], 1
    %s1123 = scalar_lea.sflag [#allocation13], 1
    %1124 = vsyncpa %s1123, 1

// kernel: eigen_mlp_bn_forward.9
$region0: #{eigen_mlp_bn_forward.9}
  #allocation0 [shape = 'u32[]', space=smem, size = 0x4, offset = 0x4, fixed_abs, tag = 'smem constant byte address 0x4 - core index']
  #allocation1 [shape = 'u32[144,128]{1,0:T(1,128)}', space=vmem, size = 0x12000, scoped, tag = 'internal scratch']
  #allocation2 [shape = 'f32[256,128]{1,0:T(8,128)}', space=vmem, size = 0x20000, scoped, tag = 'scratch operand']
  %s0 = inlined_call_operand.hbm [shape: bf16[512,512], index: 0, kind: input, shape index: {}]
  %s1 = inlined_call_operand.hbm [shape: bf16[512,128], index: 1, kind: input, shape index: {}]
  %s2 = inlined_call_operand.hbm [shape: bf16[128,128], index: 2, kind: input, shape index: {}]
  %s3 = inlined_call_operand.hbm [shape: f32[1,128], index: 3, kind: input, shape index: {}]
  %s4 = inlined_call_operand.hbm [shape: f32[512,128], index: 4, kind: output, shape index: {0}]
  %s5 = inlined_call_operand.hbm [shape: f32[2,1,128], index: 5, kind: output, shape index: {1}]
  %s6 = inlined_call_operand.hbm [shape: f32[2,1,128], index: 6, kind: output, shape index: {2}]
  %7 = xla_tuple %s4, %s5, %s6
  %s8 = sld [smem:[#allocation0]]
  $region89: #{eigen_mlp_bn_forward.9} parent=0
    _
  %s10 = ssub.s32 1, %s8
  %s11 = scalar_select 0, %s10, %s8
  $region1: #{eigen_mlp_bn_forward.9} parent=0
    #allocation3 [shape = 'u8[262144]{0}', space=vmem, size = 0x40000, scoped, tag = 'input window, operand 0']
    #allocation4 [shape = 's32[2]{0}', space=sflag, size = 0x8, scoped, tag = 'scoped memory for eigen_mlp_bn_forward.9']
    #allocation5 [shape = 's32[2]{0}', space=sflag, size = 0x8, scoped, tag = 'scoped memory for eigen_mlp_bn_forward.9']
    #allocation6 [shape = 'u8[131072]{0}', space=vmem, size = 0x20000, scoped, tag = 'input window, operand 1']
    #allocation7 [shape = 's32[2]{0}', space=sflag, size = 0x8, scoped, tag = 'scoped memory for eigen_mlp_bn_forward.9']
    #allocation8 [shape = 'u8[32768]{0}', space=vmem, size = 0x8000, scoped, tag = 'input window, operand 2, single buffered']
    #allocation9 [shape = 'u8[512]{0}', space=vmem, size = 0x400, scoped, tag = 'input window, operand 3, single buffered']
    #allocation10 [shape = 's32[1]{0}', space=sflag, size = 0x4, scoped, tag = 'scoped memory for eigen_mlp_bn_forward.9']
    #allocation11 [shape = 'u8[262144]{0}', space=vmem, size = 0x40000, scoped, tag = 'output window, operand 0']
    #allocation12 [shape = 'u8[1024]{0}', space=vmem, size = 0x400, scoped, tag = 'output window, operand 1']
    #allocation13 [shape = 's32[2]{0}', space=sflag, size = 0x8, scoped, tag = 'scoped memory for eigen_mlp_bn_forward.9']
    #allocation14 [shape = 'u8[1024]{0}', space=vmem, size = 0x400, scoped, tag = 'output window, operand 2']
    %12 = vsyncpa [#allocation4], 0
    %s13 = scalar_lea.sflag [#allocation4], 1
    %14 = vsyncpa %s13, 0
    %15 = vsyncpa [#allocation7], 0
    %s16 = scalar_lea.sflag [#allocation7], 1
    %17 = vsyncpa %s16, 0
    %18 = vsyncpa [#allocation10], 0
    %19 = vsyncpa [#allocation5], 0
    %s20 = scalar_lea.sflag [#allocation5], 1
    %21 = vsyncpa %s20, 0
    %22 = vsyncpa [#allocation13], 0
    %s23 = scalar_lea.sflag [#allocation13], 1
    %24 = vsyncpa %s23, 0
    loop: start=0, step=1, limit=6
    $region2: #{eigen_mlp_bn_forward.9} parent=1 // loop_pre_header
      _
    $region3: #{eigen_mlp_bn_forward.9} parent=1 // loop_header
      %s26 = sphi 0, %s30
      %p27 = scmp.ge.s32.totalorder %s26, 6
      %s33 = sphi 0, %s45
      %s34 = sphi 0, %s41
      %s35 = sphi 0, %s33
      %s36 = sphi 0, %s34
      %s37 = sphi 0, %s35
      %s38 = sphi 0, %s36
      %s50 = sphi 0, %s52
      %s53 = sphi 0, %s50
      %s54 = sphi 0, %s53
      %s70 = sphi 0, %s54
      %s76 = sphi 0, %s78
      %s79 = sphi 0, %s76
      %s80 = sphi 0, %s79
      %s96 = sphi 0, %s80
      %s100 = sphi 0, %s100
      %s102 = sphi 0, %s100
      %s103 = sphi 0, %s102
      %s117 = sphi 0, %s103
      %s121 = sphi 0, %s121
      %s123 = sphi 0, %s121
      %s124 = sphi 0, %s123
      %s138 = sphi 0, %s124
      %s144 = sphi 0, %s146
      %s147 = sphi 0, %s144
      %s148 = sphi 0, %s147
      %s164 = sphi 0, %s148
      %s170 = sphi 0, %s172
      %s173 = sphi 0, %s170
      %s174 = sphi 0, %s173
      %s190 = sphi 0, %s174
      %s196 = sphi 0, %s198
      %s199 = sphi 0, %s196
      %s200 = sphi 0, %s199
      %s216 = sphi 0, %s200
    $region4: #{eigen_mlp_bn_forward.9} parent=1 // loop_header_branch
      %29 = sbr.rel (%p27) target = $region8
    $region5: #{eigen_mlp_bn_forward.9} parent=1 // loop_body
      %s31 = ssub.s32 %s26, 1
      %s32 = ssub.s32 %s26, 2
      %s39 = sadd.s32 1, %s34
      %p40 = scmp.ge.s32.totalorder %s39, 2
      %s41 = scalar_select %p40, 0, %s39
      %s42 = sadd.s32 1, %s33
      %s43 = scalar_select %p40, %s42, %s33
      %p44 = scmp.ge.s32.totalorder %s43, 2
      %s45 = scalar_select %p44, 0, %s43
      %s46 = ssub.s32 %s33, %s45
      %s47 = ssub.s32 %s34, %s41
      %s48 = sor.u32 %s46, %s47
      %p49 = scmp.eq.s32.totalorder %s48, 0
      %s51 = sadd.s32 %s50, 1
      %s52 = scalar_select %p49, %s50, %s51
      %p55 = pneg %p49
      %p56 = scmp.eq.s32.totalorder %s26, 3
      %p57 = por %p55, %p56
      %p58 = scmp.ne.s32.totalorder %s50, %s53
      %p59 = scmp.eq.s32.totalorder %s26, 0
      %p60 = por %p58, %p59
      %p61 = scmp.ne.s32.totalorder %s50, %s53
      %p62 = scmp.eq.s32.totalorder %s31, 3
      %p63 = por %p61, %p62
      %p64 = scmp.ne.s32.totalorder %s53, %s54
      %p65 = scmp.eq.s32.totalorder %s31, 0
      %p66 = por %p64, %p65
      %p67 = scmp.ne.s32.totalorder %s53, %s54
      %p68 = scmp.eq.s32.totalorder %s32, 3
      %p69 = por %p67, %p68
      %p71 = scmp.ne.s32.totalorder %s54, %s70
      %p72 = scmp.eq.s32.totalorder %s32, 0
      %p73 = por %p71, %p72
      %s74 = ssub.s32 %s34, %s41
      %p75 = scmp.eq.s32.totalorder %s74, 0
      %s77 = sadd.s32 %s76, 1
      %s78 = scalar_select %p75, %s76, %s77
      %p81 = pneg %p75
      %p82 = scmp.eq.s32.totalorder %s26, 3
      %p83 = por %p81, %p82
      %p84 = scmp.ne.s32.totalorder %s76, %s79
      %p85 = scmp.eq.s32.totalorder %s26, 0
      %p86 = por %p84, %p85
      %p87 = scmp.ne.s32.totalorder %s76, %s79
      %p88 = scmp.eq.s32.totalorder %s31, 3
      %p89 = por %p87, %p88
      %p90 = scmp.ne.s32.totalorder %s79, %s80
      %p91 = scmp.eq.s32.totalorder %s31, 0
      %p92 = por %p90, %p91
      %p93 = scmp.ne.s32.totalorder %s79, %s80
      %p94 = scmp.eq.s32.totalorder %s32, 3
      %p95 = por %p93, %p94
      %p97 = scmp.ne.s32.totalorder %s80, %s96
      %p98 = scmp.eq.s32.totalorder %s32, 0
      %p99 = por %p97, %p98
      %s101 = sadd.s32 %s100, 1
      %p104 = scmp.eq.s32.totalorder %s26, 3
      %p105 = scmp.ne.s32.totalorder %s100, %s102
      %p106 = scmp.eq.s32.totalorder %s26, 0
      %p107 = por %p105, %p106
      %p108 = scmp.ne.s32.totalorder %s100, %s102
      %p109 = scmp.eq.s32.totalorder %s31, 3
      %p110 = por %p108, %p109
      %p111 = scmp.ne.s32.totalorder %s102, %s103
      %p112 = scmp.eq.s32.totalorder %s31, 0
      %p113 = por %p111, %p112
      %p114 = scmp.ne.s32.totalorder %s102, %s103
      %p115 = scmp.eq.s32.totalorder %s32, 3
      %p116 = por %p114, %p115
      %p118 = scmp.ne.s32.totalorder %s103, %s117
      %p119 = scmp.eq.s32.totalorder %s32, 0
      %p120 = por %p118, %p119
      %s122 = sadd.s32 %s121, 1
      %p125 = scmp.eq.s32.totalorder %s26, 3
      %p126 = scmp.ne.s32.totalorder %s121, %s123
      %p127 = scmp.eq.s32.totalorder %s26, 0
      %p128 = por %p126, %p127
      %p129 = scmp.ne.s32.totalorder %s121, %s123
      %p130 = scmp.eq.s32.totalorder %s31, 3
      %p131 = por %p129, %p130
      %p132 = scmp.ne.s32.totalorder %s123, %s124
      %p133 = scmp.eq.s32.totalorder %s31, 0
      %p134 = por %p132, %p133
      %p135 = scmp.ne.s32.totalorder %s123, %s124
      %p136 = scmp.eq.s32.totalorder %s32, 3
      %p137 = por %p135, %p136
      %p139 = scmp.ne.s32.totalorder %s124, %s138
      %p140 = scmp.eq.s32.totalorder %s32, 0
      %p141 = por %p139, %p140
      %s142 = ssub.s32 %s33, %s45
      %p143 = scmp.eq.s32.totalorder %s142, 0
      %s145 = sadd.s32 %s144, 1
      %s146 = scalar_select %p143, %s144, %s145
      %p149 = pneg %p143
      %p150 = scmp.eq.s32.totalorder %s26, 3
      %p151 = por %p149, %p150
      %p152 = scmp.ne.s32.totalorder %s144, %s147
      %p153 = scmp.eq.s32.totalorder %s26, 0
      %p154 = por %p152, %p153
      %p155 = scmp.ne.s32.totalorder %s144, %s147
      %p156 = scmp.eq.s32.totalorder %s31, 3
      %p157 = por %p155, %p156
      %p158 = scmp.ne.s32.totalorder %s147, %s148
      %p159 = scmp.eq.s32.totalorder %s31, 0
      %p160 = por %p158, %p159
      %p161 = scmp.ne.s32.totalorder %s147, %s148
      %p162 = scmp.eq.s32.totalorder %s32, 3
      %p163 = por %p161, %p162
      %p165 = scmp.ne.s32.totalorder %s148, %s164
      %p166 = scmp.eq.s32.totalorder %s32, 0
      %p167 = por %p165, %p166
      %s168 = ssub.s32 %s33, %s45
      %p169 = scmp.eq.s32.totalorder %s168, 0
      %s171 = sadd.s32 %s170, 1
      %s172 = scalar_select %p169, %s170, %s171
      %p175 = pneg %p169
      %p176 = scmp.eq.s32.totalorder %s26, 3
      %p177 = por %p175, %p176
      %p178 = scmp.ne.s32.totalorder %s170, %s173
      %p179 = scmp.eq.s32.totalorder %s26, 0
      %p180 = por %p178, %p179
      %p181 = scmp.ne.s32.totalorder %s170, %s173
      %p182 = scmp.eq.s32.totalorder %s31, 3
      %p183 = por %p181, %p182
      %p184 = scmp.ne.s32.totalorder %s173, %s174
      %p185 = scmp.eq.s32.totalorder %s31, 0
      %p186 = por %p184, %p185
      %p187 = scmp.ne.s32.totalorder %s173, %s174
      %p188 = scmp.eq.s32.totalorder %s32, 3
      %p189 = por %p187, %p188
      %p191 = scmp.ne.s32.totalorder %s174, %s190
      %p192 = scmp.eq.s32.totalorder %s32, 0
      %p193 = por %p191, %p192
      %s194 = ssub.s32 %s33, %s45
      %p195 = scmp.eq.s32.totalorder %s194, 0
      %s197 = sadd.s32 %s196, 1
      %s198 = scalar_select %p195, %s196, %s197
      %p201 = pneg %p195
      %p202 = scmp.eq.s32.totalorder %s26, 3
      %p203 = por %p201, %p202
      %p204 = scmp.ne.s32.totalorder %s196, %s199
      %p205 = scmp.eq.s32.totalorder %s26, 0
      %p206 = por %p204, %p205
      %p207 = scmp.ne.s32.totalorder %s196, %s199
      %p208 = scmp.eq.s32.totalorder %s31, 3
      %p209 = por %p207, %p208
      %p210 = scmp.ne.s32.totalorder %s199, %s200
      %p211 = scmp.eq.s32.totalorder %s31, 0
      %p212 = por %p210, %p211
      %p213 = scmp.ne.s32.totalorder %s199, %s200
      %p214 = scmp.eq.s32.totalorder %s32, 3
      %p215 = por %p213, %p214
      %p217 = scmp.ne.s32.totalorder %s200, %s216
      %p218 = scmp.eq.s32.totalorder %s32, 0
      %p219 = por %p217, %p218
      %p220 = scmp.le.s32.totalorder 1, %s26
      %p221 = scmp.lt.s32.totalorder %s26, 5
      %p222 = pnand %p220, %p221
      %p223 = pneg %p222
      // Predicated region
      $region9: #{eigen_mlp_bn_forward.9} parent=5 // pred_check
        _
      $region10: #{eigen_mlp_bn_forward.9} parent=5 // pred_check_branch
        %225 = sbr.rel (%p222) target = $region12
      $region11: #{eigen_mlp_bn_forward.9} parent=5 // pred_region
        %s226 = ssub.s32 %s26, 1
        // Predicated region
        $region13: #{eigen_mlp_bn_forward.9} parent=11 // pred_check
          %p227 = pneg %p113
        $region14: #{eigen_mlp_bn_forward.9} parent=11 // pred_check_branch
          %229 = sbr.rel (%p227) target = $region16
        $region15: #{eigen_mlp_bn_forward.9} parent=11 // pred_region
          %s231 = ssub.s32 1024, 1024
          %232 = vsyncadd [#allocation7], %s231
          %s233 = sshll.u32 [#allocation8], 4
          %s234 = int_to_ptr.vmem [resolvable:$true] %s233
          %239 = dma.hbm_to_vmem [thread:$0]  %s2, 1024, %s234, [#allocation7], 64, 64, 4
        $region16: #{eigen_mlp_bn_forward.9} parent=11 // pred_fallthru
          _
        // Predicated region
        $region17: #{eigen_mlp_bn_forward.9} parent=11 // pred_check
          %p240 = pneg %p134
        $region18: #{eigen_mlp_bn_forward.9} parent=11 // pred_check_branch
          %242 = sbr.rel (%p240) target = $region20
        $region19: #{eigen_mlp_bn_forward.9} parent=11 // pred_region
          %s244 = ssub.s32 16, 16
          %245 = vsyncadd [#allocation10], %s244
          %s247 = sshll.u32 [#allocation9], 4
          %s248 = int_to_ptr.vmem [resolvable:$true] %s247
          %250 = dma.hbm_to_vmem [thread:$0]  %s3, 16, %s248, [#allocation10]
        $region20: #{eigen_mlp_bn_forward.9} parent=11 // pred_fallthru
          _
      $region12: #{eigen_mlp_bn_forward.9} parent=5 // pred_fallthru
        _
      %p251 = scmp.lt.s32.totalorder %s26, 4
      // Predicated region
      $region21: #{eigen_mlp_bn_forward.9} parent=5 // pred_check
        %p252 = pneg %p251
      $region22: #{eigen_mlp_bn_forward.9} parent=5 // pred_check_branch
        %254 = sbr.rel (%p252) target = $region24
      $region23: #{eigen_mlp_bn_forward.9} parent=5 // pred_region
        // Predicated region
        $region25: #{eigen_mlp_bn_forward.9} parent=23 // pred_check
          %p255 = pneg %p60
        $region26: #{eigen_mlp_bn_forward.9} parent=23 // pred_check_branch
          %257 = sbr.rel (%p255) target = $region28
        $region27: #{eigen_mlp_bn_forward.9} parent=23 // pred_region
          %s258 = sand.u32 %s50, 1
          %s259 = scalar_lea.sflag [#allocation4], %s258
          %s260 = sand.u32 %s50, 1
          %s261 = smul.addr %s260, 256
          %s262 = scalar_lea.vmem [#allocation3], %s261
          %s263 = smul.u32 32, %s33
          %s264 = smul.u32 2, %s34
          %s266 = ssub.s32 4096, 4096
          %267 = vsyncadd %s259, %s266
          %s268 = smul.addr %s263, 4
          %s269 = sadd.s32 %s264, %s268
          %s270 = smul.addr %s269, 64
          %s271 = scalar_lea.hbm %s0, %s270
          %s272 = sshll.u32 %s262, 4
          %s273 = int_to_ptr.vmem [resolvable:$true] %s272
          %278 = dma.hbm_to_vmem [thread:$0]  %s271, 4096, %s273, %s259, 256, 128, 8
        $region28: #{eigen_mlp_bn_forward.9} parent=23 // pred_fallthru
          _
        // Predicated region
        $region29: #{eigen_mlp_bn_forward.9} parent=23 // pred_check
          %p279 = pneg %p86
        $region30: #{eigen_mlp_bn_forward.9} parent=23 // pred_check_branch
          %281 = sbr.rel (%p279) target = $region32
        $region31: #{eigen_mlp_bn_forward.9} parent=23 // pred_region
          %s282 = sand.u32 %s26, 1
          %s283 = scalar_lea.sflag [#allocation7], %s282
          %s284 = sand.u32 %s76, 1
          %s285 = smul.addr %s284, 128
          %s286 = scalar_lea.vmem [#allocation6], %s285
          %s287 = smul.u32 32, %s34
          %s289 = ssub.s32 2048, 2048
          %290 = vsyncadd %s283, %s289
          %s291 = smul.addr %s287, 64
          %s292 = scalar_lea.hbm %s1, %s291
          %s293 = sshll.u32 %s286, 4
          %s294 = int_to_ptr.vmem [resolvable:$true] %s293
          %299 = dma.hbm_to_vmem [thread:$0]  %s292, 2048, %s294, %s283, 64, 64, 4
        $region32: #{eigen_mlp_bn_forward.9} parent=23 // pred_fallthru
          _
      $region24: #{eigen_mlp_bn_forward.9} parent=5 // pred_fallthru
        _
      %p300 = scmp.le.s32.totalorder 1, %s26
      %p301 = scmp.lt.s32.totalorder %s26, 5
      %p302 = pnand %p300, %p301
      %p303 = pneg %p302
      // Predicated region
      $region33: #{eigen_mlp_bn_forward.9} parent=5 // pred_check
        _
      $region34: #{eigen_mlp_bn_forward.9} parent=5 // pred_check_branch
        %305 = sbr.rel (%p302) target = $region36
      $region35: #{eigen_mlp_bn_forward.9} parent=5 // pred_region
        %s306 = ssub.s32 %s26, 1
        %s307 = sand.u32 %s53, 1
        %s308 = scalar_lea.sflag [#allocation4], %s307
        %s309 = sand.u32 %s53, 1
        %s310 = smul.addr %s309, 256
        %s311 = scalar_lea.vmem [#allocation3], %s310
        // Predicated region
        $region37: #{eigen_mlp_bn_forward.9} parent=35 // pred_check
          %p312 = pneg %p66
        $region38: #{eigen_mlp_bn_forward.9} parent=35 // pred_check_branch
          %314 = sbr.rel (%p312) target = $region40
        $region39: #{eigen_mlp_bn_forward.9} parent=35 // pred_region
          %315 = dma.done %s308, 4096
        $region40: #{eigen_mlp_bn_forward.9} parent=35 // pred_fallthru
          _
        %s316 = sand.u32 %s31, 1
        %s317 = scalar_lea.sflag [#allocation7], %s316
        %s318 = sand.u32 %s79, 1
        %s319 = smul.addr %s318, 128
        %s320 = scalar_lea.vmem [#allocation6], %s319
        // Predicated region
        $region41: #{eigen_mlp_bn_forward.9} parent=35 // pred_check
          %p321 = pneg %p92
        $region42: #{eigen_mlp_bn_forward.9} parent=35 // pred_check_branch
          %323 = sbr.rel (%p321) target = $region44
        $region43: #{eigen_mlp_bn_forward.9} parent=35 // pred_region
          %324 = dma.done %s317, 2048
        $region44: #{eigen_mlp_bn_forward.9} parent=35 // pred_fallthru
          _
        // Predicated region
        $region45: #{eigen_mlp_bn_forward.9} parent=35 // pred_check
          %p325 = pneg %p113
        $region46: #{eigen_mlp_bn_forward.9} parent=35 // pred_check_branch
          %327 = sbr.rel (%p325) target = $region48
        $region47: #{eigen_mlp_bn_forward.9} parent=35 // pred_region
          %328 = dma.done [#allocation7], 1024
        $region48: #{eigen_mlp_bn_forward.9} parent=35 // pred_fallthru
          _
        // Predicated region
        $region49: #{eigen_mlp_bn_forward.9} parent=35 // pred_check
          %p329 = pneg %p134
        $region50: #{eigen_mlp_bn_forward.9} parent=35 // pred_check_branch
          %331 = sbr.rel (%p329) target = $region52
        $region51: #{eigen_mlp_bn_forward.9} parent=35 // pred_region
          %332 = dma.done [#allocation10], 16
        $region52: #{eigen_mlp_bn_forward.9} parent=35 // pred_fallthru
          _
        %s333 = sand.u32 %s53, 1
        %s334 = scalar_lea.sflag [#allocation4], %s333
        %s335 = sand.u32 %s53, 1
        %s336 = smul.addr %s335, 256
        %s337 = scalar_lea.vmem [#allocation3], %s336
        %p338 = pneg %p66
        %p339 = pneg %p63
        %s340 = sand.u32 %s31, 1
        %s341 = scalar_lea.sflag [#allocation7], %s340
        %s342 = sand.u32 %s79, 1
        %s343 = smul.addr %s342, 128
        %s344 = scalar_lea.vmem [#allocation6], %s343
        %p345 = pneg %p92
        %p346 = pneg %p89
        %p347 = pneg %p113
        %p348 = pneg %p110
        %p349 = pneg %p134
        %p350 = pneg %p131
        %p351 = pneg %p160
        %p352 = pneg %p157
        %s353 = sand.u32 %s147, 1
        %s354 = scalar_lea.sflag [#allocation5], %s353
        %s355 = sand.u32 %s147, 1
        %s356 = smul.addr %s355, 256
        %s357 = scalar_lea.vmem [#allocation11], %s356
        %p358 = pneg %p186
        %p359 = pneg %p183
        %s360 = sand.u32 %s31, 1
        %s361 = scalar_lea.sflag [#allocation13], %s360
        %s362 = sand.u32 %s173, 1
        %s363 = scalar_lea.vmem [#allocation12], %s362
        %p364 = pneg %p212
        %p365 = pneg %p209
        %s366 = sand.u32 %s31, 1
        %s367 = scalar_lea.sflag [#allocation13], %s366
        %s368 = sand.u32 %s199, 1
        %s369 = scalar_lea.vmem [#allocation14], %s368
        %s370 = smul.u32 32, %s35
        %s371 = smul.u32 2, %s36
        %s372 = smul.u32 32, %s36
        %s373 = smul.u32 32, %s35
        %p375 = scmp.eq.s32.totalorder %s36, 0
        // Predicated region
        $region53: #{eigen_mlp_bn_forward.9} parent=35 // pred_check
          %p376 = pneg %p375
        $region54: #{eigen_mlp_bn_forward.9} parent=35 // pred_check_branch
          %378 = sbr.rel (%p376) target = $region56
        $region55: #{eigen_mlp_bn_forward.9} parent=35 // pred_region
          %379 = vst [vmem:[#allocation2] sm:$0xff] 0.0
          %380 = vst [vmem:[#allocation2 + $0x8] sm:$0xff] 0.0
          %381 = vst [vmem:[#allocation2 + $0x10] sm:$0xff] 0.0
          %382 = vst [vmem:[#allocation2 + $0x18] sm:$0xff] 0.0
          %383 = vst [vmem:[#allocation2 + $0x20] sm:$0xff] 0.0
          %384 = vst [vmem:[#allocation2 + $0x28] sm:$0xff] 0.0
          %385 = vst [vmem:[#allocation2 + $0x30] sm:$0xff] 0.0
          %386 = vst [vmem:[#allocation2 + $0x38] sm:$0xff] 0.0
          %387 = vst [vmem:[#allocation2 + $0x40] sm:$0xff] 0.0
          %388 = vst [vmem:[#allocation2 + $0x48] sm:$0xff] 0.0
          %389 = vst [vmem:[#allocation2 + $0x50] sm:$0xff] 0.0
          %390 = vst [vmem:[#allocation2 + $0x58] sm:$0xff] 0.0
          %391 = vst [vmem:[#allocation2 + $0x60] sm:$0xff] 0.0
          %392 = vst [vmem:[#allocation2 + $0x68] sm:$0xff] 0.0
          %393 = vst [vmem:[#allocation2 + $0x70] sm:$0xff] 0.0
          %394 = vst [vmem:[#allocation2 + $0x78] sm:$0xff] 0.0
          %395 = vst [vmem:[#allocation2 + $0x80] sm:$0xff] 0.0
          %396 = vst [vmem:[#allocation2 + $0x88] sm:$0xff] 0.0
          %397 = vst [vmem:[#allocation2 + $0x90] sm:$0xff] 0.0
          %398 = vst [vmem:[#allocation2 + $0x98] sm:$0xff] 0.0
          %399 = vst [vmem:[#allocation2 + $0xa0] sm:$0xff] 0.0
          %400 = vst [vmem:[#allocation2 + $0xa8] sm:$0xff] 0.0
          %401 = vst [vmem:[#allocation2 + $0xb0] sm:$0xff] 0.0
          %402 = vst [vmem:[#allocation2 + $0xb8] sm:$0xff] 0.0
          %403 = vst [vmem:[#allocation2 + $0xc0] sm:$0xff] 0.0
          %404 = vst [vmem:[#allocation2 + $0xc8] sm:$0xff] 0.0
          %405 = vst [vmem:[#allocation2 + $0xd0] sm:$0xff] 0.0
          %406 = vst [vmem:[#allocation2 + $0xd8] sm:$0xff] 0.0
          %407 = vst [vmem:[#allocation2 + $0xe0] sm:$0xff] 0.0
          %408 = vst [vmem:[#allocation2 + $0xe8] sm:$0xff] 0.0
          %409 = vst [vmem:[#allocation2 + $0xf0] sm:$0xff] 0.0
          %410 = vst [vmem:[#allocation2 + $0xf8] sm:$0xff] 0.0
        $region56: #{eigen_mlp_bn_forward.9} parent=35 // pred_fallthru
          _
        %v411 = vld [vmem:[#allocation2] sm:$0xff]
        %v412 = vld [vmem:[#allocation2 + $0x8] sm:$0xff]
        %v413 = vld [vmem:[#allocation2 + $0x10] sm:$0xff]
        %v414 = vld [vmem:[#allocation2 + $0x18] sm:$0xff]
        %v415 = vld [vmem:[#allocation2 + $0x20] sm:$0xff]
        %v416 = vld [vmem:[#allocation2 + $0x28] sm:$0xff]
        %v417 = vld [vmem:[#allocation2 + $0x30] sm:$0xff]
        %v418 = vld [vmem:[#allocation2 + $0x38] sm:$0xff]
        %v419 = vld [vmem:[#allocation2 + $0x40] sm:$0xff]
        %v420 = vld [vmem:[#allocation2 + $0x48] sm:$0xff]
        %v421 = vld [vmem:[#allocation2 + $0x50] sm:$0xff]
        %v422 = vld [vmem:[#allocation2 + $0x58] sm:$0xff]
        %v423 = vld [vmem:[#allocation2 + $0x60] sm:$0xff]
        %v424 = vld [vmem:[#allocation2 + $0x68] sm:$0xff]
        %v425 = vld [vmem:[#allocation2 + $0x70] sm:$0xff]
        %v426 = vld [vmem:[#allocation2 + $0x78] sm:$0xff]
        %v427 = vld [vmem:[#allocation2 + $0x80] sm:$0xff]
        %v428 = vld [vmem:[#allocation2 + $0x88] sm:$0xff]
        %v429 = vld [vmem:[#allocation2 + $0x90] sm:$0xff]
        %v430 = vld [vmem:[#allocation2 + $0x98] sm:$0xff]
        %v431 = vld [vmem:[#allocation2 + $0xa0] sm:$0xff]
        %v432 = vld [vmem:[#allocation2 + $0xa8] sm:$0xff]
        %v433 = vld [vmem:[#allocation2 + $0xb0] sm:$0xff]
        %v434 = vld [vmem:[#allocation2 + $0xb8] sm:$0xff]
        %v435 = vld [vmem:[#allocation2 + $0xc0] sm:$0xff]
        %v436 = vld [vmem:[#allocation2 + $0xc8] sm:$0xff]
        %v437 = vld [vmem:[#allocation2 + $0xd0] sm:$0xff]
        %v438 = vld [vmem:[#allocation2 + $0xd8] sm:$0xff]
        %v439 = vld [vmem:[#allocation2 + $0xe0] sm:$0xff]
        %v440 = vld [vmem:[#allocation2 + $0xe8] sm:$0xff]
        %v441 = vld [vmem:[#allocation2 + $0xf0] sm:$0xff]
        %v442 = vld [vmem:[#allocation2 + $0xf8] sm:$0xff]
        %v443 = vld [vmem:[%s311] sm:$0xff]
        %v444 = vld [vmem:[%s311 + $0x8] sm:$0xff]
        %v445 = vld [vmem:[%s311 + $0x10] sm:$0xff]
        %v446 = vld [vmem:[%s311 + $0x18] sm:$0xff]
        %v447 = vld [vmem:[%s311 + $0x20] sm:$0xff]
        %v448 = vld [vmem:[%s311 + $0x28] sm:$0xff]
        %v449 = vld [vmem:[%s311 + $0x30] sm:$0xff]
        %v450 = vld [vmem:[%s311 + $0x38] sm:$0xff]
        %v451 = vld [vmem:[%s311 + $0x40] sm:$0xff]
        %v452 = vld [vmem:[%s311 + $0x48] sm:$0xff]
        %v453 = vld [vmem:[%s311 + $0x50] sm:$0xff]
        %v454 = vld [vmem:[%s311 + $0x58] sm:$0xff]
        %v455 = vld [vmem:[%s311 + $0x60] sm:$0xff]
        %v456 = vld [vmem:[%s311 + $0x68] sm:$0xff]
        %v457 = vld [vmem:[%s311 + $0x70] sm:$0xff]
        %v458 = vld [vmem:[%s311 + $0x78] sm:$0xff]
        %v459 = vld [vmem:[%s311 + $0x80] sm:$0xff]
        %v460 = vld [vmem:[%s311 + $0x88] sm:$0xff]
        %v461 = vld [vmem:[%s311 + $0x90] sm:$0xff]
        %v462 = vld [vmem:[%s311 + $0x98] sm:$0xff]
        %v463 = vld [vmem:[%s311 + $0xa0] sm:$0xff]
        %v464 = vld [vmem:[%s311 + $0xa8] sm:$0xff]
        %v465 = vld [vmem:[%s311 + $0xb0] sm:$0xff]
        %v466 = vld [vmem:[%s311 + $0xb8] sm:$0xff]
        %v467 = vld [vmem:[%s311 + $0xc0] sm:$0xff]
        %v468 = vld [vmem:[%s311 + $0xc8] sm:$0xff]
        %v469 = vld [vmem:[%s311 + $0xd0] sm:$0xff]
        %v470 = vld [vmem:[%s311 + $0xd8] sm:$0xff]
        %v471 = vld [vmem:[%s311 + $0xe0] sm:$0xff]
        %v472 = vld [vmem:[%s311 + $0xe8] sm:$0xff]
        %v473 = vld [vmem:[%s311 + $0xf0] sm:$0xff]
        %v474 = vld [vmem:[%s311 + $0xf8] sm:$0xff]
        %v475 = vld [vmem:[%s320] sm:$0xf]
        %v476 = vld [vmem:[%s320 + $0x4] sm:$0xf]
        %v477 = vld [vmem:[%s320 + $0x8] sm:$0xf]
        %v478 = vld [vmem:[%s320 + $0xc] sm:$0xf]
        %v479 = vld [vmem:[%s320 + $0x10] sm:$0xf]
        %v480 = vld [vmem:[%s320 + $0x14] sm:$0xf]
        %v481 = vld [vmem:[%s320 + $0x18] sm:$0xf]
        %v482 = vld [vmem:[%s320 + $0x1c] sm:$0xf]
        %v483 = vld [vmem:[%s320 + $0x20] sm:$0xf]
        %v484 = vld [vmem:[%s320 + $0x24] sm:$0xf]
        %v485 = vld [vmem:[%s320 + $0x28] sm:$0xf]
        %v486 = vld [vmem:[%s320 + $0x2c] sm:$0xf]
        %v487 = vld [vmem:[%s320 + $0x30] sm:$0xf]
        %v488 = vld [vmem:[%s320 + $0x34] sm:$0xf]
        %v489 = vld [vmem:[%s320 + $0x38] sm:$0xf]
        %v490 = vld [vmem:[%s320 + $0x3c] sm:$0xf]
        %v491 = vld [vmem:[%s320 + $0x40] sm:$0xf]
        %v492 = vld [vmem:[%s320 + $0x44] sm:$0xf]
        %v493 = vld [vmem:[%s320 + $0x48] sm:$0xf]
        %v494 = vld [vmem:[%s320 + $0x4c] sm:$0xf]
        %v495 = vld [vmem:[%s320 + $0x50] sm:$0xf]
        %v496 = vld [vmem:[%s320 + $0x54] sm:$0xf]
        %v497 = vld [vmem:[%s320 + $0x58] sm:$0xf]
        %v498 = vld [vmem:[%s320 + $0x5c] sm:$0xf]
        %v499 = vld [vmem:[%s320 + $0x60] sm:$0xf]
        %v500 = vld [vmem:[%s320 + $0x64] sm:$0xf]
        %v501 = vld [vmem:[%s320 + $0x68] sm:$0xf]
        %v502 = vld [vmem:[%s320 + $0x6c] sm:$0xf]
        %v503 = vld [vmem:[%s320 + $0x70] sm:$0xf]
        %v504 = vld [vmem:[%s320 + $0x74] sm:$0xf]
        %v505 = vld [vmem:[%s320 + $0x78] sm:$0xf]
        %v506 = vld [vmem:[%s320 + $0x7c] sm:$0xf]
        %v539 = vunpack.c.l.b16 %v443
        %v540 = vunpack.c.h.b16 %v443
        %v541 = vunpack.c.l.b16 %v444
        %v542 = vunpack.c.h.b16 %v444
        %v543 = vunpack.c.l.b16 %v445
        %v544 = vunpack.c.h.b16 %v445
        %v545 = vunpack.c.l.b16 %v446
        %v546 = vunpack.c.h.b16 %v446
        %v547 = vunpack.c.l.b16 %v447
        %v548 = vunpack.c.h.b16 %v447
        %v549 = vunpack.c.l.b16 %v448
        %v550 = vunpack.c.h.b16 %v448
        %v551 = vunpack.c.l.b16 %v449
        %v552 = vunpack.c.h.b16 %v449
        %v553 = vunpack.c.l.b16 %v450
        %v554 = vunpack.c.h.b16 %v450
        %v555 = vunpack.c.l.b16 %v451
        %v556 = vunpack.c.h.b16 %v451
        %v557 = vunpack.c.l.b16 %v452
        %v558 = vunpack.c.h.b16 %v452
        %v559 = vunpack.c.l.b16 %v453
        %v560 = vunpack.c.h.b16 %v453
        %v561 = vunpack.c.l.b16 %v454
        %v562 = vunpack.c.h.b16 %v454
        %v563 = vunpack.c.l.b16 %v455
        %v564 = vunpack.c.h.b16 %v455
        %v565 = vunpack.c.l.b16 %v456
        %v566 = vunpack.c.h.b16 %v456
        %v567 = vunpack.c.l.b16 %v457
        %v568 = vunpack.c.h.b16 %v457
        %v569 = vunpack.c.l.b16 %v458
        %v570 = vunpack.c.h.b16 %v458
        %v571 = vunpack.c.l.b16 %v459
        %v572 = vunpack.c.h.b16 %v459
        %v573 = vunpack.c.l.b16 %v460
        %v574 = vunpack.c.h.b16 %v460
        %v575 = vunpack.c.l.b16 %v461
        %v576 = vunpack.c.h.b16 %v461
        %v577 = vunpack.c.l.b16 %v462
        %v578 = vunpack.c.h.b16 %v462
        %v579 = vunpack.c.l.b16 %v463
        %v580 = vunpack.c.h.b16 %v463
        %v581 = vunpack.c.l.b16 %v464
        %v582 = vunpack.c.h.b16 %v464
        %v583 = vunpack.c.l.b16 %v465
        %v584 = vunpack.c.h.b16 %v465
        %v585 = vunpack.c.l.b16 %v466
        %v586 = vunpack.c.h.b16 %v466
        %v587 = vunpack.c.l.b16 %v467
        %v588 = vunpack.c.h.b16 %v467
        %v589 = vunpack.c.l.b16 %v468
        %v590 = vunpack.c.h.b16 %v468
        %v591 = vunpack.c.l.b16 %v469
        %v592 = vunpack.c.h.b16 %v469
        %v593 = vunpack.c.l.b16 %v470
        %v594 = vunpack.c.h.b16 %v470
        %v595 = vunpack.c.l.b16 %v471
        %v596 = vunpack.c.h.b16 %v471
        %v597 = vunpack.c.l.b16 %v472
        %v598 = vunpack.c.h.b16 %v472
        %v599 = vunpack.c.l.b16 %v473
        %v600 = vunpack.c.h.b16 %v473
        %v601 = vunpack.c.l.b16 %v474
        %v602 = vunpack.c.h.b16 %v474
        %v603 = vpack.c.b16 %v541, %v539
        %v604 = vpack.c.b16 %v542, %v540
        %v605 = vpack.c.b16 %v545, %v543
        %v606 = vpack.c.b16 %v546, %v544
        %v607 = vpack.c.b16 %v549, %v547
        %v608 = vpack.c.b16 %v550, %v548
        %v609 = vpack.c.b16 %v553, %v551
        %v610 = vpack.c.b16 %v554, %v552
        %v611 = vpack.c.b16 %v557, %v555
        %v612 = vpack.c.b16 %v558, %v556
        %v613 = vpack.c.b16 %v561, %v559
        %v614 = vpack.c.b16 %v562, %v560
        %v615 = vpack.c.b16 %v565, %v563
        %v616 = vpack.c.b16 %v566, %v564
        %v617 = vpack.c.b16 %v569, %v567
        %v618 = vpack.c.b16 %v570, %v568
        %v619 = vpack.c.b16 %v573, %v571
        %v620 = vpack.c.b16 %v574, %v572
        %v621 = vpack.c.b16 %v577, %v575
        %v622 = vpack.c.b16 %v578, %v576
        %v623 = vpack.c.b16 %v581, %v579
        %v624 = vpack.c.b16 %v582, %v580
        %v625 = vpack.c.b16 %v585, %v583
        %v626 = vpack.c.b16 %v586, %v584
        %v627 = vpack.c.b16 %v589, %v587
        %v628 = vpack.c.b16 %v590, %v588
        %v629 = vpack.c.b16 %v593, %v591
        %v630 = vpack.c.b16 %v594, %v592
        %v631 = vpack.c.b16 %v597, %v595
        %v632 = vpack.c.b16 %v598, %v596
        %v633 = vpack.c.b16 %v601, %v599
        %v634 = vpack.c.b16 %v602, %v600
        %v699 = vunpack.c.l.b16 %v475
        %v700 = vunpack.c.l.b16 %v476
        %v701 = vunpack.c.l.b16 %v477
        %v702 = vunpack.c.l.b16 %v478
        %v703 = vunpack.c.l.b16 %v479
        %v704 = vunpack.c.l.b16 %v480
        %v705 = vunpack.c.l.b16 %v481
        %v706 = vunpack.c.l.b16 %v482
        %v707 = vunpack.c.l.b16 %v483
        %v708 = vunpack.c.l.b16 %v484
        %v709 = vunpack.c.l.b16 %v485
        %v710 = vunpack.c.l.b16 %v486
        %v711 = vunpack.c.l.b16 %v487
        %v712 = vunpack.c.l.b16 %v488
        %v713 = vunpack.c.l.b16 %v489
        %v714 = vunpack.c.l.b16 %v490
        %v715 = vunpack.c.l.b16 %v491
        %v716 = vunpack.c.l.b16 %v492
        %v717 = vunpack.c.l.b16 %v493
        %v718 = vunpack.c.l.b16 %v494
        %v719 = vunpack.c.l.b16 %v495
        %v720 = vunpack.c.l.b16 %v496
        %v721 = vunpack.c.l.b16 %v497
        %v722 = vunpack.c.l.b16 %v498
        %v723 = vunpack.c.l.b16 %v499
        %v724 = vunpack.c.l.b16 %v500
        %v725 = vunpack.c.l.b16 %v501
        %v726 = vunpack.c.l.b16 %v502
        %v727 = vunpack.c.l.b16 %v503
        %v728 = vunpack.c.l.b16 %v504
        %v729 = vunpack.c.l.b16 %v505
        %v730 = vunpack.c.l.b16 %v506
        %v731 = vpack.c.b16 %v700, %v699
        %v732 = vpack.c.b16 %v702, %v701
        %v733 = vpack.c.b16 %v704, %v703
        %v734 = vpack.c.b16 %v706, %v705
        %v735 = vpack.c.b16 %v708, %v707
        %v736 = vpack.c.b16 %v710, %v709
        %v737 = vpack.c.b16 %v712, %v711
        %v738 = vpack.c.b16 %v714, %v713
        %v739 = vpack.c.b16 %v716, %v715
        %v740 = vpack.c.b16 %v718, %v717
        %v741 = vpack.c.b16 %v720, %v719
        %v742 = vpack.c.b16 %v722, %v721
        %v743 = vpack.c.b16 %v724, %v723
        %v744 = vpack.c.b16 %v726, %v725
        %v745 = vpack.c.b16 %v728, %v727
        %v746 = vpack.c.b16 %v730, %v729
        %763 = vmatprep.subr.bf16.mxu0 0
        %764 = vmatpush1.bf16.msra.mxu0 %v731
        %765 = vmatprep.subr.bf16.mxu0 0
        %766 = vmatpush1.bf16.msra.mxu0 %v732
        %767 = vmatprep.subr.bf16.mxu0 0
        %768 = vmatpush1.bf16.msra.mxu0 %v733
        %769 = vmatprep.subr.bf16.mxu0 0
        %770 = vmatpush1.bf16.msra.mxu0 %v734
        %771 = vmatprep.subr.bf16.mxu0 0
        %772 = vmatpush1.bf16.msra.mxu0 %v735
        %773 = vmatprep.subr.bf16.mxu0 0
        %774 = vmatpush1.bf16.msra.mxu0 %v736
        %775 = vmatprep.subr.bf16.mxu0 0
        %776 = vmatpush1.bf16.msra.mxu0 %v737
        %777 = vmatprep.subr.bf16.mxu0 0
        %778 = vmatpush1.bf16.msra.mxu0 %v738
        %779 = vmatprep.subr.bf16.mxu0 0
        %780 = vmatpush1.bf16.msra.mxu0 %v739
        %781 = vmatprep.subr.bf16.mxu0 0
        %782 = vmatpush1.bf16.msra.mxu0 %v740
        %783 = vmatprep.subr.bf16.mxu0 0
        %784 = vmatpush1.bf16.msra.mxu0 %v741
        %785 = vmatprep.subr.bf16.mxu0 0
        %786 = vmatpush1.bf16.msra.mxu0 %v742
        %787 = vmatprep.subr.bf16.mxu0 0
        %788 = vmatpush1.bf16.msra.mxu0 %v743
        %789 = vmatprep.subr.bf16.mxu0 0
        %790 = vmatpush1.bf16.msra.mxu0 %v744
        %791 = vmatprep.subr.bf16.mxu0 0
        %792 = vmatpush1.bf16.msra.mxu0 %v745
        %793 = vmatprep.subr.bf16.mxu0 0
        %794 = vmatpush1.bf16.msra.mxu0 %v746
        %795 = vmatprep.mubr.bf16.mxu0 %v604
        %796 = vmatmul.mubr.bf16.gmra.mrb[0].mxu0 %v603
        %v797 = vpop.f32.mrb[0].mxu0
        %v798 = vadd.f32 0.0, %v797
        %v799 = vpop.f32.mrb[0].mxu0
        %v800 = vpop.f32.mrb[0].mxu0
        %v801 = vadd.f32 0.0, %v800
        %v802 = vpop.f32.mrb[0].mxu0
        %803 = vmatprep.mubr.bf16.mxu0 %v606
        %804 = vmatmul.mubr.bf16.gmra.mrb[0].mxu0 %v605
        %v805 = vpop.f32.mrb[0].mxu0
        %v806 = vadd.f32 0.0, %v805
        %v807 = vpop.f32.mrb[0].mxu0
        %v808 = vpop.f32.mrb[0].mxu0
        %v809 = vadd.f32 0.0, %v808
        %v810 = vpop.f32.mrb[0].mxu0
        %811 = vmatprep.mubr.bf16.mxu0 %v608
        %812 = vmatmul.mubr.bf16.gmra.mrb[0].mxu0 %v607
        %v813 = vpop.f32.mrb[0].mxu0
        %v814 = vadd.f32 0.0, %v813
        %v815 = vpop.f32.mrb[0].mxu0
        %v816 = vpop.f32.mrb[0].mxu0
        %v817 = vadd.f32 0.0, %v816
        %v818 = vpop.f32.mrb[0].mxu0
        %819 = vmatprep.mubr.bf16.mxu0 %v610
        %820 = vmatmul.mubr.bf16.gmra.mrb[0].mxu0 %v609
        %v821 = vpop.f32.mrb[0].mxu0
        %v822 = vadd.f32 0.0, %v821
        %v823 = vpop.f32.mrb[0].mxu0
        %v824 = vpop.f32.mrb[0].mxu0
        %v825 = vadd.f32 0.0, %v824
        %v826 = vpop.f32.mrb[0].mxu0
        %827 = vmatprep.mubr.bf16.mxu0 %v612
        %828 = vmatmul.mubr.bf16.gmra.mrb[0].mxu0 %v611
        %v829 = vpop.f32.mrb[0].mxu0
        %v830 = vadd.f32 0.0, %v829
        %v831 = vpop.f32.mrb[0].mxu0
        %v832 = vpop.f32.mrb[0].mxu0
        %v833 = vadd.f32 0.0, %v832
        %v834 = vpop.f32.mrb[0].mxu0
        %835 = vmatprep.mubr.bf16.mxu0 %v614
        %836 = vmatmul.mubr.bf16.gmra.mrb[0].mxu0 %v613
        %v837 = vpop.f32.mrb[0].mxu0
        %v838 = vadd.f32 0.0, %v837
        %v839 = vpop.f32.mrb[0].mxu0
        %v840 = vpop.f32.mrb[0].mxu0
        %v841 = vadd.f32 0.0, %v840
        %v842 = vpop.f32.mrb[0].mxu0
        %843 = vmatprep.mubr.bf16.mxu0 %v616
        %844 = vmatmul.mubr.bf16.gmra.mrb[0].mxu0 %v615
        %v845 = vpop.f32.mrb[0].mxu0
        %v846 = vadd.f32 0.0, %v845
        %v847 = vpop.f32.mrb[0].mxu0
        %v848 = vpop.f32.mrb[0].mxu0
        %v849 = vadd.f32 0.0, %v848
        %v850 = vpop.f32.mrb[0].mxu0
        %851 = vmatprep.mubr.bf16.mxu0 %v618
        %852 = vmatmul.mubr.bf16.gmra.mrb[0].mxu0 %v617
        %v853 = vpop.f32.mrb[0].mxu0
        %v854 = vadd.f32 0.0, %v853
        %v855 = vpop.f32.mrb[0].mxu0
        %v856 = vpop.f32.mrb[0].mxu0
        %v857 = vadd.f32 0.0, %v856
        %v858 = vpop.f32.mrb[0].mxu0
        %859 = vmatprep.mubr.bf16.mxu0 %v620
        %860 = vmatmul.mubr.bf16.gmra.mrb[0].mxu0 %v619
        %v861 = vpop.f32.mrb[0].mxu0
        %v862 = vadd.f32 0.0, %v861
        %v863 = vpop.f32.mrb[0].mxu0
        %v864 = vpop.f32.mrb[0].mxu0
        %v865 = vadd.f32 0.0, %v864
        %v866 = vpop.f32.mrb[0].mxu0
        %867 = vmatprep.mubr.bf16.mxu0 %v622
        %868 = vmatmul.mubr.bf16.gmra.mrb[0].mxu0 %v621
        %v869 = vpop.f32.mrb[0].mxu0
        %v870 = vadd.f32 0.0, %v869
        %v871 = vpop.f32.mrb[0].mxu0
        %v872 = vpop.f32.mrb[0].mxu0
        %v873 = vadd.f32 0.0, %v872
        %v874 = vpop.f32.mrb[0].mxu0
        %875 = vmatprep.mubr.bf16.mxu0 %v624
        %876 = vmatmul.mubr.bf16.gmra.mrb[0].mxu0 %v623
        %v877 = vpop.f32.mrb[0].mxu0
        %v878 = vadd.f32 0.0, %v877
        %v879 = vpop.f32.mrb[0].mxu0
        %v880 = vpop.f32.mrb[0].mxu0
        %v881 = vadd.f32 0.0, %v880
        %v882 = vpop.f32.mrb[0].mxu0
        %883 = vmatprep.mubr.bf16.mxu0 %v626
        %884 = vmatmul.mubr.bf16.gmra.mrb[0].mxu0 %v625
        %v885 = vpop.f32.mrb[0].mxu0
        %v886 = vadd.f32 0.0, %v885
        %v887 = vpop.f32.mrb[0].mxu0
        %v888 = vpop.f32.mrb[0].mxu0
        %v889 = vadd.f32 0.0, %v888
        %v890 = vpop.f32.mrb[0].mxu0
        %891 = vmatprep.mubr.bf16.mxu0 %v628
        %892 = vmatmul.mubr.bf16.gmra.mrb[0].mxu0 %v627
        %v893 = vpop.f32.mrb[0].mxu0
        %v894 = vadd.f32 0.0, %v893
        %v895 = vpop.f32.mrb[0].mxu0
        %v896 = vpop.f32.mrb[0].mxu0
        %v897 = vadd.f32 0.0, %v896
        %v898 = vpop.f32.mrb[0].mxu0
        %899 = vmatprep.mubr.bf16.mxu0 %v630
        %900 = vmatmul.mubr.bf16.gmra.mrb[0].mxu0 %v629
        %v901 = vpop.f32.mrb[0].mxu0
        %v902 = vadd.f32 0.0, %v901
        %v903 = vpop.f32.mrb[0].mxu0
        %v904 = vpop.f32.mrb[0].mxu0
        %v905 = vadd.f32 0.0, %v904
        %v906 = vpop.f32.mrb[0].mxu0
        %907 = vmatprep.mubr.bf16.mxu0 %v632
        %908 = vmatmul.mubr.bf16.gmra.mrb[0].mxu0 %v631
        %v909 = vpop.f32.mrb[0].mxu0
        %v910 = vadd.f32 0.0, %v909
        %v911 = vpop.f32.mrb[0].mxu0
        %v912 = vpop.f32.mrb[0].mxu0
        %v913 = vadd.f32 0.0, %v912
        %v914 = vpop.f32.mrb[0].mxu0
        %915 = vmatprep.mubr.bf16.mxu0 %v634
        %916 = vmatmul.mubr.bf16.gmra.mrb[0].mxu0 %v633
        %v917 = vpop.f32.mrb[0].mxu0
        %v918 = vadd.f32 0.0, %v917
        %v919 = vpop.f32.mrb[0].mxu0
        %v920 = vpop.f32.mrb[0].mxu0
        %v921 = vadd.f32 0.0, %v920
        %v922 = vpop.f32.mrb[0].mxu0
        %923 = vdwg.mxu0
        %v924 = vadd.f32 %v411, %v798
        %v925 = vadd.f32 %v412, %v801
        %v926 = vadd.f32 %v413, %v806
        %v927 = vadd.f32 %v414, %v809
        %v928 = vadd.f32 %v415, %v814
        %v929 = vadd.f32 %v416, %v817
        %v930 = vadd.f32 %v417, %v822
        %v931 = vadd.f32 %v418, %v825
        %v932 = vadd.f32 %v419, %v830
        %v933 = vadd.f32 %v420, %v833
        %v934 = vadd.f32 %v421, %v838
        %v935 = vadd.f32 %v422, %v841
        %v936 = vadd.f32 %v423, %v846
        %v937 = vadd.f32 %v424, %v849
        %v938 = vadd.f32 %v425, %v854
        %v939 = vadd.f32 %v426, %v857
        %v940 = vadd.f32 %v427, %v862
        %v941 = vadd.f32 %v428, %v865
        %v942 = vadd.f32 %v429, %v870
        %v943 = vadd.f32 %v430, %v873
        %v944 = vadd.f32 %v431, %v878
        %v945 = vadd.f32 %v432, %v881
        %v946 = vadd.f32 %v433, %v886
        %v947 = vadd.f32 %v434, %v889
        %v948 = vadd.f32 %v435, %v894
        %v949 = vadd.f32 %v436, %v897
        %v950 = vadd.f32 %v437, %v902
        %v951 = vadd.f32 %v438, %v905
        %v952 = vadd.f32 %v439, %v910
        %v953 = vadd.f32 %v440, %v913
        %v954 = vadd.f32 %v441, %v918
        %v955 = vadd.f32 %v442, %v921
        %956 = vst [vmem:[#allocation2] sm:$0xff] %v924
        %957 = vst [vmem:[#allocation2 + $0x8] sm:$0xff] %v925
        %958 = vst [vmem:[#allocation2 + $0x10] sm:$0xff] %v926
        %959 = vst [vmem:[#allocation2 + $0x18] sm:$0xff] %v927
        %960 = vst [vmem:[#allocation2 + $0x20] sm:$0xff] %v928
        %961 = vst [vmem:[#allocation2 + $0x28] sm:$0xff] %v929
        %962 = vst [vmem:[#allocation2 + $0x30] sm:$0xff] %v930
        %963 = vst [vmem:[#allocation2 + $0x38] sm:$0xff] %v931
        %964 = vst [vmem:[#allocation2 + $0x40] sm:$0xff] %v932
        %965 = vst [vmem:[#allocation2 + $0x48] sm:$0xff] %v933
        %966 = vst [vmem:[#allocation2 + $0x50] sm:$0xff] %v934
        %967 = vst [vmem:[#allocation2 + $0x58] sm:$0xff] %v935
        %968 = vst [vmem:[#allocation2 + $0x60] sm:$0xff] %v936
        %969 = vst [vmem:[#allocation2 + $0x68] sm:$0xff] %v937
        %970 = vst [vmem:[#allocation2 + $0x70] sm:$0xff] %v938
        %971 = vst [vmem:[#allocation2 + $0x78] sm:$0xff] %v939
        %972 = vst [vmem:[#allocation2 + $0x80] sm:$0xff] %v940
        %973 = vst [vmem:[#allocation2 + $0x88] sm:$0xff] %v941
        %974 = vst [vmem:[#allocation2 + $0x90] sm:$0xff] %v942
        %975 = vst [vmem:[#allocation2 + $0x98] sm:$0xff] %v943
        %976 = vst [vmem:[#allocation2 + $0xa0] sm:$0xff] %v944
        %977 = vst [vmem:[#allocation2 + $0xa8] sm:$0xff] %v945
        %978 = vst [vmem:[#allocation2 + $0xb0] sm:$0xff] %v946
        %979 = vst [vmem:[#allocation2 + $0xb8] sm:$0xff] %v947
        %980 = vst [vmem:[#allocation2 + $0xc0] sm:$0xff] %v948
        %981 = vst [vmem:[#allocation2 + $0xc8] sm:$0xff] %v949
        %982 = vst [vmem:[#allocation2 + $0xd0] sm:$0xff] %v950
        %983 = vst [vmem:[#allocation2 + $0xd8] sm:$0xff] %v951
        %984 = vst [vmem:[#allocation2 + $0xe0] sm:$0xff] %v952
        %985 = vst [vmem:[#allocation2 + $0xe8] sm:$0xff] %v953
        %986 = vst [vmem:[#allocation2 + $0xf0] sm:$0xff] %v954
        %987 = vst [vmem:[#allocation2 + $0xf8] sm:$0xff] %v955
        %p988 = scmp.eq.s32.totalorder %s36, 1
        // Predicated region
        $region57: #{eigen_mlp_bn_forward.9} parent=35 // pred_check
          %p989 = pneg %p988
        $region58: #{eigen_mlp_bn_forward.9} parent=35 // pred_check_branch
          %991 = sbr.rel (%p989) target = $region60
        $region59: #{eigen_mlp_bn_forward.9} parent=35 // pred_region
          %v992 = vld [vmem:[#allocation2] sm:$0xff]
          %v993 = vld [vmem:[#allocation2 + $0x8] sm:$0xff]
          %v994 = vld [vmem:[#allocation2 + $0x10] sm:$0xff]
          %v995 = vld [vmem:[#allocation2 + $0x18] sm:$0xff]
          %v996 = vld [vmem:[#allocation2 + $0x20] sm:$0xff]
          %v997 = vld [vmem:[#allocation2 + $0x28] sm:$0xff]
          %v998 = vld [vmem:[#allocation2 + $0x30] sm:$0xff]
          %v999 = vld [vmem:[#allocation2 + $0x38] sm:$0xff]
          %v1000 = vld [vmem:[#allocation2 + $0x40] sm:$0xff]
          %v1001 = vld [vmem:[#allocation2 + $0x48] sm:$0xff]
          %v1002 = vld [vmem:[#allocation2 + $0x50] sm:$0xff]
          %v1003 = vld [vmem:[#allocation2 + $0x58] sm:$0xff]
          %v1004 = vld [vmem:[#allocation2 + $0x60] sm:$0xff]
          %v1005 = vld [vmem:[#allocation2 + $0x68] sm:$0xff]
          %v1006 = vld [vmem:[#allocation2 + $0x70] sm:$0xff]
          %v1007 = vld [vmem:[#allocation2 + $0x78] sm:$0xff]
          %v1008 = vld [vmem:[#allocation2 + $0x80] sm:$0xff]
          %v1009 = vld [vmem:[#allocation2 + $0x88] sm:$0xff]
          %v1010 = vld [vmem:[#allocation2 + $0x90] sm:$0xff]
          %v1011 = vld [vmem:[#allocation2 + $0x98] sm:$0xff]
          %v1012 = vld [vmem:[#allocation2 + $0xa0] sm:$0xff]
          %v1013 = vld [vmem:[#allocation2 + $0xa8] sm:$0xff]
          %v1014 = vld [vmem:[#allocation2 + $0xb0] sm:$0xff]
          %v1015 = vld [vmem:[#allocation2 + $0xb8] sm:$0xff]
          %v1016 = vld [vmem:[#allocation2 + $0xc0] sm:$0xff]
          %v1017 = vld [vmem:[#allocation2 + $0xc8] sm:$0xff]
          %v1018 = vld [vmem:[#allocation2 + $0xd0] sm:$0xff]
          %v1019 = vld [vmem:[#allocation2 + $0xd8] sm:$0xff]
          %v1020 = vld [vmem:[#allocation2 + $0xe0] sm:$0xff]
          %v1021 = vld [vmem:[#allocation2 + $0xe8] sm:$0xff]
          %v1022 = vld [vmem:[#allocation2 + $0xf0] sm:$0xff]
          %v1023 = vld [vmem:[#allocation2 + $0xf8] sm:$0xff]
          %v1024 = vpack.c.bf16 %v993, %v992
          %v1025 = vpack.c.bf16 %v995, %v994
          %v1026 = vpack.c.bf16 %v997, %v996
          %v1027 = vpack.c.bf16 %v999, %v998
          %v1028 = vpack.c.bf16 %v1001, %v1000
          %v1029 = vpack.c.bf16 %v1003, %v1002
          %v1030 = vpack.c.bf16 %v1005, %v1004
          %v1031 = vpack.c.bf16 %v1007, %v1006
          %v1032 = vpack.c.bf16 %v1009, %v1008
          %v1033 = vpack.c.bf16 %v1011, %v1010
          %v1034 = vpack.c.bf16 %v1013, %v1012
          %v1035 = vpack.c.bf16 %v1015, %v1014
          %v1036 = vpack.c.bf16 %v1017, %v1016
          %v1037 = vpack.c.bf16 %v1019, %v1018
          %v1038 = vpack.c.bf16 %v1021, %v1020
          %v1039 = vpack.c.bf16 %v1023, %v1022
          %v1040 = vld [vmem:[#allocation8] sm:$0xf]
          %v1041 = vld [vmem:[#allocation8 + $0x4] sm:$0xf]
          %v1042 = vld [vmem:[#allocation8 + $0x8] sm:$0xf]
          %v1043 = vld [vmem:[#allocation8 + $0xc] sm:$0xf]
          %v1044 = vld [vmem:[#allocation8 + $0x10] sm:$0xf]
          %v1045 = vld [vmem:[#allocation8 + $0x14] sm:$0xf]
          %v1046 = vld [vmem:[#allocation8 + $0x18] sm:$0xf]
          %v1047 = vld [vmem:[#allocation8 + $0x1c] sm:$0xf]
          %v1048 = vld [vmem:[#allocation8 + $0x20] sm:$0xf]
          %v1049 = vld [vmem:[#allocation8 + $0x24] sm:$0xf]
          %v1050 = vld [vmem:[#allocation8 + $0x28] sm:$0xf]
          %v1051 = vld [vmem:[#allocation8 + $0x2c] sm:$0xf]
          %v1052 = vld [vmem:[#allocation8 + $0x30] sm:$0xf]
          %v1053 = vld [vmem:[#allocation8 + $0x34] sm:$0xf]
          %v1054 = vld [vmem:[#allocation8 + $0x38] sm:$0xf]
          %v1055 = vld [vmem:[#allocation8 + $0x3c] sm:$0xf]
          %v1056 = vld [vmem:[#allocation9] sm:$0x1]
          %v1058 = vlaneseq
          %v1059 = vshrl.u32 %v1058, 7
          %v1060 = vsub.s32 0, %v1059
          %v1061 = vrot.slane %v1056, %v1060
          %v1079 = vunpack.c.l.b16 %v1040
          %v1080 = vunpack.c.l.b16 %v1041
          %v1081 = vunpack.c.l.b16 %v1042
          %v1082 = vunpack.c.l.b16 %v1043
          %v1083 = vunpack.c.l.b16 %v1044
          %v1084 = vunpack.c.l.b16 %v1045
          %v1085 = vunpack.c.l.b16 %v1046
          %v1086 = vunpack.c.l.b16 %v1047
          %v1087 = vunpack.c.l.b16 %v1048
          %v1088 = vunpack.c.l.b16 %v1049
          %v1089 = vunpack.c.l.b16 %v1050
          %v1090 = vunpack.c.l.b16 %v1051
          %v1091 = vunpack.c.l.b16 %v1052
          %v1092 = vunpack.c.l.b16 %v1053
          %v1093 = vunpack.c.l.b16 %v1054
          %v1094 = vunpack.c.l.b16 %v1055
          %v1095 = vpack.c.b16 %v1080, %v1079
          %v1096 = vpack.c.b16 %v1082, %v1081
          %v1097 = vpack.c.b16 %v1084, %v1083
          %v1098 = vpack.c.b16 %v1086, %v1085
          %v1099 = vpack.c.b16 %v1088, %v1087
          %v1100 = vpack.c.b16 %v1090, %v1089
          %v1101 = vpack.c.b16 %v1092, %v1091
          %v1102 = vpack.c.b16 %v1094, %v1093
          %1111 = vmatprep.subr.bf16.mxu0 0
          %1112 = vmatpush1.bf16.msra.mxu0 %v1095
          %1113 = vmatprep.subr.bf16.mxu0 0
          %1114 = vmatpush1.bf16.msra.mxu0 %v1096
          %1115 = vmatprep.subr.bf16.mxu0 0
          %1116 = vmatpush1.bf16.msra.mxu0 %v1097
          %1117 = vmatprep.subr.bf16.mxu0 0
          %1118 = vmatpush1.bf16.msra.mxu0 %v1098
          %1119 = vmatprep.subr.bf16.mxu0 0
          %1120 = vmatpush1.bf16.msra.mxu0 %v1099
          %1121 = vmatprep.subr.bf16.mxu0 0
          %1122 = vmatpush1.bf16.msra.mxu0 %v1100
          %1123 = vmatprep.subr.bf16.mxu0 0
          %1124 = vmatpush1.bf16.msra.mxu0 %v1101
          %1125 = vmatprep.subr.bf16.mxu0 0
          %1126 = vmatpush1.bf16.msra.mxu0 %v1102
          %1127 = vmatprep.subr.bf16.mxu0 0
          %1128 = vmatpush1.bf16.msra.mxu0 0
          %1129 = vmatprep.subr.bf16.mxu0 0
          %1130 = vmatpush1.bf16.msra.mxu0 0
          %1131 = vmatprep.subr.bf16.mxu0 0
          %1132 = vmatpush1.bf16.msra.mxu0 0
          %1133 = vmatprep.subr.bf16.mxu0 0
          %1134 = vmatpush1.bf16.msra.mxu0 0
          %1135 = vmatprep.subr.bf16.mxu0 0
          %1136 = vmatpush1.bf16.msra.mxu0 0
          %1137 = vmatprep.subr.bf16.mxu0 0
          %1138 = vmatpush1.bf16.msra.mxu0 0
          %1139 = vmatprep.subr.bf16.mxu0 0
          %1140 = vmatpush1.bf16.msra.mxu0 0
          %1141 = vmatprep.subr.bf16.mxu0 0
          %1142 = vmatpush1.bf16.msra.mxu0 0
          %1143 = vmatprep.mubr.bf16.mxu0 0
          %1144 = vmatmul.mubr.bf16.gmra.mrb[0].mxu0 %v1024
          %v1145 = vpop.f32.mrb[0].mxu0
          %v1146 = vadd.f32 %v1061, %v1145
          %v1147 = vpop.f32.mrb[0].mxu0
          %v1148 = vpop.f32.mrb[0].mxu0
          %v1149 = vadd.f32 %v1061, %v1148
          %v1150 = vpop.f32.mrb[0].mxu0
          %1151 = vmatprep.mubr.bf16.mxu0 0
          %1152 = vmatmul.mubr.bf16.gmra.mrb[0].mxu0 %v1025
          %v1153 = vpop.f32.mrb[0].mxu0
          %v1154 = vadd.f32 %v1061, %v1153
          %v1155 = vpop.f32.mrb[0].mxu0
          %v1156 = vpop.f32.mrb[0].mxu0
          %v1157 = vadd.f32 %v1061, %v1156
          %v1158 = vpop.f32.mrb[0].mxu0
          %1159 = vmatprep.mubr.bf16.mxu0 0
          %1160 = vmatmul.mubr.bf16.gmra.mrb[0].mxu0 %v1026
          %v1161 = vpop.f32.mrb[0].mxu0
          %v1162 = vadd.f32 %v1061, %v1161
          %v1163 = vpop.f32.mrb[0].mxu0
          %v1164 = vpop.f32.mrb[0].mxu0
          %v1165 = vadd.f32 %v1061, %v1164
          %v1166 = vpop.f32.mrb[0].mxu0
          %1167 = vmatprep.mubr.bf16.mxu0 0
          %1168 = vmatmul.mubr.bf16.gmra.mrb[0].mxu0 %v1027
          %v1169 = vpop.f32.mrb[0].mxu0
          %v1170 = vadd.f32 %v1061, %v1169
          %v1171 = vpop.f32.mrb[0].mxu0
          %v1172 = vpop.f32.mrb[0].mxu0
          %v1173 = vadd.f32 %v1061, %v1172
          %v1174 = vpop.f32.mrb[0].mxu0
          %1175 = vmatprep.mubr.bf16.mxu0 0
          %1176 = vmatmul.mubr.bf16.gmra.mrb[0].mxu0 %v1028
          %v1177 = vpop.f32.mrb[0].mxu0
          %v1178 = vadd.f32 %v1061, %v1177
          %v1179 = vpop.f32.mrb[0].mxu0
          %v1180 = vpop.f32.mrb[0].mxu0
          %v1181 = vadd.f32 %v1061, %v1180
          %v1182 = vpop.f32.mrb[0].mxu0
          %1183 = vmatprep.mubr.bf16.mxu0 0
          %1184 = vmatmul.mubr.bf16.gmra.mrb[0].mxu0 %v1029
          %v1185 = vpop.f32.mrb[0].mxu0
          %v1186 = vadd.f32 %v1061, %v1185
          %v1187 = vpop.f32.mrb[0].mxu0
          %v1188 = vpop.f32.mrb[0].mxu0
          %v1189 = vadd.f32 %v1061, %v1188
          %v1190 = vpop.f32.mrb[0].mxu0
          %1191 = vmatprep.mubr.bf16.mxu0 0
          %1192 = vmatmul.mubr.bf16.gmra.mrb[0].mxu0 %v1030
          %v1193 = vpop.f32.mrb[0].mxu0
          %v1194 = vadd.f32 %v1061, %v1193
          %v1195 = vpop.f32.mrb[0].mxu0
          %v1196 = vpop.f32.mrb[0].mxu0
          %v1197 = vadd.f32 %v1061, %v1196
          %v1198 = vpop.f32.mrb[0].mxu0
          %1199 = vmatprep.mubr.bf16.mxu0 0
          %1200 = vmatmul.mubr.bf16.gmra.mrb[0].mxu0 %v1031
          %v1201 = vpop.f32.mrb[0].mxu0
          %v1202 = vadd.f32 %v1061, %v1201
          %v1203 = vpop.f32.mrb[0].mxu0
          %v1204 = vpop.f32.mrb[0].mxu0
          %v1205 = vadd.f32 %v1061, %v1204
          %v1206 = vpop.f32.mrb[0].mxu0
          %1207 = vmatprep.mubr.bf16.mxu0 0
          %1208 = vmatmul.mubr.bf16.gmra.mrb[0].mxu0 %v1032
          %v1209 = vpop.f32.mrb[0].mxu0
          %v1210 = vadd.f32 %v1061, %v1209
          %v1211 = vpop.f32.mrb[0].mxu0
          %v1212 = vpop.f32.mrb[0].mxu0
          %v1213 = vadd.f32 %v1061, %v1212
          %v1214 = vpop.f32.mrb[0].mxu0
          %1215 = vmatprep.mubr.bf16.mxu0 0
          %1216 = vmatmul.mubr.bf16.gmra.mrb[0].mxu0 %v1033
          %v1217 = vpop.f32.mrb[0].mxu0
          %v1218 = vadd.f32 %v1061, %v1217
          %v1219 = vpop.f32.mrb[0].mxu0
          %v1220 = vpop.f32.mrb[0].mxu0
          %v1221 = vadd.f32 %v1061, %v1220
          %v1222 = vpop.f32.mrb[0].mxu0
          %1223 = vmatprep.mubr.bf16.mxu0 0
          %1224 = vmatmul.mubr.bf16.gmra.mrb[0].mxu0 %v1034
          %v1225 = vpop.f32.mrb[0].mxu0
          %v1226 = vadd.f32 %v1061, %v1225
          %v1227 = vpop.f32.mrb[0].mxu0
          %v1228 = vpop.f32.mrb[0].mxu0
          %v1229 = vadd.f32 %v1061, %v1228
          %v1230 = vpop.f32.mrb[0].mxu0
          %1231 = vmatprep.mubr.bf16.mxu0 0
          %1232 = vmatmul.mubr.bf16.gmra.mrb[0].mxu0 %v1035
          %v1233 = vpop.f32.mrb[0].mxu0
          %v1234 = vadd.f32 %v1061, %v1233
          %v1235 = vpop.f32.mrb[0].mxu0
          %v1236 = vpop.f32.mrb[0].mxu0
          %v1237 = vadd.f32 %v1061, %v1236
          %v1238 = vpop.f32.mrb[0].mxu0
          %1239 = vmatprep.mubr.bf16.mxu0 0
          %1240 = vmatmul.mubr.bf16.gmra.mrb[0].mxu0 %v1036
          %v1241 = vpop.f32.mrb[0].mxu0
          %v1242 = vadd.f32 %v1061, %v1241
          %v1243 = vpop.f32.mrb[0].mxu0
          %v1244 = vpop.f32.mrb[0].mxu0
          %v1245 = vadd.f32 %v1061, %v1244
          %v1246 = vpop.f32.mrb[0].mxu0
          %1247 = vmatprep.mubr.bf16.mxu0 0
          %1248 = vmatmul.mubr.bf16.gmra.mrb[0].mxu0 %v1037
          %v1249 = vpop.f32.mrb[0].mxu0
          %v1250 = vadd.f32 %v1061, %v1249
          %v1251 = vpop.f32.mrb[0].mxu0
          %v1252 = vpop.f32.mrb[0].mxu0
          %v1253 = vadd.f32 %v1061, %v1252
          %v1254 = vpop.f32.mrb[0].mxu0
          %1255 = vmatprep.mubr.bf16.mxu0 0
          %1256 = vmatmul.mubr.bf16.gmra.mrb[0].mxu0 %v1038
          %v1257 = vpop.f32.mrb[0].mxu0
          %v1258 = vadd.f32 %v1061, %v1257
          %v1259 = vpop.f32.mrb[0].mxu0
          %v1260 = vpop.f32.mrb[0].mxu0
          %v1261 = vadd.f32 %v1061, %v1260
          %v1262 = vpop.f32.mrb[0].mxu0
          %1263 = vmatprep.mubr.bf16.mxu0 0
          %1264 = vmatmul.mubr.bf16.gmra.mrb[0].mxu0 %v1039
          %v1265 = vpop.f32.mrb[0].mxu0
          %v1266 = vadd.f32 %v1061, %v1265
          %v1267 = vpop.f32.mrb[0].mxu0
          %v1268 = vpop.f32.mrb[0].mxu0
          %v1269 = vadd.f32 %v1061, %v1268
          %v1270 = vpop.f32.mrb[0].mxu0
          %1271 = vdwg.mxu0
          %1272 = vst [vmem:[%s357] sm:$0xff] %v1146
          %1273 = vst [vmem:[%s357 + $0x8] sm:$0xff] %v1149
          %1274 = vst [vmem:[%s357 + $0x10] sm:$0xff] %v1154
          %1275 = vst [vmem:[%s357 + $0x18] sm:$0xff] %v1157
          %1276 = vst [vmem:[%s357 + $0x20] sm:$0xff] %v1162
          %1277 = vst [vmem:[%s357 + $0x28] sm:$0xff] %v1165
          %1278 = vst [vmem:[%s357 + $0x30] sm:$0xff] %v1170
          %1279 = vst [vmem:[%s357 + $0x38] sm:$0xff] %v1173
          %1280 = vst [vmem:[%s357 + $0x40] sm:$0xff] %v1178
          %1281 = vst [vmem:[%s357 + $0x48] sm:$0xff] %v1181
          %1282 = vst [vmem:[%s357 + $0x50] sm:$0xff] %v1186
          %1283 = vst [vmem:[%s357 + $0x58] sm:$0xff] %v1189
          %1284 = vst [vmem:[%s357 + $0x60] sm:$0xff] %v1194
          %1285 = vst [vmem:[%s357 + $0x68] sm:$0xff] %v1197
          %1286 = vst [vmem:[%s357 + $0x70] sm:$0xff] %v1202
          %1287 = vst [vmem:[%s357 + $0x78] sm:$0xff] %v1205
          %1288 = vst [vmem:[%s357 + $0x80] sm:$0xff] %v1210
          %1289 = vst [vmem:[%s357 + $0x88] sm:$0xff] %v1213
          %1290 = vst [vmem:[%s357 + $0x90] sm:$0xff] %v1218
          %1291 = vst [vmem:[%s357 + $0x98] sm:$0xff] %v1221
          %1292 = vst [vmem:[%s357 + $0xa0] sm:$0xff] %v1226
          %1293 = vst [vmem:[%s357 + $0xa8] sm:$0xff] %v1229
          %1294 = vst [vmem:[%s357 + $0xb0] sm:$0xff] %v1234
          %1295 = vst [vmem:[%s357 + $0xb8] sm:$0xff] %v1237
          %1296 = vst [vmem:[%s357 + $0xc0] sm:$0xff] %v1242
          %1297 = vst [vmem:[%s357 + $0xc8] sm:$0xff] %v1245
          %1298 = vst [vmem:[%s357 + $0xd0] sm:$0xff] %v1250
          %1299 = vst [vmem:[%s357 + $0xd8] sm:$0xff] %v1253
          %1300 = vst [vmem:[%s357 + $0xe0] sm:$0xff] %v1258
          %1301 = vst [vmem:[%s357 + $0xe8] sm:$0xff] %v1261
          %1302 = vst [vmem:[%s357 + $0xf0] sm:$0xff] %v1266
          %1303 = vst [vmem:[%s357 + $0xf8] sm:$0xff] %v1269
          %v1304 = vlaneseq
          %v1305 = vshrl.u32 %v1304, 7
          %v1306 = vadd.s32 %v1305, 8
          %v1307 = vadd.s32 %v1305, 16
          %v1308 = vadd.s32 %v1305, 24
          %v1309 = vadd.s32 %v1305, 32
          %v1310 = vadd.s32 %v1305, 40
          %v1311 = vadd.s32 %v1305, 48
          %v1312 = vadd.s32 %v1305, 56
          %v1313 = vadd.s32 %v1305, 64
          %v1314 = vadd.s32 %v1305, 72
          %v1315 = vadd.s32 %v1305, 80
          %v1316 = vadd.s32 %v1305, 88
          %v1317 = vadd.s32 %v1305, 96
          %v1318 = vadd.s32 %v1305, 104
          %v1319 = vadd.s32 %v1305, 112
          %v1320 = vadd.s32 %v1305, 120
          %v1321 = vadd.s32 %v1305, 128
          %v1322 = vadd.s32 %v1305, 136
          %v1323 = vadd.s32 %v1305, 144
          %v1324 = vadd.s32 %v1305, 152
          %v1325 = vadd.s32 %v1305, 160
          %v1326 = vadd.s32 %v1305, 168
          %v1327 = vadd.s32 %v1305, 176
          %v1328 = vadd.s32 %v1305, 184
          %v1329 = vadd.s32 %v1305, 192
          %v1330 = vadd.s32 %v1305, 200
          %v1331 = vadd.s32 %v1305, 208
          %v1332 = vadd.s32 %v1305, 216
          %v1333 = vadd.s32 %v1305, 224
          %v1334 = vadd.s32 %v1305, 232
          %v1335 = vadd.s32 %v1305, 240
          %v1336 = vadd.s32 %v1305, 248
          %s1337 = smul.u32 %s35, 256
          %v1338 = vstv %s1337
          %v1339 = vadd.s32 %v1305, %v1338
          %v1340 = vadd.s32 %v1306, %v1338
          %v1341 = vadd.s32 %v1307, %v1338
          %v1342 = vadd.s32 %v1308, %v1338
          %v1343 = vadd.s32 %v1309, %v1338
          %v1344 = vadd.s32 %v1310, %v1338
          %v1345 = vadd.s32 %v1311, %v1338
          %v1346 = vadd.s32 %v1312, %v1338
          %v1347 = vadd.s32 %v1313, %v1338
          %v1348 = vadd.s32 %v1314, %v1338
          %v1349 = vadd.s32 %v1315, %v1338
          %v1350 = vadd.s32 %v1316, %v1338
          %v1351 = vadd.s32 %v1317, %v1338
          %v1352 = vadd.s32 %v1318, %v1338
          %v1353 = vadd.s32 %v1319, %v1338
          %v1354 = vadd.s32 %v1320, %v1338
          %v1355 = vadd.s32 %v1321, %v1338
          %v1356 = vadd.s32 %v1322, %v1338
          %v1357 = vadd.s32 %v1323, %v1338
          %v1358 = vadd.s32 %v1324, %v1338
          %v1359 = vadd.s32 %v1325, %v1338
          %v1360 = vadd.s32 %v1326, %v1338
          %v1361 = vadd.s32 %v1327, %v1338
          %v1362 = vadd.s32 %v1328, %v1338
          %v1363 = vadd.s32 %v1329, %v1338
          %v1364 = vadd.s32 %v1330, %v1338
          %v1365 = vadd.s32 %v1331, %v1338
          %v1366 = vadd.s32 %v1332, %v1338
          %v1367 = vadd.s32 %v1333, %v1338
          %v1368 = vadd.s32 %v1334, %v1338
          %v1369 = vadd.s32 %v1335, %v1338
          %v1370 = vadd.s32 %v1336, %v1338
          %vm1371 = vcmp.lt.s32.totalorder %v1339, 300
          %vm1372 = vcmp.lt.s32.totalorder %v1340, 300
          %vm1373 = vcmp.lt.s32.totalorder %v1341, 300
          %vm1374 = vcmp.lt.s32.totalorder %v1342, 300
          %vm1375 = vcmp.lt.s32.totalorder %v1343, 300
          %vm1376 = vcmp.lt.s32.totalorder %v1344, 300
          %vm1377 = vcmp.lt.s32.totalorder %v1345, 300
          %vm1378 = vcmp.lt.s32.totalorder %v1346, 300
          %vm1379 = vcmp.lt.s32.totalorder %v1347, 300
          %vm1380 = vcmp.lt.s32.totalorder %v1348, 300
          %vm1381 = vcmp.lt.s32.totalorder %v1349, 300
          %vm1382 = vcmp.lt.s32.totalorder %v1350, 300
          %vm1383 = vcmp.lt.s32.totalorder %v1351, 300
          %vm1384 = vcmp.lt.s32.totalorder %v1352, 300
          %vm1385 = vcmp.lt.s32.totalorder %v1353, 300
          %vm1386 = vcmp.lt.s32.totalorder %v1354, 300
          %vm1387 = vcmp.lt.s32.totalorder %v1355, 300
          %vm1388 = vcmp.lt.s32.totalorder %v1356, 300
          %vm1389 = vcmp.lt.s32.totalorder %v1357, 300
          %vm1390 = vcmp.lt.s32.totalorder %v1358, 300
          %vm1391 = vcmp.lt.s32.totalorder %v1359, 300
          %vm1392 = vcmp.lt.s32.totalorder %v1360, 300
          %vm1393 = vcmp.lt.s32.totalorder %v1361, 300
          %vm1394 = vcmp.lt.s32.totalorder %v1362, 300
          %vm1395 = vcmp.lt.s32.totalorder %v1363, 300
          %vm1396 = vcmp.lt.s32.totalorder %v1364, 300
          %vm1397 = vcmp.lt.s32.totalorder %v1365, 300
          %vm1398 = vcmp.lt.s32.totalorder %v1366, 300
          %vm1399 = vcmp.lt.s32.totalorder %v1367, 300
          %vm1400 = vcmp.lt.s32.totalorder %v1368, 300
          %vm1401 = vcmp.lt.s32.totalorder %v1369, 300
          %vm1402 = vcmp.lt.s32.totalorder %v1370, 300
          %v1403 = vsel %vm1371, %v1146, 0.0
          %v1404 = vsel %vm1372, %v1149, 0.0
          %v1405 = vsel %vm1373, %v1154, 0.0
          %v1406 = vsel %vm1374, %v1157, 0.0
          %v1407 = vsel %vm1375, %v1162, 0.0
          %v1408 = vsel %vm1376, %v1165, 0.0
          %v1409 = vsel %vm1377, %v1170, 0.0
          %v1410 = vsel %vm1378, %v1173, 0.0
          %v1411 = vsel %vm1379, %v1178, 0.0
          %v1412 = vsel %vm1380, %v1181, 0.0
          %v1413 = vsel %vm1381, %v1186, 0.0
          %v1414 = vsel %vm1382, %v1189, 0.0
          %v1415 = vsel %vm1383, %v1194, 0.0
          %v1416 = vsel %vm1384, %v1197, 0.0
          %v1417 = vsel %vm1385, %v1202, 0.0
          %v1418 = vsel %vm1386, %v1205, 0.0
          %v1419 = vsel %vm1387, %v1210, 0.0
          %v1420 = vsel %vm1388, %v1213, 0.0
          %v1421 = vsel %vm1389, %v1218, 0.0
          %v1422 = vsel %vm1390, %v1221, 0.0
          %v1423 = vsel %vm1391, %v1226, 0.0
          %v1424 = vsel %vm1392, %v1229, 0.0
          %v1425 = vsel %vm1393, %v1234, 0.0
          %v1426 = vsel %vm1394, %v1237, 0.0
          %v1427 = vsel %vm1395, %v1242, 0.0
          %v1428 = vsel %vm1396, %v1245, 0.0
          %v1429 = vsel %vm1397, %v1250, 0.0
          %v1430 = vsel %vm1398, %v1253, 0.0
          %v1431 = vsel %vm1399, %v1258, 0.0
          %v1432 = vsel %vm1400, %v1261, 0.0
          %v1433 = vsel %vm1401, %v1266, 0.0
          %v1434 = vsel %vm1402, %v1269, 0.0
          %v1435 = vadd.f32 %v1403, %v1404
          %v1436 = vadd.f32 %v1435, %v1405
          %v1437 = vadd.f32 %v1436, %v1406
          %v1438 = vadd.f32 %v1437, %v1407
          %v1439 = vadd.f32 %v1438, %v1408
          %v1440 = vadd.f32 %v1439, %v1409
          %v1441 = vadd.f32 %v1440, %v1410
          %v1442 = vadd.f32 %v1441, %v1411
          %v1443 = vadd.f32 %v1442, %v1412
          %v1444 = vadd.f32 %v1443, %v1413
          %v1445 = vadd.f32 %v1444, %v1414
          %v1446 = vadd.f32 %v1445, %v1415
          %v1447 = vadd.f32 %v1446, %v1416
          %v1448 = vadd.f32 %v1447, %v1417
          %v1449 = vadd.f32 %v1448, %v1418
          %v1450 = vadd.f32 %v1449, %v1419
          %v1451 = vadd.f32 %v1450, %v1420
          %v1452 = vadd.f32 %v1451, %v1421
          %v1453 = vadd.f32 %v1452, %v1422
          %v1454 = vadd.f32 %v1453, %v1423
          %v1455 = vadd.f32 %v1454, %v1424
          %v1456 = vadd.f32 %v1455, %v1425
          %v1457 = vadd.f32 %v1456, %v1426
          %v1458 = vadd.f32 %v1457, %v1427
          %v1459 = vadd.f32 %v1458, %v1428
          %v1460 = vadd.f32 %v1459, %v1429
          %v1461 = vadd.f32 %v1460, %v1430
          %v1462 = vadd.f32 %v1461, %v1431
          %v1463 = vadd.f32 %v1462, %v1432
          %v1464 = vadd.f32 %v1463, %v1433
          %v1465 = vadd.f32 %v1464, %v1434
          %v1466 = vrot.slane %v1465, 4
          %v1467 = vadd.f32 %v1465, %v1466
          %v1468 = vrot.slane %v1467, 2
          %v1469 = vadd.f32 %v1467, %v1468
          %v1470 = vrot.slane %v1469, 1
          %v1471 = vadd.f32 %v1469, %v1470
          %1472 = vst [vmem:[%s363] sm:$0x1] %v1471
          %v1473 = vmul.f32 %v1403, %v1403
          %v1474 = vmul.f32 %v1404, %v1404
          %v1475 = vmul.f32 %v1405, %v1405
          %v1476 = vmul.f32 %v1406, %v1406
          %v1477 = vmul.f32 %v1407, %v1407
          %v1478 = vmul.f32 %v1408, %v1408
          %v1479 = vmul.f32 %v1409, %v1409
          %v1480 = vmul.f32 %v1410, %v1410
          %v1481 = vmul.f32 %v1411, %v1411
          %v1482 = vmul.f32 %v1412, %v1412
          %v1483 = vmul.f32 %v1413, %v1413
          %v1484 = vmul.f32 %v1414, %v1414
          %v1485 = vmul.f32 %v1415, %v1415
          %v1486 = vmul.f32 %v1416, %v1416
          %v1487 = vmul.f32 %v1417, %v1417
          %v1488 = vmul.f32 %v1418, %v1418
          %v1489 = vmul.f32 %v1419, %v1419
          %v1490 = vmul.f32 %v1420, %v1420
          %v1491 = vmul.f32 %v1421, %v1421
          %v1492 = vmul.f32 %v1422, %v1422
          %v1493 = vmul.f32 %v1423, %v1423
          %v1494 = vmul.f32 %v1424, %v1424
          %v1495 = vmul.f32 %v1425, %v1425
          %v1496 = vmul.f32 %v1426, %v1426
          %v1497 = vmul.f32 %v1427, %v1427
          %v1498 = vmul.f32 %v1428, %v1428
          %v1499 = vmul.f32 %v1429, %v1429
          %v1500 = vmul.f32 %v1430, %v1430
          %v1501 = vmul.f32 %v1431, %v1431
          %v1502 = vmul.f32 %v1432, %v1432
          %v1503 = vmul.f32 %v1433, %v1433
          %v1504 = vmul.f32 %v1434, %v1434
          %v1505 = vadd.f32 %v1473, %v1474
          %v1506 = vadd.f32 %v1505, %v1475
          %v1507 = vadd.f32 %v1506, %v1476
          %v1508 = vadd.f32 %v1507, %v1477
          %v1509 = vadd.f32 %v1508, %v1478
          %v1510 = vadd.f32 %v1509, %v1479
          %v1511 = vadd.f32 %v1510, %v1480
          %v1512 = vadd.f32 %v1511, %v1481
          %v1513 = vadd.f32 %v1512, %v1482
          %v1514 = vadd.f32 %v1513, %v1483
          %v1515 = vadd.f32 %v1514, %v1484
          %v1516 = vadd.f32 %v1515, %v1485
          %v1517 = vadd.f32 %v1516, %v1486
          %v1518 = vadd.f32 %v1517, %v1487
          %v1519 = vadd.f32 %v1518, %v1488
          %v1520 = vadd.f32 %v1519, %v1489
          %v1521 = vadd.f32 %v1520, %v1490
          %v1522 = vadd.f32 %v1521, %v1491
          %v1523 = vadd.f32 %v1522, %v1492
          %v1524 = vadd.f32 %v1523, %v1493
          %v1525 = vadd.f32 %v1524, %v1494
          %v1526 = vadd.f32 %v1525, %v1495
          %v1527 = vadd.f32 %v1526, %v1496
          %v1528 = vadd.f32 %v1527, %v1497
          %v1529 = vadd.f32 %v1528, %v1498
          %v1530 = vadd.f32 %v1529, %v1499
          %v1531 = vadd.f32 %v1530, %v1500
          %v1532 = vadd.f32 %v1531, %v1501
          %v1533 = vadd.f32 %v1532, %v1502
          %v1534 = vadd.f32 %v1533, %v1503
          %v1535 = vadd.f32 %v1534, %v1504
          %v1536 = vrot.slane %v1535, 4
          %v1537 = vadd.f32 %v1535, %v1536
          %v1538 = vrot.slane %v1537, 2
          %v1539 = vadd.f32 %v1537, %v1538
          %v1540 = vrot.slane %v1539, 1
          %v1541 = vadd.f32 %v1539, %v1540
          %1542 = vst [vmem:[%s369] sm:$0x1] %v1541
        $region60: #{eigen_mlp_bn_forward.9} parent=35 // pred_fallthru
          _
        %s1543 = sand.u32 %s147, 1
        %s1544 = scalar_lea.sflag [#allocation5], %s1543
        %s1545 = sand.u32 %s147, 1
        %s1546 = smul.addr %s1545, 256
        %s1547 = scalar_lea.vmem [#allocation11], %s1546
        %s1548 = sand.u32 %s31, 1
        %s1549 = scalar_lea.sflag [#allocation13], %s1548
        %s1550 = sand.u32 %s173, 1
        %s1551 = scalar_lea.vmem [#allocation12], %s1550
        %s1552 = sand.u32 %s31, 1
        %s1553 = scalar_lea.sflag [#allocation13], %s1552
        %s1554 = sand.u32 %s199, 1
        %s1555 = scalar_lea.vmem [#allocation14], %s1554
        // Predicated region
        $region61: #{eigen_mlp_bn_forward.9} parent=35 // pred_check
          %p1556 = pneg %p157
        $region62: #{eigen_mlp_bn_forward.9} parent=35 // pred_check_branch
          %1558 = sbr.rel (%p1556) target = $region64
        $region63: #{eigen_mlp_bn_forward.9} parent=35 // pred_region
          %s1559 = smul.u32 32, %s35
          %s1561 = ssub.s32 4096, 4096
          %1562 = vsyncadd %s1544, %s1561
          %s1563 = smul.addr %s1559, 128
          %s1564 = scalar_lea.hbm %s4, %s1563
          %s1565 = sshll.u32 %s1547, 4
          %s1566 = int_to_ptr.vmem [resolvable:$true] %s1565
          %1571 = dma.vmem_to_hbm [thread:$0]  %s1566, 4096, %s1564, %s1544, 128, 128, 8
        $region64: #{eigen_mlp_bn_forward.9} parent=35 // pred_fallthru
          _
        // Predicated region
        $region65: #{eigen_mlp_bn_forward.9} parent=35 // pred_check
          %p1572 = pneg %p183
        $region66: #{eigen_mlp_bn_forward.9} parent=35 // pred_check_branch
          %1574 = sbr.rel (%p1572) target = $region68
        $region67: #{eigen_mlp_bn_forward.9} parent=35 // pred_region
          %s1576 = ssub.s32 16, 16
          %1577 = vsyncadd %s1549, %s1576
          %s1578 = smul.addr %s35, 16
          %s1579 = scalar_lea.hbm %s5, %s1578
          %s1581 = sshll.u32 %s1551, 4
          %s1582 = int_to_ptr.vmem [resolvable:$true] %s1581
          %1584 = dma.vmem_to_hbm [thread:$0]  %s1582, 16, %s1579, %s1549
        $region68: #{eigen_mlp_bn_forward.9} parent=35 // pred_fallthru
          _
        // Predicated region
        $region69: #{eigen_mlp_bn_forward.9} parent=35 // pred_check
          %p1585 = pneg %p209
        $region70: #{eigen_mlp_bn_forward.9} parent=35 // pred_check_branch
          %1587 = sbr.rel (%p1585) target = $region72
        $region71: #{eigen_mlp_bn_forward.9} parent=35 // pred_region
          %s1589 = ssub.s32 16, 16
          %1590 = vsyncadd %s1553, %s1589
          %s1591 = smul.addr %s35, 16
          %s1592 = scalar_lea.hbm %s6, %s1591
          %s1594 = sshll.u32 %s1555, 4
          %s1595 = int_to_ptr.vmem [resolvable:$true] %s1594
          %1597 = dma.vmem_to_hbm [thread:$0]  %s1595, 16, %s1592, %s1553
        $region72: #{eigen_mlp_bn_forward.9} parent=35 // pred_fallthru
          _
      $region36: #{eigen_mlp_bn_forward.9} parent=5 // pred_fallthru
        _
      %p1598 = scmp.le.s32.totalorder 2, %s26
      // Predicated region
      $region73: #{eigen_mlp_bn_forward.9} parent=5 // pred_check
        %p1599 = pneg %p1598
      $region74: #{eigen_mlp_bn_forward.9} parent=5 // pred_check_branch
        %1601 = sbr.rel (%p1599) target = $region76
      $region75: #{eigen_mlp_bn_forward.9} parent=5 // pred_region
        %s1602 = ssub.s32 %s26, 2
        // Predicated region
        $region77: #{eigen_mlp_bn_forward.9} parent=75 // pred_check
          %p1603 = pneg %p163
        $region78: #{eigen_mlp_bn_forward.9} parent=75 // pred_check_branch
          %1605 = sbr.rel (%p1603) target = $region80
        $region79: #{eigen_mlp_bn_forward.9} parent=75 // pred_region
          %s1606 = sand.u32 %s148, 1
          %s1607 = scalar_lea.sflag [#allocation5], %s1606
          %s1608 = sand.u32 %s148, 1
          %s1609 = smul.addr %s1608, 256
          %s1610 = scalar_lea.vmem [#allocation11], %s1609
          %1611 = dma.done %s1607, 4096
        $region80: #{eigen_mlp_bn_forward.9} parent=75 // pred_fallthru
          _
        // Predicated region
        $region81: #{eigen_mlp_bn_forward.9} parent=75 // pred_check
          %p1612 = pneg %p189
        $region82: #{eigen_mlp_bn_forward.9} parent=75 // pred_check_branch
          %1614 = sbr.rel (%p1612) target = $region84
        $region83: #{eigen_mlp_bn_forward.9} parent=75 // pred_region
          %s1615 = sand.u32 %s32, 1
          %s1616 = scalar_lea.sflag [#allocation13], %s1615
          %s1617 = sand.u32 %s174, 1
          %s1618 = scalar_lea.vmem [#allocation12], %s1617
          %1619 = dma.done %s1616, 16
        $region84: #{eigen_mlp_bn_forward.9} parent=75 // pred_fallthru
          _
        // Predicated region
        $region85: #{eigen_mlp_bn_forward.9} parent=75 // pred_check
          %p1620 = pneg %p215
        $region86: #{eigen_mlp_bn_forward.9} parent=75 // pred_check_branch
          %1622 = sbr.rel (%p1620) target = $region88
        $region87: #{eigen_mlp_bn_forward.9} parent=75 // pred_region
          %s1623 = sand.u32 %s32, 1
          %s1624 = scalar_lea.sflag [#allocation13], %s1623
          %s1625 = sand.u32 %s200, 1
          %s1626 = scalar_lea.vmem [#allocation14], %s1625
          %1627 = dma.done %s1624, 16
        $region88: #{eigen_mlp_bn_forward.9} parent=75 // pred_fallthru
          _
      $region76: #{eigen_mlp_bn_forward.9} parent=5 // pred_fallthru
        _
    $region6: #{eigen_mlp_bn_forward.9} parent=1 // loop_footer
      %s30 = sadd.s32 1, %s26
    $region7: #{eigen_mlp_bn_forward.9} parent=1 // loop_footer_branch
      %25 = sbr.rel target = $region3
    $region8: #{eigen_mlp_bn_forward.9} parent=1 // loop_exit
      _
    %1628 = vsyncpa [#allocation4], 1
    %s1629 = scalar_lea.sflag [#allocation4], 1
    %1630 = vsyncpa %s1629, 1
    %1631 = vsyncpa [#allocation7], 1
    %s1632 = scalar_lea.sflag [#allocation7], 1
    %1633 = vsyncpa %s1632, 1
    %1634 = vsyncpa [#allocation10], 1
    %1635 = vsyncpa [#allocation5], 1
    %s1636 = scalar_lea.sflag [#allocation5], 1
    %1637 = vsyncpa %s1636, 1
    %1638 = vsyncpa [#allocation13], 1
    %s1639 = scalar_lea.sflag [#allocation13], 1
    %1640 = vsyncpa %s1639, 1

// kernel: eigen_mlp_bn_forward.14
$region0: #{eigen_mlp_bn_forward.14}
  #allocation0 [shape = 'u32[]', space=smem, size = 0x4, offset = 0x4, fixed_abs, tag = 'smem constant byte address 0x4 - core index']
  #allocation1 [shape = 'u32[144,128]{1,0:T(1,128)}', space=vmem, size = 0x12000, scoped, tag = 'internal scratch']
  %s0 = inlined_call_operand.hbm [shape: f32[512,128], index: 0, kind: input, shape index: {}]
  %s1 = inlined_call_operand.hbm [shape: f32[1,128], index: 1, kind: input, shape index: {}]
  %s2 = inlined_call_operand.hbm [shape: f32[1,128], index: 2, kind: input, shape index: {}]
  %s3 = inlined_call_operand.hbm [shape: f32[512,128], index: 3, kind: output, shape index: {}]
  %s4 = sld [smem:[#allocation0]]
  $region34: #{eigen_mlp_bn_forward.14} parent=0
    _
  %s6 = ssub.s32 1, %s4
  %s7 = scalar_select 0, %s6, %s4
  $region1: #{eigen_mlp_bn_forward.14} parent=0
    #allocation2 [shape = 'u8[262144]{0}', space=vmem, size = 0x40000, scoped, tag = 'input window, operand 0, single buffered']
    #allocation3 [shape = 's32[1]{0}', space=sflag, size = 0x4, scoped, tag = 'scoped memory for eigen_mlp_bn_forward.14']
    #allocation4 [shape = 's32[1]{0}', space=sflag, size = 0x4, scoped, tag = 'scoped memory for eigen_mlp_bn_forward.14']
    #allocation5 [shape = 'u8[512]{0}', space=vmem, size = 0x400, scoped, tag = 'input window, operand 1, single buffered']
    #allocation6 [shape = 's32[1]{0}', space=sflag, size = 0x4, scoped, tag = 'scoped memory for eigen_mlp_bn_forward.14']
    #allocation7 [shape = 'u8[512]{0}', space=vmem, size = 0x400, scoped, tag = 'input window, operand 2, single buffered']
    #allocation8 [shape = 'u8[262144]{0}', space=vmem, size = 0x40000, scoped, tag = 'output window, operand 0, single buffered']
    %8 = vsyncpa [#allocation3], 0
    %9 = vsyncpa [#allocation6], 0
    %10 = vsyncpa [#allocation4], 0
    // Predicated region
    $region2: #{eigen_mlp_bn_forward.14} parent=1 // pred_check
      _
    $region3: #{eigen_mlp_bn_forward.14} parent=1 // pred_check_branch
      %12 = sbr.rel (0) target = $region5
    $region4: #{eigen_mlp_bn_forward.14} parent=1 // pred_region
      %s14 = ssub.s32 8192, 8192
      %15 = vsyncadd [#allocation3], %s14
      %s16 = sshll.u32 [#allocation2], 4
      %s17 = int_to_ptr.vmem [resolvable:$true] %s16
      %22 = dma.hbm_to_vmem [thread:$0]  %s0, 8192, %s17, [#allocation3], 128, 128, 8
    $region5: #{eigen_mlp_bn_forward.14} parent=1 // pred_fallthru
      _
    // Predicated region
    $region6: #{eigen_mlp_bn_forward.14} parent=1 // pred_check
      _
    $region7: #{eigen_mlp_bn_forward.14} parent=1 // pred_check_branch
      %24 = sbr.rel (0) target = $region9
    $region8: #{eigen_mlp_bn_forward.14} parent=1 // pred_region
      %s26 = ssub.s32 16, 16
      %27 = vsyncadd [#allocation6], %s26
      %s29 = sshll.u32 [#allocation5], 4
      %s30 = int_to_ptr.vmem [resolvable:$true] %s29
      %32 = dma.hbm_to_vmem [thread:$0]  %s1, 16, %s30, [#allocation6]
    $region9: #{eigen_mlp_bn_forward.14} parent=1 // pred_fallthru
      _
    // Predicated region
    $region10: #{eigen_mlp_bn_forward.14} parent=1 // pred_check
      _
    $region11: #{eigen_mlp_bn_forward.14} parent=1 // pred_check_branch
      %34 = sbr.rel (0) target = $region13
    $region12: #{eigen_mlp_bn_forward.14} parent=1 // pred_region
      %s36 = ssub.s32 16, 16
      %37 = vsyncadd [#allocation6], %s36
      %s39 = sshll.u32 [#allocation7], 4
      %s40 = int_to_ptr.vmem [resolvable:$true] %s39
      %42 = dma.hbm_to_vmem [thread:$0]  %s2, 16, %s40, [#allocation6]
    $region13: #{eigen_mlp_bn_forward.14} parent=1 // pred_fallthru
      _
    // Predicated region
    $region14: #{eigen_mlp_bn_forward.14} parent=1 // pred_check
      _
    $region15: #{eigen_mlp_bn_forward.14} parent=1 // pred_check_branch
      %44 = sbr.rel (0) target = $region17
    $region16: #{eigen_mlp_bn_forward.14} parent=1 // pred_region
      %45 = dma.done [#allocation3], 8192
    $region17: #{eigen_mlp_bn_forward.14} parent=1 // pred_fallthru
      _
    // Predicated region
    $region18: #{eigen_mlp_bn_forward.14} parent=1 // pred_check
      _
    $region19: #{eigen_mlp_bn_forward.14} parent=1 // pred_check_branch
      %47 = sbr.rel (0) target = $region21
    $region20: #{eigen_mlp_bn_forward.14} parent=1 // pred_region
      %48 = dma.done [#allocation6], 16
    $region21: #{eigen_mlp_bn_forward.14} parent=1 // pred_fallthru
      _
    // Predicated region
    $region22: #{eigen_mlp_bn_forward.14} parent=1 // pred_check
      _
    $region23: #{eigen_mlp_bn_forward.14} parent=1 // pred_check_branch
      %50 = sbr.rel (0) target = $region25
    $region24: #{eigen_mlp_bn_forward.14} parent=1 // pred_region
      %51 = dma.done [#allocation6], 16
    $region25: #{eigen_mlp_bn_forward.14} parent=1 // pred_fallthru
      _
    %v52 = vld [vmem:[#allocation2] sm:$0xff]
    %v53 = vld [vmem:[#allocation2 + $0x8] sm:$0xff]
    %v54 = vld [vmem:[#allocation2 + $0x10] sm:$0xff]
    %v55 = vld [vmem:[#allocation2 + $0x18] sm:$0xff]
    %v56 = vld [vmem:[#allocation2 + $0x20] sm:$0xff]
    %v57 = vld [vmem:[#allocation2 + $0x28] sm:$0xff]
    %v58 = vld [vmem:[#allocation2 + $0x30] sm:$0xff]
    %v59 = vld [vmem:[#allocation2 + $0x38] sm:$0xff]
    %v60 = vld [vmem:[#allocation2 + $0x40] sm:$0xff]
    %v61 = vld [vmem:[#allocation2 + $0x48] sm:$0xff]
    %v62 = vld [vmem:[#allocation2 + $0x50] sm:$0xff]
    %v63 = vld [vmem:[#allocation2 + $0x58] sm:$0xff]
    %v64 = vld [vmem:[#allocation2 + $0x60] sm:$0xff]
    %v65 = vld [vmem:[#allocation2 + $0x68] sm:$0xff]
    %v66 = vld [vmem:[#allocation2 + $0x70] sm:$0xff]
    %v67 = vld [vmem:[#allocation2 + $0x78] sm:$0xff]
    %v68 = vld [vmem:[#allocation2 + $0x80] sm:$0xff]
    %v69 = vld [vmem:[#allocation2 + $0x88] sm:$0xff]
    %v70 = vld [vmem:[#allocation2 + $0x90] sm:$0xff]
    %v71 = vld [vmem:[#allocation2 + $0x98] sm:$0xff]
    %v72 = vld [vmem:[#allocation2 + $0xa0] sm:$0xff]
    %v73 = vld [vmem:[#allocation2 + $0xa8] sm:$0xff]
    %v74 = vld [vmem:[#allocation2 + $0xb0] sm:$0xff]
    %v75 = vld [vmem:[#allocation2 + $0xb8] sm:$0xff]
    %v76 = vld [vmem:[#allocation2 + $0xc0] sm:$0xff]
    %v77 = vld [vmem:[#allocation2 + $0xc8] sm:$0xff]
    %v78 = vld [vmem:[#allocation2 + $0xd0] sm:$0xff]
    %v79 = vld [vmem:[#allocation2 + $0xd8] sm:$0xff]
    %v80 = vld [vmem:[#allocation2 + $0xe0] sm:$0xff]
    %v81 = vld [vmem:[#allocation2 + $0xe8] sm:$0xff]
    %v82 = vld [vmem:[#allocation2 + $0xf0] sm:$0xff]
    %v83 = vld [vmem:[#allocation2 + $0xf8] sm:$0xff]
    %v84 = vld [vmem:[#allocation2 + $0x100] sm:$0xff]
    %v85 = vld [vmem:[#allocation2 + $0x108] sm:$0xff]
    %v86 = vld [vmem:[#allocation2 + $0x110] sm:$0xff]
    %v87 = vld [vmem:[#allocation2 + $0x118] sm:$0xff]
    %v88 = vld [vmem:[#allocation2 + $0x120] sm:$0xff]
    %v89 = vld [vmem:[#allocation2 + $0x128] sm:$0xff]
    %v90 = vld [vmem:[#allocation2 + $0x130] sm:$0xff]
    %v91 = vld [vmem:[#allocation2 + $0x138] sm:$0xff]
    %v92 = vld [vmem:[#allocation2 + $0x140] sm:$0xff]
    %v93 = vld [vmem:[#allocation2 + $0x148] sm:$0xff]
    %v94 = vld [vmem:[#allocation2 + $0x150] sm:$0xff]
    %v95 = vld [vmem:[#allocation2 + $0x158] sm:$0xff]
    %v96 = vld [vmem:[#allocation2 + $0x160] sm:$0xff]
    %v97 = vld [vmem:[#allocation2 + $0x168] sm:$0xff]
    %v98 = vld [vmem:[#allocation2 + $0x170] sm:$0xff]
    %v99 = vld [vmem:[#allocation2 + $0x178] sm:$0xff]
    %v100 = vld [vmem:[#allocation2 + $0x180] sm:$0xff]
    %v101 = vld [vmem:[#allocation2 + $0x188] sm:$0xff]
    %v102 = vld [vmem:[#allocation2 + $0x190] sm:$0xff]
    %v103 = vld [vmem:[#allocation2 + $0x198] sm:$0xff]
    %v104 = vld [vmem:[#allocation2 + $0x1a0] sm:$0xff]
    %v105 = vld [vmem:[#allocation2 + $0x1a8] sm:$0xff]
    %v106 = vld [vmem:[#allocation2 + $0x1b0] sm:$0xff]
    %v107 = vld [vmem:[#allocation2 + $0x1b8] sm:$0xff]
    %v108 = vld [vmem:[#allocation2 + $0x1c0] sm:$0xff]
    %v109 = vld [vmem:[#allocation2 + $0x1c8] sm:$0xff]
    %v110 = vld [vmem:[#allocation2 + $0x1d0] sm:$0xff]
    %v111 = vld [vmem:[#allocation2 + $0x1d8] sm:$0xff]
    %v112 = vld [vmem:[#allocation2 + $0x1e0] sm:$0xff]
    %v113 = vld [vmem:[#allocation2 + $0x1e8] sm:$0xff]
    %v114 = vld [vmem:[#allocation2 + $0x1f0] sm:$0xff]
    %v115 = vld [vmem:[#allocation2 + $0x1f8] sm:$0xff]
    %v116 = vld [vmem:[#allocation5] sm:$0x1]
    %v118 = vlaneseq
    %v119 = vshrl.u32 %v118, 7
    %v120 = vsub.s32 0, %v119
    %v121 = vrot.slane %v116, %v120
    %v123 = vmul.f32 %v52, %v121
    %v124 = vmul.f32 %v53, %v121
    %v125 = vmul.f32 %v54, %v121
    %v126 = vmul.f32 %v55, %v121
    %v127 = vmul.f32 %v56, %v121
    %v128 = vmul.f32 %v57, %v121
    %v129 = vmul.f32 %v58, %v121
    %v130 = vmul.f32 %v59, %v121
    %v131 = vmul.f32 %v60, %v121
    %v132 = vmul.f32 %v61, %v121
    %v133 = vmul.f32 %v62, %v121
    %v134 = vmul.f32 %v63, %v121
    %v135 = vmul.f32 %v64, %v121
    %v136 = vmul.f32 %v65, %v121
    %v137 = vmul.f32 %v66, %v121
    %v138 = vmul.f32 %v67, %v121
    %v139 = vmul.f32 %v68, %v121
    %v140 = vmul.f32 %v69, %v121
    %v141 = vmul.f32 %v70, %v121
    %v142 = vmul.f32 %v71, %v121
    %v143 = vmul.f32 %v72, %v121
    %v144 = vmul.f32 %v73, %v121
    %v145 = vmul.f32 %v74, %v121
    %v146 = vmul.f32 %v75, %v121
    %v147 = vmul.f32 %v76, %v121
    %v148 = vmul.f32 %v77, %v121
    %v149 = vmul.f32 %v78, %v121
    %v150 = vmul.f32 %v79, %v121
    %v151 = vmul.f32 %v80, %v121
    %v152 = vmul.f32 %v81, %v121
    %v153 = vmul.f32 %v82, %v121
    %v154 = vmul.f32 %v83, %v121
    %v155 = vmul.f32 %v84, %v121
    %v156 = vmul.f32 %v85, %v121
    %v157 = vmul.f32 %v86, %v121
    %v158 = vmul.f32 %v87, %v121
    %v159 = vmul.f32 %v88, %v121
    %v160 = vmul.f32 %v89, %v121
    %v161 = vmul.f32 %v90, %v121
    %v162 = vmul.f32 %v91, %v121
    %v163 = vmul.f32 %v92, %v121
    %v164 = vmul.f32 %v93, %v121
    %v165 = vmul.f32 %v94, %v121
    %v166 = vmul.f32 %v95, %v121
    %v167 = vmul.f32 %v96, %v121
    %v168 = vmul.f32 %v97, %v121
    %v169 = vmul.f32 %v98, %v121
    %v170 = vmul.f32 %v99, %v121
    %v171 = vmul.f32 %v100, %v121
    %v172 = vmul.f32 %v101, %v121
    %v173 = vmul.f32 %v102, %v121
    %v174 = vmul.f32 %v103, %v121
    %v175 = vmul.f32 %v104, %v121
    %v176 = vmul.f32 %v105, %v121
    %v177 = vmul.f32 %v106, %v121
    %v178 = vmul.f32 %v107, %v121
    %v179 = vmul.f32 %v108, %v121
    %v180 = vmul.f32 %v109, %v121
    %v181 = vmul.f32 %v110, %v121
    %v182 = vmul.f32 %v111, %v121
    %v183 = vmul.f32 %v112, %v121
    %v184 = vmul.f32 %v113, %v121
    %v185 = vmul.f32 %v114, %v121
    %v186 = vmul.f32 %v115, %v121
    %v187 = vld [vmem:[#allocation7] sm:$0x1]
    %v189 = vlaneseq
    %v190 = vshrl.u32 %v189, 7
    %v191 = vsub.s32 0, %v190
    %v192 = vrot.slane %v187, %v191
    %v194 = vadd.f32 %v123, %v192
    %v195 = vadd.f32 %v124, %v192
    %v196 = vadd.f32 %v125, %v192
    %v197 = vadd.f32 %v126, %v192
    %v198 = vadd.f32 %v127, %v192
    %v199 = vadd.f32 %v128, %v192
    %v200 = vadd.f32 %v129, %v192
    %v201 = vadd.f32 %v130, %v192
    %v202 = vadd.f32 %v131, %v192
    %v203 = vadd.f32 %v132, %v192
    %v204 = vadd.f32 %v133, %v192
    %v205 = vadd.f32 %v134, %v192
    %v206 = vadd.f32 %v135, %v192
    %v207 = vadd.f32 %v136, %v192
    %v208 = vadd.f32 %v137, %v192
    %v209 = vadd.f32 %v138, %v192
    %v210 = vadd.f32 %v139, %v192
    %v211 = vadd.f32 %v140, %v192
    %v212 = vadd.f32 %v141, %v192
    %v213 = vadd.f32 %v142, %v192
    %v214 = vadd.f32 %v143, %v192
    %v215 = vadd.f32 %v144, %v192
    %v216 = vadd.f32 %v145, %v192
    %v217 = vadd.f32 %v146, %v192
    %v218 = vadd.f32 %v147, %v192
    %v219 = vadd.f32 %v148, %v192
    %v220 = vadd.f32 %v149, %v192
    %v221 = vadd.f32 %v150, %v192
    %v222 = vadd.f32 %v151, %v192
    %v223 = vadd.f32 %v152, %v192
    %v224 = vadd.f32 %v153, %v192
    %v225 = vadd.f32 %v154, %v192
    %v226 = vadd.f32 %v155, %v192
    %v227 = vadd.f32 %v156, %v192
    %v228 = vadd.f32 %v157, %v192
    %v229 = vadd.f32 %v158, %v192
    %v230 = vadd.f32 %v159, %v192
    %v231 = vadd.f32 %v160, %v192
    %v232 = vadd.f32 %v161, %v192
    %v233 = vadd.f32 %v162, %v192
    %v234 = vadd.f32 %v163, %v192
    %v235 = vadd.f32 %v164, %v192
    %v236 = vadd.f32 %v165, %v192
    %v237 = vadd.f32 %v166, %v192
    %v238 = vadd.f32 %v167, %v192
    %v239 = vadd.f32 %v168, %v192
    %v240 = vadd.f32 %v169, %v192
    %v241 = vadd.f32 %v170, %v192
    %v242 = vadd.f32 %v171, %v192
    %v243 = vadd.f32 %v172, %v192
    %v244 = vadd.f32 %v173, %v192
    %v245 = vadd.f32 %v174, %v192
    %v246 = vadd.f32 %v175, %v192
    %v247 = vadd.f32 %v176, %v192
    %v248 = vadd.f32 %v177, %v192
    %v249 = vadd.f32 %v178, %v192
    %v250 = vadd.f32 %v179, %v192
    %v251 = vadd.f32 %v180, %v192
    %v252 = vadd.f32 %v181, %v192
    %v253 = vadd.f32 %v182, %v192
    %v254 = vadd.f32 %v183, %v192
    %v255 = vadd.f32 %v184, %v192
    %v256 = vadd.f32 %v185, %v192
    %v257 = vadd.f32 %v186, %v192
    %258 = vst [vmem:[#allocation8] sm:$0xff] %v194
    %259 = vst [vmem:[#allocation8 + $0x8] sm:$0xff] %v195
    %260 = vst [vmem:[#allocation8 + $0x10] sm:$0xff] %v196
    %261 = vst [vmem:[#allocation8 + $0x18] sm:$0xff] %v197
    %262 = vst [vmem:[#allocation8 + $0x20] sm:$0xff] %v198
    %263 = vst [vmem:[#allocation8 + $0x28] sm:$0xff] %v199
    %264 = vst [vmem:[#allocation8 + $0x30] sm:$0xff] %v200
    %265 = vst [vmem:[#allocation8 + $0x38] sm:$0xff] %v201
    %266 = vst [vmem:[#allocation8 + $0x40] sm:$0xff] %v202
    %267 = vst [vmem:[#allocation8 + $0x48] sm:$0xff] %v203
    %268 = vst [vmem:[#allocation8 + $0x50] sm:$0xff] %v204
    %269 = vst [vmem:[#allocation8 + $0x58] sm:$0xff] %v205
    %270 = vst [vmem:[#allocation8 + $0x60] sm:$0xff] %v206
    %271 = vst [vmem:[#allocation8 + $0x68] sm:$0xff] %v207
    %272 = vst [vmem:[#allocation8 + $0x70] sm:$0xff] %v208
    %273 = vst [vmem:[#allocation8 + $0x78] sm:$0xff] %v209
    %274 = vst [vmem:[#allocation8 + $0x80] sm:$0xff] %v210
    %275 = vst [vmem:[#allocation8 + $0x88] sm:$0xff] %v211
    %276 = vst [vmem:[#allocation8 + $0x90] sm:$0xff] %v212
    %277 = vst [vmem:[#allocation8 + $0x98] sm:$0xff] %v213
    %278 = vst [vmem:[#allocation8 + $0xa0] sm:$0xff] %v214
    %279 = vst [vmem:[#allocation8 + $0xa8] sm:$0xff] %v215
    %280 = vst [vmem:[#allocation8 + $0xb0] sm:$0xff] %v216
    %281 = vst [vmem:[#allocation8 + $0xb8] sm:$0xff] %v217
    %282 = vst [vmem:[#allocation8 + $0xc0] sm:$0xff] %v218
    %283 = vst [vmem:[#allocation8 + $0xc8] sm:$0xff] %v219
    %284 = vst [vmem:[#allocation8 + $0xd0] sm:$0xff] %v220
    %285 = vst [vmem:[#allocation8 + $0xd8] sm:$0xff] %v221
    %286 = vst [vmem:[#allocation8 + $0xe0] sm:$0xff] %v222
    %287 = vst [vmem:[#allocation8 + $0xe8] sm:$0xff] %v223
    %288 = vst [vmem:[#allocation8 + $0xf0] sm:$0xff] %v224
    %289 = vst [vmem:[#allocation8 + $0xf8] sm:$0xff] %v225
    %290 = vst [vmem:[#allocation8 + $0x100] sm:$0xff] %v226
    %291 = vst [vmem:[#allocation8 + $0x108] sm:$0xff] %v227
    %292 = vst [vmem:[#allocation8 + $0x110] sm:$0xff] %v228
    %293 = vst [vmem:[#allocation8 + $0x118] sm:$0xff] %v229
    %294 = vst [vmem:[#allocation8 + $0x120] sm:$0xff] %v230
    %295 = vst [vmem:[#allocation8 + $0x128] sm:$0xff] %v231
    %296 = vst [vmem:[#allocation8 + $0x130] sm:$0xff] %v232
    %297 = vst [vmem:[#allocation8 + $0x138] sm:$0xff] %v233
    %298 = vst [vmem:[#allocation8 + $0x140] sm:$0xff] %v234
    %299 = vst [vmem:[#allocation8 + $0x148] sm:$0xff] %v235
    %300 = vst [vmem:[#allocation8 + $0x150] sm:$0xff] %v236
    %301 = vst [vmem:[#allocation8 + $0x158] sm:$0xff] %v237
    %302 = vst [vmem:[#allocation8 + $0x160] sm:$0xff] %v238
    %303 = vst [vmem:[#allocation8 + $0x168] sm:$0xff] %v239
    %304 = vst [vmem:[#allocation8 + $0x170] sm:$0xff] %v240
    %305 = vst [vmem:[#allocation8 + $0x178] sm:$0xff] %v241
    %306 = vst [vmem:[#allocation8 + $0x180] sm:$0xff] %v242
    %307 = vst [vmem:[#allocation8 + $0x188] sm:$0xff] %v243
    %308 = vst [vmem:[#allocation8 + $0x190] sm:$0xff] %v244
    %309 = vst [vmem:[#allocation8 + $0x198] sm:$0xff] %v245
    %310 = vst [vmem:[#allocation8 + $0x1a0] sm:$0xff] %v246
    %311 = vst [vmem:[#allocation8 + $0x1a8] sm:$0xff] %v247
    %312 = vst [vmem:[#allocation8 + $0x1b0] sm:$0xff] %v248
    %313 = vst [vmem:[#allocation8 + $0x1b8] sm:$0xff] %v249
    %314 = vst [vmem:[#allocation8 + $0x1c0] sm:$0xff] %v250
    %315 = vst [vmem:[#allocation8 + $0x1c8] sm:$0xff] %v251
    %316 = vst [vmem:[#allocation8 + $0x1d0] sm:$0xff] %v252
    %317 = vst [vmem:[#allocation8 + $0x1d8] sm:$0xff] %v253
    %318 = vst [vmem:[#allocation8 + $0x1e0] sm:$0xff] %v254
    %319 = vst [vmem:[#allocation8 + $0x1e8] sm:$0xff] %v255
    %320 = vst [vmem:[#allocation8 + $0x1f0] sm:$0xff] %v256
    %321 = vst [vmem:[#allocation8 + $0x1f8] sm:$0xff] %v257
    // Predicated region
    $region26: #{eigen_mlp_bn_forward.14} parent=1 // pred_check
      _
    $region27: #{eigen_mlp_bn_forward.14} parent=1 // pred_check_branch
      %323 = sbr.rel (0) target = $region29
    $region28: #{eigen_mlp_bn_forward.14} parent=1 // pred_region
      %s325 = ssub.s32 8192, 8192
      %326 = vsyncadd [#allocation4], %s325
      %s327 = sshll.u32 [#allocation8], 4
      %s328 = int_to_ptr.vmem [resolvable:$true] %s327
      %333 = dma.vmem_to_hbm [thread:$0]  %s328, 8192, %s3, [#allocation4], 128, 128, 8
    $region29: #{eigen_mlp_bn_forward.14} parent=1 // pred_fallthru
      _
    // Predicated region
    $region30: #{eigen_mlp_bn_forward.14} parent=1 // pred_check
      _
    $region31: #{eigen_mlp_bn_forward.14} parent=1 // pred_check_branch
      %335 = sbr.rel (0) target = $region33
    $region32: #{eigen_mlp_bn_forward.14} parent=1 // pred_region
      %336 = dma.done [#allocation4], 8192
    $region33: #{eigen_mlp_bn_forward.14} parent=1 // pred_fallthru
      _
    %337 = vsyncpa [#allocation3], 1
    %338 = vsyncpa [#allocation6], 1
    %339 = vsyncpa [#allocation4], 1

// kernel: eigen_mlp_bn_forward.15
$region0: #{eigen_mlp_bn_forward.15}
  #allocation0 [shape = 'u32[]', space=smem, size = 0x4, offset = 0x4, fixed_abs, tag = 'smem constant byte address 0x4 - core index']
  #allocation1 [shape = 'u32[144,128]{1,0:T(1,128)}', space=vmem, size = 0x12000, scoped, tag = 'internal scratch']
  %s0 = inlined_call_operand.hbm [shape: f32[2,512], index: 0, kind: input, shape index: {}]
  %s1 = inlined_call_operand.hbm [shape: f32[512,128], index: 1, kind: input, shape index: {}]
  %s2 = inlined_call_operand.hbm [shape: f32[1,128], index: 2, kind: input, shape index: {}]
  %s3 = inlined_call_operand.hbm [shape: f32[2,128], index: 3, kind: output, shape index: {}]
  %s4 = sld [smem:[#allocation0]]
  $region34: #{eigen_mlp_bn_forward.15} parent=0
    _
  %s6 = ssub.s32 1, %s4
  %s7 = scalar_select 0, %s6, %s4
  $region1: #{eigen_mlp_bn_forward.15} parent=0
    #allocation2 [shape = 'u8[4096]{0}', space=vmem, size = 0x1000, scoped, tag = 'input window, operand 0, single buffered']
    #allocation3 [shape = 's32[1]{0}', space=sflag, size = 0x4, scoped, tag = 'scoped memory for eigen_mlp_bn_forward.15']
    #allocation4 [shape = 's32[1]{0}', space=sflag, size = 0x4, scoped, tag = 'scoped memory for eigen_mlp_bn_forward.15']
    #allocation5 [shape = 'u8[262144]{0}', space=vmem, size = 0x40000, scoped, tag = 'input window, operand 1, single buffered']
    #allocation6 [shape = 's32[1]{0}', space=sflag, size = 0x4, scoped, tag = 'scoped memory for eigen_mlp_bn_forward.15']
    #allocation7 [shape = 'u8[512]{0}', space=vmem, size = 0x400, scoped, tag = 'input window, operand 2, single buffered']
    #allocation8 [shape = 'u8[1024]{0}', space=vmem, size = 0x400, scoped, tag = 'output window, operand 0, single buffered']
    %8 = vsyncpa [#allocation3], 0
    %9 = vsyncpa [#allocation6], 0
    %10 = vsyncpa [#allocation4], 0
    // Predicated region
    $region2: #{eigen_mlp_bn_forward.15} parent=1 // pred_check
      _
    $region3: #{eigen_mlp_bn_forward.15} parent=1 // pred_check_branch
      %12 = sbr.rel (0) target = $region5
    $region4: #{eigen_mlp_bn_forward.15} parent=1 // pred_region
      %s14 = ssub.s32 128, 128
      %15 = vsyncadd [#allocation3], %s14
      %s17 = sshll.u32 [#allocation2], 4
      %s18 = int_to_ptr.vmem [resolvable:$true] %s17
      %20 = dma.hbm_to_vmem [thread:$0]  %s0, 128, %s18, [#allocation3]
    $region5: #{eigen_mlp_bn_forward.15} parent=1 // pred_fallthru
      _
    // Predicated region
    $region6: #{eigen_mlp_bn_forward.15} parent=1 // pred_check
      _
    $region7: #{eigen_mlp_bn_forward.15} parent=1 // pred_check_branch
      %22 = sbr.rel (0) target = $region9
    $region8: #{eigen_mlp_bn_forward.15} parent=1 // pred_region
      %s24 = ssub.s32 8192, 8192
      %25 = vsyncadd [#allocation6], %s24
      %s26 = sshll.u32 [#allocation5], 4
      %s27 = int_to_ptr.vmem [resolvable:$true] %s26
      %32 = dma.hbm_to_vmem [thread:$0]  %s1, 8192, %s27, [#allocation6], 128, 128, 8
    $region9: #{eigen_mlp_bn_forward.15} parent=1 // pred_fallthru
      _
    // Predicated region
    $region10: #{eigen_mlp_bn_forward.15} parent=1 // pred_check
      _
    $region11: #{eigen_mlp_bn_forward.15} parent=1 // pred_check_branch
      %34 = sbr.rel (0) target = $region13
    $region12: #{eigen_mlp_bn_forward.15} parent=1 // pred_region
      %s36 = ssub.s32 16, 16
      %37 = vsyncadd [#allocation6], %s36
      %s39 = sshll.u32 [#allocation7], 4
      %s40 = int_to_ptr.vmem [resolvable:$true] %s39
      %42 = dma.hbm_to_vmem [thread:$0]  %s2, 16, %s40, [#allocation6]
    $region13: #{eigen_mlp_bn_forward.15} parent=1 // pred_fallthru
      _
    // Predicated region
    $region14: #{eigen_mlp_bn_forward.15} parent=1 // pred_check
      _
    $region15: #{eigen_mlp_bn_forward.15} parent=1 // pred_check_branch
      %44 = sbr.rel (0) target = $region17
    $region16: #{eigen_mlp_bn_forward.15} parent=1 // pred_region
      %45 = dma.done [#allocation3], 128
    $region17: #{eigen_mlp_bn_forward.15} parent=1 // pred_fallthru
      _
    // Predicated region
    $region18: #{eigen_mlp_bn_forward.15} parent=1 // pred_check
      _
    $region19: #{eigen_mlp_bn_forward.15} parent=1 // pred_check_branch
      %47 = sbr.rel (0) target = $region21
    $region20: #{eigen_mlp_bn_forward.15} parent=1 // pred_region
      %48 = dma.done [#allocation6], 8192
    $region21: #{eigen_mlp_bn_forward.15} parent=1 // pred_fallthru
      _
    // Predicated region
    $region22: #{eigen_mlp_bn_forward.15} parent=1 // pred_check
      _
    $region23: #{eigen_mlp_bn_forward.15} parent=1 // pred_check_branch
      %50 = sbr.rel (0) target = $region25
    $region24: #{eigen_mlp_bn_forward.15} parent=1 // pred_region
      %51 = dma.done [#allocation6], 16
    $region25: #{eigen_mlp_bn_forward.15} parent=1 // pred_fallthru
      _
    %v52 = vld [vmem:[#allocation2] sm:$0xff]
    %v53 = vld [vmem:[#allocation5] sm:$0xff]
    %v54 = vld [vmem:[#allocation5 + $0x8] sm:$0xff]
    %v55 = vld [vmem:[#allocation5 + $0x10] sm:$0xff]
    %v56 = vld [vmem:[#allocation5 + $0x18] sm:$0xff]
    %v57 = vld [vmem:[#allocation5 + $0x20] sm:$0xff]
    %v58 = vld [vmem:[#allocation5 + $0x28] sm:$0xff]
    %v59 = vld [vmem:[#allocation5 + $0x30] sm:$0xff]
    %v60 = vld [vmem:[#allocation5 + $0x38] sm:$0xff]
    %v61 = vld [vmem:[#allocation5 + $0x40] sm:$0xff]
    %v62 = vld [vmem:[#allocation5 + $0x48] sm:$0xff]
    %v63 = vld [vmem:[#allocation5 + $0x50] sm:$0xff]
    %v64 = vld [vmem:[#allocation5 + $0x58] sm:$0xff]
    %v65 = vld [vmem:[#allocation5 + $0x60] sm:$0xff]
    %v66 = vld [vmem:[#allocation5 + $0x68] sm:$0xff]
    %v67 = vld [vmem:[#allocation5 + $0x70] sm:$0xff]
    %v68 = vld [vmem:[#allocation5 + $0x78] sm:$0xff]
    %v69 = vld [vmem:[#allocation5 + $0x80] sm:$0xff]
    %v70 = vld [vmem:[#allocation5 + $0x88] sm:$0xff]
    %v71 = vld [vmem:[#allocation5 + $0x90] sm:$0xff]
    %v72 = vld [vmem:[#allocation5 + $0x98] sm:$0xff]
    %v73 = vld [vmem:[#allocation5 + $0xa0] sm:$0xff]
    %v74 = vld [vmem:[#allocation5 + $0xa8] sm:$0xff]
    %v75 = vld [vmem:[#allocation5 + $0xb0] sm:$0xff]
    %v76 = vld [vmem:[#allocation5 + $0xb8] sm:$0xff]
    %v77 = vld [vmem:[#allocation5 + $0xc0] sm:$0xff]
    %v78 = vld [vmem:[#allocation5 + $0xc8] sm:$0xff]
    %v79 = vld [vmem:[#allocation5 + $0xd0] sm:$0xff]
    %v80 = vld [vmem:[#allocation5 + $0xd8] sm:$0xff]
    %v81 = vld [vmem:[#allocation5 + $0xe0] sm:$0xff]
    %v82 = vld [vmem:[#allocation5 + $0xe8] sm:$0xff]
    %v83 = vld [vmem:[#allocation5 + $0xf0] sm:$0xff]
    %v84 = vld [vmem:[#allocation5 + $0xf8] sm:$0xff]
    %v85 = vld [vmem:[#allocation5 + $0x100] sm:$0xff]
    %v86 = vld [vmem:[#allocation5 + $0x108] sm:$0xff]
    %v87 = vld [vmem:[#allocation5 + $0x110] sm:$0xff]
    %v88 = vld [vmem:[#allocation5 + $0x118] sm:$0xff]
    %v89 = vld [vmem:[#allocation5 + $0x120] sm:$0xff]
    %v90 = vld [vmem:[#allocation5 + $0x128] sm:$0xff]
    %v91 = vld [vmem:[#allocation5 + $0x130] sm:$0xff]
    %v92 = vld [vmem:[#allocation5 + $0x138] sm:$0xff]
    %v93 = vld [vmem:[#allocation5 + $0x140] sm:$0xff]
    %v94 = vld [vmem:[#allocation5 + $0x148] sm:$0xff]
    %v95 = vld [vmem:[#allocation5 + $0x150] sm:$0xff]
    %v96 = vld [vmem:[#allocation5 + $0x158] sm:$0xff]
    %v97 = vld [vmem:[#allocation5 + $0x160] sm:$0xff]
    %v98 = vld [vmem:[#allocation5 + $0x168] sm:$0xff]
    %v99 = vld [vmem:[#allocation5 + $0x170] sm:$0xff]
    %v100 = vld [vmem:[#allocation5 + $0x178] sm:$0xff]
    %v101 = vld [vmem:[#allocation5 + $0x180] sm:$0xff]
    %v102 = vld [vmem:[#allocation5 + $0x188] sm:$0xff]
    %v103 = vld [vmem:[#allocation5 + $0x190] sm:$0xff]
    %v104 = vld [vmem:[#allocation5 + $0x198] sm:$0xff]
    %v105 = vld [vmem:[#allocation5 + $0x1a0] sm:$0xff]
    %v106 = vld [vmem:[#allocation5 + $0x1a8] sm:$0xff]
    %v107 = vld [vmem:[#allocation5 + $0x1b0] sm:$0xff]
    %v108 = vld [vmem:[#allocation5 + $0x1b8] sm:$0xff]
    %v109 = vld [vmem:[#allocation5 + $0x1c0] sm:$0xff]
    %v110 = vld [vmem:[#allocation5 + $0x1c8] sm:$0xff]
    %v111 = vld [vmem:[#allocation5 + $0x1d0] sm:$0xff]
    %v112 = vld [vmem:[#allocation5 + $0x1d8] sm:$0xff]
    %v113 = vld [vmem:[#allocation5 + $0x1e0] sm:$0xff]
    %v114 = vld [vmem:[#allocation5 + $0x1e8] sm:$0xff]
    %v115 = vld [vmem:[#allocation5 + $0x1f0] sm:$0xff]
    %v116 = vld [vmem:[#allocation5 + $0x1f8] sm:$0xff]
    %v117 = vld [vmem:[#allocation7] sm:$0x1]
    %v119 = vlaneseq
    %v120 = vshrl.u32 %v119, 7
    %v121 = vsub.s32 0, %v120
    %v122 = vrot.slane %v117, %v121
    %v125 = vcombine.high %v52, %v52
    %v127 = vunpack.c.l.s4 1983009808
    %v128 = vunpack.c.0.s8 %v127
    %v129 = vlaneseq
    %v130 = vshrl.u32 %v129, 7
    %v131 = vsub.s32 %v128, %v130
    %v132 = vrot.slane %v52, %v131
    %v134 = vunpack.c.l.s4 1983009808
    %v135 = vunpack.c.0.s8 %v134
    %v136 = vlaneseq
    %v137 = vshrl.u32 %v136, 7
    %v138 = vsub.s32 %v135, %v137
    %v139 = vrot.slane %v125, %v138
    %v140 = vcombine.high %v132, %v132
    %v141 = vcombine.high %v139, %v139
    %146 = vmatprep.subr.mxu0 0.0
    %147 = vmatpush1.msra.mxu0 %v53
    %148 = vmatprep.subr.mxu0 0.0
    %149 = vmatpush1.msra.mxu0 %v54
    %150 = vmatprep.subr.mxu0 0.0
    %151 = vmatpush1.msra.mxu0 %v55
    %152 = vmatprep.subr.mxu0 0.0
    %153 = vmatpush1.msra.mxu0 %v56
    %154 = vmatprep.subr.mxu0 0.0
    %155 = vmatpush1.msra.mxu0 %v57
    %156 = vmatprep.subr.mxu0 0.0
    %157 = vmatpush1.msra.mxu0 %v58
    %158 = vmatprep.subr.mxu0 0.0
    %159 = vmatpush1.msra.mxu0 %v59
    %160 = vmatprep.subr.mxu0 0.0
    %161 = vmatpush1.msra.mxu0 %v60
    %162 = vmatprep.subr.mxu0 0.0
    %163 = vmatpush1.msra.mxu0 %v61
    %164 = vmatprep.subr.mxu0 0.0
    %165 = vmatpush1.msra.mxu0 %v62
    %166 = vmatprep.subr.mxu0 0.0
    %167 = vmatpush1.msra.mxu0 %v63
    %168 = vmatprep.subr.mxu0 0.0
    %169 = vmatpush1.msra.mxu0 %v64
    %170 = vmatprep.subr.mxu0 0.0
    %171 = vmatpush1.msra.mxu0 %v65
    %172 = vmatprep.subr.mxu0 0.0
    %173 = vmatpush1.msra.mxu0 %v66
    %174 = vmatprep.subr.mxu0 0.0
    %175 = vmatpush1.msra.mxu0 %v67
    %176 = vmatprep.subr.mxu0 0.0
    %177 = vmatpush1.msra.mxu0 %v68
    %178 = vmatprep.subr.mxu0 0.0
    %179 = vmatpush1.msra.mxu0 %v69
    %180 = vmatprep.subr.mxu0 0.0
    %181 = vmatpush1.msra.mxu0 %v70
    %182 = vmatprep.subr.mxu0 0.0
    %183 = vmatpush1.msra.mxu0 %v71
    %184 = vmatprep.subr.mxu0 0.0
    %185 = vmatpush1.msra.mxu0 %v72
    %186 = vmatprep.subr.mxu0 0.0
    %187 = vmatpush1.msra.mxu0 %v73
    %188 = vmatprep.subr.mxu0 0.0
    %189 = vmatpush1.msra.mxu0 %v74
    %190 = vmatprep.subr.mxu0 0.0
    %191 = vmatpush1.msra.mxu0 %v75
    %192 = vmatprep.subr.mxu0 0.0
    %193 = vmatpush1.msra.mxu0 %v76
    %194 = vmatprep.subr.mxu0 0.0
    %195 = vmatpush1.msra.mxu0 %v77
    %196 = vmatprep.subr.mxu0 0.0
    %197 = vmatpush1.msra.mxu0 %v78
    %198 = vmatprep.subr.mxu0 0.0
    %199 = vmatpush1.msra.mxu0 %v79
    %200 = vmatprep.subr.mxu0 0.0
    %201 = vmatpush1.msra.mxu0 %v80
    %202 = vmatprep.subr.mxu0 0.0
    %203 = vmatpush1.msra.mxu0 %v81
    %204 = vmatprep.subr.mxu0 0.0
    %205 = vmatpush1.msra.mxu0 %v82
    %206 = vmatprep.subr.mxu0 0.0
    %207 = vmatpush1.msra.mxu0 %v83
    %208 = vmatprep.subr.mxu0 0.0
    %209 = vmatpush1.msra.mxu0 %v84
    %210 = vmatprep.mubr.f32.mxu0 %v140
    %211 = vmatmul.mubr.f32.gmra.mrb[0].mxu0 %v132
    %v212 = vpop.f32.mrb[0].mxu0
    %v213 = vadd.f32 %v122, %v212
    %v214 = vpop.f32.mrb[0].mxu0
    %215 = vdwg.mxu0
    %216 = vmatprep.subr.mxu0 0.0
    %217 = vmatpush1.msra.mxu0 %v85
    %218 = vmatprep.subr.mxu0 0.0
    %219 = vmatpush1.msra.mxu0 %v86
    %220 = vmatprep.subr.mxu0 0.0
    %221 = vmatpush1.msra.mxu0 %v87
    %222 = vmatprep.subr.mxu0 0.0
    %223 = vmatpush1.msra.mxu0 %v88
    %224 = vmatprep.subr.mxu0 0.0
    %225 = vmatpush1.msra.mxu0 %v89
    %226 = vmatprep.subr.mxu0 0.0
    %227 = vmatpush1.msra.mxu0 %v90
    %228 = vmatprep.subr.mxu0 0.0
    %229 = vmatpush1.msra.mxu0 %v91
    %230 = vmatprep.subr.mxu0 0.0
    %231 = vmatpush1.msra.mxu0 %v92
    %232 = vmatprep.subr.mxu0 0.0
    %233 = vmatpush1.msra.mxu0 %v93
    %234 = vmatprep.subr.mxu0 0.0
    %235 = vmatpush1.msra.mxu0 %v94
    %236 = vmatprep.subr.mxu0 0.0
    %237 = vmatpush1.msra.mxu0 %v95
    %238 = vmatprep.subr.mxu0 0.0
    %239 = vmatpush1.msra.mxu0 %v96
    %240 = vmatprep.subr.mxu0 0.0
    %241 = vmatpush1.msra.mxu0 %v97
    %242 = vmatprep.subr.mxu0 0.0
    %243 = vmatpush1.msra.mxu0 %v98
    %244 = vmatprep.subr.mxu0 0.0
    %245 = vmatpush1.msra.mxu0 %v99
    %246 = vmatprep.subr.mxu0 0.0
    %247 = vmatpush1.msra.mxu0 %v100
    %248 = vmatprep.subr.mxu0 0.0
    %249 = vmatpush1.msra.mxu0 %v101
    %250 = vmatprep.subr.mxu0 0.0
    %251 = vmatpush1.msra.mxu0 %v102
    %252 = vmatprep.subr.mxu0 0.0
    %253 = vmatpush1.msra.mxu0 %v103
    %254 = vmatprep.subr.mxu0 0.0
    %255 = vmatpush1.msra.mxu0 %v104
    %256 = vmatprep.subr.mxu0 0.0
    %257 = vmatpush1.msra.mxu0 %v105
    %258 = vmatprep.subr.mxu0 0.0
    %259 = vmatpush1.msra.mxu0 %v106
    %260 = vmatprep.subr.mxu0 0.0
    %261 = vmatpush1.msra.mxu0 %v107
    %262 = vmatprep.subr.mxu0 0.0
    %263 = vmatpush1.msra.mxu0 %v108
    %264 = vmatprep.subr.mxu0 0.0
    %265 = vmatpush1.msra.mxu0 %v109
    %266 = vmatprep.subr.mxu0 0.0
    %267 = vmatpush1.msra.mxu0 %v110
    %268 = vmatprep.subr.mxu0 0.0
    %269 = vmatpush1.msra.mxu0 %v111
    %270 = vmatprep.subr.mxu0 0.0
    %271 = vmatpush1.msra.mxu0 %v112
    %272 = vmatprep.subr.mxu0 0.0
    %273 = vmatpush1.msra.mxu0 %v113
    %274 = vmatprep.subr.mxu0 0.0
    %275 = vmatpush1.msra.mxu0 %v114
    %276 = vmatprep.subr.mxu0 0.0
    %277 = vmatpush1.msra.mxu0 %v115
    %278 = vmatprep.subr.mxu0 0.0
    %279 = vmatpush1.msra.mxu0 %v116
    %280 = vmatprep.mubr.f32.mxu0 %v141
    %281 = vmatmul.mubr.f32.gmra.mrb[0].mxu0 %v139
    %v282 = vpop.f32.mrb[0].mxu0
    %v283 = vadd.f32 %v213, %v282
    %v284 = vpop.f32.mrb[0].mxu0
    %285 = vdwg.mxu0
    %286 = vst [vmem:[#allocation8] sm:$0x3] %v283
    // Predicated region
    $region26: #{eigen_mlp_bn_forward.15} parent=1 // pred_check
      _
    $region27: #{eigen_mlp_bn_forward.15} parent=1 // pred_check_branch
      %288 = sbr.rel (0) target = $region29
    $region28: #{eigen_mlp_bn_forward.15} parent=1 // pred_region
      %s290 = ssub.s32 32, 32
      %291 = vsyncadd [#allocation4], %s290
      %s293 = sshll.u32 [#allocation8], 4
      %s294 = int_to_ptr.vmem [resolvable:$true] %s293
      %296 = dma.vmem_to_hbm [thread:$0]  %s294, 32, %s3, [#allocation4]
    $region29: #{eigen_mlp_bn_forward.15} parent=1 // pred_fallthru
      _
    // Predicated region
    $region30: #{eigen_mlp_bn_forward.15} parent=1 // pred_check
      _
    $region31: #{eigen_mlp_bn_forward.15} parent=1 // pred_check_branch
      %298 = sbr.rel (0) target = $region33
    $region32: #{eigen_mlp_bn_forward.15} parent=1 // pred_region
      %299 = dma.done [#allocation4], 32
    $region33: #{eigen_mlp_bn_forward.15} parent=1 // pred_fallthru
      _
    %300 = vsyncpa [#allocation3], 1
    %301 = vsyncpa [#allocation6], 1
    %302 = vsyncpa [#allocation4], 1

</llo_original>
